<compile_context>
chip_gen: v5e
topology: v5e:2x2
jax: 0.10.0
libtpu: 0.0.40
codegen_flags: <defaults>
</compile_context>

<pallas_src>
import jax
import jax.numpy as jnp
import numpy as np
from jax import lax
from jax.experimental import pallas as pl
from jax.experimental.pallas import tpu as pltpu


VMEM_LIMIT_BYTES = 32 * 1024 * 1024


def _round_up(x, m):
    return (x + m - 1) // m * m


# ----------------------------- Pallas kernels ------------------------------


def conv_pool_relu_kernel(p_ref, w_ref, b_ref, o_ref):
    """5x5 conv (transposed im2col GEMM) + 2x2 max-pool + bias + ReLU.

    p_ref : [4, K, M]  one im2col slab per 2x2-pool offset (M on lanes)
    w_ref : [Cout, K]  flattened conv weights
    b_ref : [Cout, 1]
    o_ref : [Cout, M]  lane-dense output block
    """
    w = w_ref[...]
    # Running max over the four pool offsets -> one accumulator live.
    acc = jnp.dot(w, p_ref[0], preferred_element_type=jnp.float32)
    for q in range(1, 4):
        acc = jnp.maximum(
            acc, jnp.dot(w, p_ref[q], preferred_element_type=jnp.float32))
    # Per-channel bias commutes with the max; ReLU after the pool (as torch).
    o_ref[...] = jnp.maximum(acc + b_ref[...], 0.0)


def mlp_kernel(x_ref, w1_ref, b1_ref, w2_ref, b2_ref, o_ref):
    """fc1 + ReLU + fc_logits, transposed (batch on lanes), single block."""
    h = jnp.dot(w1_ref[...], x_ref[...],
                preferred_element_type=jnp.float32) + b1_ref[...]
    h = jnp.maximum(h, 0.0)
    o_ref[...] = jnp.dot(w2_ref[...], h,
                         preferred_element_type=jnp.float32) + b2_ref[...]


# ----------------------------- pallas_call glue -----------------------------


def conv_pool_relu(patches, w, b):
    """patches: [4, K, M]; w: [Cout, K]; b: [Cout, 1]  ->  [Cout, M].

    Single grid step with full-array blocks: no M padding, no tail tile, no
    host-side pad copies.  Block shape == array shape, so the (8,128)
    divisibility constraint is waived; only the last lane group of the store
    is masked.
    """
    _, k, m = patches.shape
    cout = w.shape[0]
    return pl.pallas_call(
        conv_pool_relu_kernel,
        out_shape=jax.ShapeDtypeStruct((cout, m), jnp.float32),
        grid=(1,),
        in_specs=[
            pl.BlockSpec((4, k, m), lambda i: (0, 0, 0)),
            pl.BlockSpec((cout, k), lambda i: (0, 0)),
            pl.BlockSpec((cout, 1), lambda i: (0, 0)),
        ],
        out_specs=pl.BlockSpec((cout, m), lambda i: (0, 0)),
        compiler_params=pltpu.CompilerParams(
            dimension_semantics=("arbitrary",),
            vmem_limit_bytes=VMEM_LIMIT_BYTES),
    )(patches, w, b)


def mlp_head(x_t, w1, b1, w2, b2):
    """x_t: [D, N]; w1: [F, D]; b1: [F,1]; w2: [cls, F]; b2: [cls,1] -> [cls, N].

    Single full block — no batch padding (8 lanes stored masked), no grid.
    """
    d, n = x_t.shape
    f = w1.shape[0]
    cls = w2.shape[0]
    return pl.pallas_call(
        mlp_kernel,
        out_shape=jax.ShapeDtypeStruct((cls, n), jnp.float32),
        grid=(1,),
        in_specs=[
            pl.BlockSpec((d, n), lambda i: (0, 0)),
            pl.BlockSpec((f, d), lambda i: (0, 0)),
            pl.BlockSpec((f, 1), lambda i: (0, 0)),
            pl.BlockSpec((cls, f), lambda i: (0, 0)),
            pl.BlockSpec((cls, 1), lambda i: (0, 0)),
        ],
        out_specs=pl.BlockSpec((cls, n), lambda i: (0, 0)),
        compiler_params=pltpu.CompilerParams(
            dimension_semantics=("arbitrary",),
            vmem_limit_bytes=VMEM_LIMIT_BYTES),
    )(x_t, w1, b1, w2, b2)


# --------------------------- host-side im2col (XLA) -------------------------


def pool_im2col(x_chwn, k=5, pad=2):
    """x: [C, H, W, N] (batch-last) -> [4, K_pad, Ho*Wo*N], transposed im2col
    per 2x2-pool offset.

    Patch row index is (kh*k + kw)*C + c (matches weights flattened as
    [Cout, kh, kw, Cin]); column order is (ho, wo, n).  K is padded to a
    multiple of 8 inside the same materialization (zero rows concatenated),
    so no separate pad pass is needed.
    """
    c, h, w, n = x_chwn.shape
    ho, wo = h // 2, w // 2
    m = ho * wo * n
    kk = k * k * c
    kk_pad = _round_up(kk, 8)
    xp = jnp.pad(x_chwn, ((0, 0), (pad, pad), (pad, pad), (0, 0)))
    offsets = []
    for di in range(2):
        for dj in range(2):
            cols = []
            for kh in range(k):
                for kw in range(k):
                    sl = xp[:, di + kh:di + kh + 2 * ho:2,
                               dj + kw:dj + kw + 2 * wo:2, :]    # [C, Ho, Wo, N]
                    cols.append(sl)
            pat = jnp.stack(cols, axis=0).reshape(kk, m)         # [k*k*C, M]
            if kk_pad != kk:
                pat = jnp.concatenate(
                    [pat, jnp.zeros((kk_pad - kk, m), pat.dtype)], axis=0)
            offsets.append(pat)
    return jnp.stack(offsets, axis=0)                            # [4, K_pad, M]


def prepare_params(params):
    """One-time weight flattening / K-padding (outside the traced forward)."""
    c1, cin = params["conv1_w"].shape[:2]
    c2 = params["conv2_w"].shape[0]
    k1, k2 = 25 * cin, 25 * c1
    w1 = params["conv1_w"].transpose(0, 2, 3, 1).reshape(c1, k1)   # [C1, 25*Cin]
    w2 = params["conv2_w"].transpose(0, 2, 3, 1).reshape(c2, k2)   # [C2, 25*C1]
    k1p, k2p = _round_up(k1, 8), _round_up(k2, 8)
    if k1p != k1:
        w1 = jnp.pad(w1, ((0, 0), (0, k1p - k1)))
    if k2p != k2:
        w2 = jnp.pad(w2, ((0, 0), (0, k2p - k2)))
    return {
        "w1": w1, "b1": params["conv1_b"][:, None],
        "w2": w2, "b2": params["conv2_b"][:, None],
        "fc1_w": params["fc1_w"], "fc1_b": params["fc1_b"][:, None],
        "fc_logits_w": params["fc_logits_w"],
        "fc_logits_b": params["fc_logits_b"][:, None],
    }


# --------------------------------- forward ----------------------------------


def model_forward(x_nchw, prep):
    n, _, hh, ww = x_nchw.shape
    c1 = prep["w1"].shape[0]
    c2 = prep["w2"].shape[0]
    h1o, w1o = hh // 2, ww // 2          # 14, 14
    h2o, w2o = h1o // 2, w1o // 2        # 7, 7

    # Batch-last layout end to end: one input transpose, then no per-slice
    # transposes in either im2col build.
    x_chwn = jnp.transpose(x_nchw, (1, 2, 3, 0))             # [Cin, H, W, N]

    # --- conv1 -> pool1 -> relu
    p1 = pool_im2col(x_chwn)                                 # [4, K1p, 196*N]
    h1 = conv_pool_relu(p1, prep["w1"], prep["b1"])          # [C1, 196*N]
    h1 = h1.reshape(c1, h1o, w1o, n)                         # free (row-major) reshape

    # --- conv2 -> pool2 -> relu
    p2 = pool_im2col(h1)                                     # [4, 200, 49*N]
    h2 = conv_pool_relu(p2, prep["w2"], prep["b2"])          # [C2, 49*N]

    # --- flatten in PyTorch .view(N,-1) order: columns are (ho, wo, n)-ordered,
    # so this is a pure row-major reshape (no data movement), transposed.
    flat_t = h2.reshape(c2 * h2o * w2o, n)                   # [C2*49, N]

    # --- fc1 -> relu -> fc_logits (transposed: batch on lanes, no padding)
    logits_t = mlp_head(flat_t, prep["fc1_w"], prep["fc1_b"],
                        prep["fc_logits_w"], prep["fc_logits_b"])   # [cls, N]
    return logits_t.T


# ------------------------- deterministic parameters -------------------------


def init_params(key, in_channels, conv1_width, conv2_width, fc1_width, class_count):
    """Matches CovolutionalModel.reset_parameters (kaiming fan_in/relu, zero bias,
    PyTorch-default uniform init for fc_logits)."""
    ks = jax.random.split(key, 5)

    def kaiming(k, shape, fan_in):
        return jax.random.normal(k, shape, jnp.float32) * np.sqrt(2.0 / fan_in)

    params = {
        "conv1_w": kaiming(ks[0], (conv1_width, in_channels, 5, 5), in_channels * 25),
        "conv1_b": jnp.zeros((conv1_width,), jnp.float32),
        "conv2_w": kaiming(ks[1], (conv2_width, conv1_width, 5, 5), conv1_width * 25),
        "conv2_b": jnp.zeros((conv2_width,), jnp.float32),
        "fc1_w": kaiming(ks[2], (fc1_width, conv2_width * 7 * 7), conv2_width * 7 * 7),
        "fc1_b": jnp.zeros((fc1_width,), jnp.float32),
    }
    bound = 1.0 / np.sqrt(fc1_width)
    params["fc_logits_w"] = jax.random.uniform(
        ks[3], (class_count, fc1_width), jnp.float32, -bound, bound)
    params["fc_logits_b"] = jax.random.uniform(
        ks[4], (class_count,), jnp.float32, -bound, bound)
    return params


# ------------------------------ plain-JAX reference -------------------------


def reference_forward(x_nchw, params):
    dn = ("NCHW", "OIHW", "NCHW")
    hp = lax.Precision.HIGHEST
    h = lax.conv_general_dilated(x_nchw, params["conv1_w"], (1, 1), ((2, 2), (2, 2)),
                                 dimension_numbers=dn, precision=hp)
    h = h + params["conv1_b"][None, :, None, None]
    h = lax.reduce_window(h, -jnp.inf, lax.max, (1, 1, 2, 2), (1, 1, 2, 2), "VALID")
    h = jnp.maximum(h, 0.0)
    h = lax.conv_general_dilated(h, params["conv2_w"], (1, 1), ((2, 2), (2, 2)),
                                 dimension_numbers=dn, precision=hp)
    h = h + params["conv2_b"][None, :, None, None]
    h = lax.reduce_window(h, -jnp.inf, lax.max, (1, 1, 2, 2), (1, 1, 2, 2), "VALID")
    h = jnp.maximum(h, 0.0)
    h = h.reshape(h.shape[0], -1)
    h = jnp.maximum(jnp.dot(h, params["fc1_w"].T, precision=hp) + params["fc1_b"], 0.0)
    return jnp.dot(h, params["fc_logits_w"].T, precision=hp) + params["fc_logits_b"]


# ----------------------------------- main -----------------------------------


if __name__ == "__main__":
    # small but module-consistent shapes (spatial 28x28 is required by fc1)
    in_channels, conv1_width, conv2_width, fc1_width, class_count = 3, 8, 16, 32, 10
    batch = 8

    key = jax.random.PRNGKey(0)
    k_x, k_p = jax.random.split(key)
    x = jax.random.normal(k_x, (batch, in_channels, 28, 28), jnp.float32)
    params = init_params(k_p, in_channels, conv1_width, conv2_width,
                         fc1_width, class_count)
    prep = prepare_params(params)

    logits = jax.jit(model_forward)(x, prep)
    logits = jax.block_until_ready(logits)
    assert logits.shape == (batch, class_count)
    assert logits.dtype == jnp.float32

    ref = np.asarray(reference_forward(x, params))
    np.testing.assert_allclose(np.asarray(logits), ref, rtol=5e-3, atol=5e-3)

    print("KERNEL_OK")
</pallas_src>

<mosaic_0001>
module attributes {stable_mosaic.version = 11 : i64} {
  func.func @conv_pool_relu_kernel(%arg0: i32, %arg1: memref<4x80x1568xf32, #tpu.memory_space<vmem>>, %arg2: memref<8x80xf32, #tpu.memory_space<vmem>>, %arg3: memref<8x1xf32, #tpu.memory_space<vmem>>, %arg4: memref<8x1568xf32, #tpu.memory_space<vmem>>) attributes {dimension_semantics = [#tpu.dimension_semantics<arbitrary>], iteration_bounds = array<i64: 1>, scalar_prefetch = 0 : i64, scratch_operands = 0 : i64, tpu.core_type = #tpu.core_type<tc>, window_params = [{pipeline_mode = #tpu.pipeline_mode<synchronous>, transform_indices = @transform_0, window_bounds = array<i64: 4, 80, 1568>}, {pipeline_mode = #tpu.pipeline_mode<synchronous>, transform_indices = @transform_1, window_bounds = array<i64: 8, 80>}, {pipeline_mode = #tpu.pipeline_mode<synchronous>, transform_indices = @transform_2, window_bounds = array<i64: 8, 1>}, {pipeline_mode = #tpu.pipeline_mode<synchronous>, transform_indices = @transform_3, window_bounds = array<i64: 8, 1568>}]} {
    %c0 = arith.constant 0 : index
    %c0_0 = arith.constant 0 : index
    %0 = vector.load %arg2[%c0, %c0_0] : memref<8x80xf32, #tpu.memory_space<vmem>>, vector<8x80xf32>
    %c0_1 = arith.constant 0 : index
    %c0_2 = arith.constant 0 : index
    %c0_3 = arith.constant 0 : index
    %1 = vector.load %arg1[%c0_1, %c0_2, %c0_3] : memref<4x80x1568xf32, #tpu.memory_space<vmem>>, vector<1x80x1568xf32>
    %2 = vector.shape_cast %1 : vector<1x80x1568xf32> to vector<80x1568xf32>
    %cst = arith.constant dense<0.000000e+00> : vector<8x1568xf32>
    %3 = tpu.matmul %0, %2, %cst {dimension_numbers = #tpu.dot_dimension_numbers<[1], [0], [0], [1], [0, 0, 1, 1], [], []>} : vector<8x80xf32>, vector<80x1568xf32>, vector<8x1568xf32> -> vector<8x1568xf32>
    %c1 = arith.constant 1 : index
    %c0_4 = arith.constant 0 : index
    %c0_5 = arith.constant 0 : index
    %4 = vector.load %arg1[%c1, %c0_4, %c0_5] : memref<4x80x1568xf32, #tpu.memory_space<vmem>>, vector<1x80x1568xf32>
    %5 = vector.shape_cast %4 : vector<1x80x1568xf32> to vector<80x1568xf32>
    %cst_6 = arith.constant dense<0.000000e+00> : vector<8x1568xf32>
    %6 = tpu.matmul %0, %5, %cst_6 {dimension_numbers = #tpu.dot_dimension_numbers<[1], [0], [0], [1], [0, 0, 1, 1], [], []>} : vector<8x80xf32>, vector<80x1568xf32>, vector<8x1568xf32> -> vector<8x1568xf32>
    %7 = arith.maximumf %3, %6 : vector<8x1568xf32>
    %c2 = arith.constant 2 : index
    %c0_7 = arith.constant 0 : index
    %c0_8 = arith.constant 0 : index
    %8 = vector.load %arg1[%c2, %c0_7, %c0_8] : memref<4x80x1568xf32, #tpu.memory_space<vmem>>, vector<1x80x1568xf32>
    %9 = vector.shape_cast %8 : vector<1x80x1568xf32> to vector<80x1568xf32>
    %cst_9 = arith.constant dense<0.000000e+00> : vector<8x1568xf32>
    %10 = tpu.matmul %0, %9, %cst_9 {dimension_numbers = #tpu.dot_dimension_numbers<[1], [0], [0], [1], [0, 0, 1, 1], [], []>} : vector<8x80xf32>, vector<80x1568xf32>, vector<8x1568xf32> -> vector<8x1568xf32>
    %11 = arith.maximumf %7, %10 : vector<8x1568xf32>
    %c3 = arith.constant 3 : index
    %c0_10 = arith.constant 0 : index
    %c0_11 = arith.constant 0 : index
    %12 = vector.load %arg1[%c3, %c0_10, %c0_11] : memref<4x80x1568xf32, #tpu.memory_space<vmem>>, vector<1x80x1568xf32>
    %13 = vector.shape_cast %12 : vector<1x80x1568xf32> to vector<80x1568xf32>
    %cst_12 = arith.constant dense<0.000000e+00> : vector<8x1568xf32>
    %14 = tpu.matmul %0, %13, %cst_12 {dimension_numbers = #tpu.dot_dimension_numbers<[1], [0], [0], [1], [0, 0, 1, 1], [], []>} : vector<8x80xf32>, vector<80x1568xf32>, vector<8x1568xf32> -> vector<8x1568xf32>
    %15 = arith.maximumf %11, %14 : vector<8x1568xf32>
    %c0_13 = arith.constant 0 : index
    %c0_14 = arith.constant 0 : index
    %16 = vector.load %arg3[%c0_13, %c0_14] : memref<8x1xf32, #tpu.memory_space<vmem>>, vector<8x1xf32>
    %17 = vector.broadcast %16 : vector<8x1xf32> to vector<8x1568xf32>
    %18 = arith.addf %15, %17 : vector<8x1568xf32>
    %cst_15 = arith.constant 0.000000e+00 : f32
    %19 = vector.broadcast %cst_15 : f32 to vector<8x1568xf32>
    %20 = arith.maximumf %18, %19 : vector<8x1568xf32>
    %c0_16 = arith.constant 0 : index
    %c0_17 = arith.constant 0 : index
    %21 = vector.load %arg4[%c0_16, %c0_17] : memref<8x1568xf32, #tpu.memory_space<vmem>>, vector<8x1568xf32>
    tpu.vector_store %arg4[%c0_16, %c0_17], %20 {strides = array<i32>} : memref<8x1568xf32, #tpu.memory_space<vmem>>, vector<8x1568xf32>,
    return
  }
  func.func @transform_0(%arg0: i32) -> (i32, i32, i32) {
    %c0_i32 = arith.constant 0 : i32
    %c0_i32_0 = arith.constant 0 : i32
    %c0_i32_1 = arith.constant 0 : i32
    %c0_i32_2 = arith.constant 0 : i32
    return %c0_i32, %c0_i32_0, %c0_i32_1 : i32, i32, i32
  }
  func.func @transform_1(%arg0: i32) -> (i32, i32) {
    %c0_i32 = arith.constant 0 : i32
    %c0_i32_0 = arith.constant 0 : i32
    %c0_i32_1 = arith.constant 0 : i32
    return %c0_i32, %c0_i32_0 : i32, i32
  }
  func.func @transform_2(%arg0: i32) -> (i32, i32) {
    %c0_i32 = arith.constant 0 : i32
    %c0_i32_0 = arith.constant 0 : i32
    %c0_i32_1 = arith.constant 0 : i32
    return %c0_i32, %c0_i32_0 : i32, i32
  }
  func.func @transform_3(%arg0: i32) -> (i32, i32) {
    %c0_i32 = arith.constant 0 : i32
    %c0_i32_0 = arith.constant 0 : i32
    %c0_i32_1 = arith.constant 0 : i32
    return %c0_i32, %c0_i32_0 : i32, i32
  }
}

module attributes {stable_mosaic.version = 11 : i64} {
  func.func @conv_pool_relu_kernel(%arg0: i32, %arg1: memref<4x200x392xf32, #tpu.memory_space<vmem>>, %arg2: memref<16x200xf32, #tpu.memory_space<vmem>>, %arg3: memref<16x1xf32, #tpu.memory_space<vmem>>, %arg4: memref<16x392xf32, #tpu.memory_space<vmem>>) attributes {dimension_semantics = [#tpu.dimension_semantics<arbitrary>], iteration_bounds = array<i64: 1>, scalar_prefetch = 0 : i64, scratch_operands = 0 : i64, tpu.core_type = #tpu.core_type<tc>, window_params = [{pipeline_mode = #tpu.pipeline_mode<synchronous>, transform_indices = @transform_0, window_bounds = array<i64: 4, 200, 392>}, {pipeline_mode = #tpu.pipeline_mode<synchronous>, transform_indices = @transform_1, window_bounds = array<i64: 16, 200>}, {pipeline_mode = #tpu.pipeline_mode<synchronous>, transform_indices = @transform_2, window_bounds = array<i64: 16, 1>}, {pipeline_mode = #tpu.pipeline_mode<synchronous>, transform_indices = @transform_3, window_bounds = array<i64: 16, 392>}]} {
    %c0 = arith.constant 0 : index
    %c0_0 = arith.constant 0 : index
    %0 = vector.load %arg2[%c0, %c0_0] : memref<16x200xf32, #tpu.memory_space<vmem>>, vector<16x200xf32>
    %c0_1 = arith.constant 0 : index
    %c0_2 = arith.constant 0 : index
    %c0_3 = arith.constant 0 : index
    %1 = vector.load %arg1[%c0_1, %c0_2, %c0_3] : memref<4x200x392xf32, #tpu.memory_space<vmem>>, vector<1x200x392xf32>
    %2 = vector.shape_cast %1 : vector<1x200x392xf32> to vector<200x392xf32>
    %cst = arith.constant dense<0.000000e+00> : vector<16x392xf32>
    %3 = tpu.matmul %0, %2, %cst {dimension_numbers = #tpu.dot_dimension_numbers<[1], [0], [0], [1], [0, 0, 1, 1], [], []>} : vector<16x200xf32>, vector<200x392xf32>, vector<16x392xf32> -> vector<16x392xf32>
    %c1 = arith.constant 1 : index
    %c0_4 = arith.constant 0 : index
    %c0_5 = arith.constant 0 : index
    %4 = vector.load %arg1[%c1, %c0_4, %c0_5] : memref<4x200x392xf32, #tpu.memory_space<vmem>>, vector<1x200x392xf32>
    %5 = vector.shape_cast %4 : vector<1x200x392xf32> to vector<200x392xf32>
    %cst_6 = arith.constant dense<0.000000e+00> : vector<16x392xf32>
    %6 = tpu.matmul %0, %5, %cst_6 {dimension_numbers = #tpu.dot_dimension_numbers<[1], [0], [0], [1], [0, 0, 1, 1], [], []>} : vector<16x200xf32>, vector<200x392xf32>, vector<16x392xf32> -> vector<16x392xf32>
    %7 = arith.maximumf %3, %6 : vector<16x392xf32>
    %c2 = arith.constant 2 : index
    %c0_7 = arith.constant 0 : index
    %c0_8 = arith.constant 0 : index
    %8 = vector.load %arg1[%c2, %c0_7, %c0_8] : memref<4x200x392xf32, #tpu.memory_space<vmem>>, vector<1x200x392xf32>
    %9 = vector.shape_cast %8 : vector<1x200x392xf32> to vector<200x392xf32>
    %cst_9 = arith.constant dense<0.000000e+00> : vector<16x392xf32>
    %10 = tpu.matmul %0, %9, %cst_9 {dimension_numbers = #tpu.dot_dimension_numbers<[1], [0], [0], [1], [0, 0, 1, 1], [], []>} : vector<16x200xf32>, vector<200x392xf32>, vector<16x392xf32> -> vector<16x392xf32>
    %11 = arith.maximumf %7, %10 : vector<16x392xf32>
    %c3 = arith.constant 3 : index
    %c0_10 = arith.constant 0 : index
    %c0_11 = arith.constant 0 : index
    %12 = vector.load %arg1[%c3, %c0_10, %c0_11] : memref<4x200x392xf32, #tpu.memory_space<vmem>>, vector<1x200x392xf32>
    %13 = vector.shape_cast %12 : vector<1x200x392xf32> to vector<200x392xf32>
    %cst_12 = arith.constant dense<0.000000e+00> : vector<16x392xf32>
    %14 = tpu.matmul %0, %13, %cst_12 {dimension_numbers = #tpu.dot_dimension_numbers<[1], [0], [0], [1], [0, 0, 1, 1], [], []>} : vector<16x200xf32>, vector<200x392xf32>, vector<16x392xf32> -> vector<16x392xf32>
    %15 = arith.maximumf %11, %14 : vector<16x392xf32>
    %c0_13 = arith.constant 0 : index
    %c0_14 = arith.constant 0 : index
    %16 = vector.load %arg3[%c0_13, %c0_14] : memref<16x1xf32, #tpu.memory_space<vmem>>, vector<16x1xf32>
    %17 = vector.broadcast %16 : vector<16x1xf32> to vector<16x392xf32>
    %18 = arith.addf %15, %17 : vector<16x392xf32>
    %cst_15 = arith.constant 0.000000e+00 : f32
    %19 = vector.broadcast %cst_15 : f32 to vector<16x392xf32>
    %20 = arith.maximumf %18, %19 : vector<16x392xf32>
    %c0_16 = arith.constant 0 : index
    %c0_17 = arith.constant 0 : index
    %21 = vector.load %arg4[%c0_16, %c0_17] : memref<16x392xf32, #tpu.memory_space<vmem>>, vector<16x392xf32>
    tpu.vector_store %arg4[%c0_16, %c0_17], %20 {strides = array<i32>} : memref<16x392xf32, #tpu.memory_space<vmem>>, vector<16x392xf32>,
    return
  }
  func.func @transform_0(%arg0: i32) -> (i32, i32, i32) {
    %c0_i32 = arith.constant 0 : i32
    %c0_i32_0 = arith.constant 0 : i32
    %c0_i32_1 = arith.constant 0 : i32
    %c0_i32_2 = arith.constant 0 : i32
    return %c0_i32, %c0_i32_0, %c0_i32_1 : i32, i32, i32
  }
  func.func @transform_1(%arg0: i32) -> (i32, i32) {
    %c0_i32 = arith.constant 0 : i32
    %c0_i32_0 = arith.constant 0 : i32
    %c0_i32_1 = arith.constant 0 : i32
    return %c0_i32, %c0_i32_0 : i32, i32
  }
  func.func @transform_2(%arg0: i32) -> (i32, i32) {
    %c0_i32 = arith.constant 0 : i32
    %c0_i32_0 = arith.constant 0 : i32
    %c0_i32_1 = arith.constant 0 : i32
    return %c0_i32, %c0_i32_0 : i32, i32
  }
  func.func @transform_3(%arg0: i32) -> (i32, i32) {
    %c0_i32 = arith.constant 0 : i32
    %c0_i32_0 = arith.constant 0 : i32
    %c0_i32_1 = arith.constant 0 : i32
    return %c0_i32, %c0_i32_0 : i32, i32
  }
}

module attributes {stable_mosaic.version = 11 : i64} {
  func.func @mlp_kernel(%arg0: i32, %arg1: memref<784x8xf32, #tpu.memory_space<vmem>>, %arg2: memref<32x784xf32, #tpu.memory_space<vmem>>, %arg3: memref<32x1xf32, #tpu.memory_space<vmem>>, %arg4: memref<10x32xf32, #tpu.memory_space<vmem>>, %arg5: memref<10x1xf32, #tpu.memory_space<vmem>>, %arg6: memref<10x8xf32, #tpu.memory_space<vmem>>) attributes {dimension_semantics = [#tpu.dimension_semantics<arbitrary>], iteration_bounds = array<i64: 1>, scalar_prefetch = 0 : i64, scratch_operands = 0 : i64, tpu.core_type = #tpu.core_type<tc>, window_params = [{pipeline_mode = #tpu.pipeline_mode<synchronous>, transform_indices = @transform_0, window_bounds = array<i64: 784, 8>}, {pipeline_mode = #tpu.pipeline_mode<synchronous>, transform_indices = @transform_1, window_bounds = array<i64: 32, 784>}, {pipeline_mode = #tpu.pipeline_mode<synchronous>, transform_indices = @transform_2, window_bounds = array<i64: 32, 1>}, {pipeline_mode = #tpu.pipeline_mode<synchronous>, transform_indices = @transform_3, window_bounds = array<i64: 10, 32>}, {pipeline_mode = #tpu.pipeline_mode<synchronous>, transform_indices = @transform_4, window_bounds = array<i64: 10, 1>}, {pipeline_mode = #tpu.pipeline_mode<synchronous>, transform_indices = @transform_5, window_bounds = array<i64: 10, 8>}]} {
    %c0 = arith.constant 0 : index
    %c0_0 = arith.constant 0 : index
    %0 = vector.load %arg2[%c0, %c0_0] : memref<32x784xf32, #tpu.memory_space<vmem>>, vector<32x784xf32>
    %c0_1 = arith.constant 0 : index
    %c0_2 = arith.constant 0 : index
    %1 = vector.load %arg1[%c0_1, %c0_2] : memref<784x8xf32, #tpu.memory_space<vmem>>, vector<784x8xf32>
    %cst = arith.constant dense<0.000000e+00> : vector<32x8xf32>
    %2 = tpu.matmul %0, %1, %cst {dimension_numbers = #tpu.dot_dimension_numbers<[1], [0], [0], [1], [0, 0, 1, 1], [], []>} : vector<32x784xf32>, vector<784x8xf32>, vector<32x8xf32> -> vector<32x8xf32>
    %c0_3 = arith.constant 0 : index
    %c0_4 = arith.constant 0 : index
    %3 = vector.load %arg3[%c0_3, %c0_4] : memref<32x1xf32, #tpu.memory_space<vmem>>, vector<32x1xf32>
    %4 = vector.broadcast %3 : vector<32x1xf32> to vector<32x8xf32>
    %5 = arith.addf %2, %4 : vector<32x8xf32>
    %cst_5 = arith.constant 0.000000e+00 : f32
    %6 = vector.broadcast %cst_5 : f32 to vector<32x8xf32>
    %7 = arith.maximumf %5, %6 : vector<32x8xf32>
    %c0_6 = arith.constant 0 : index
    %c0_7 = arith.constant 0 : index
    %8 = vector.load %arg4[%c0_6, %c0_7] : memref<10x32xf32, #tpu.memory_space<vmem>>, vector<10x32xf32>
    %cst_8 = arith.constant dense<0.000000e+00> : vector<10x8xf32>
    %9 = tpu.matmul %8, %7, %cst_8 {dimension_numbers = #tpu.dot_dimension_numbers<[1], [0], [0], [1], [0, 0, 1, 1], [], []>} : vector<10x32xf32>, vector<32x8xf32>, vector<10x8xf32> -> vector<10x8xf32>
    %c0_9 = arith.constant 0 : index
    %c0_10 = arith.constant 0 : index
    %10 = vector.load %arg5[%c0_9, %c0_10] : memref<10x1xf32, #tpu.memory_space<vmem>>, vector<10x1xf32>
    %11 = vector.broadcast %10 : vector<10x1xf32> to vector<10x8xf32>
    %12 = arith.addf %9, %11 : vector<10x8xf32>
    %c0_11 = arith.constant 0 : index
    %c0_12 = arith.constant 0 : index
    %13 = vector.load %arg6[%c0_11, %c0_12] : memref<10x8xf32, #tpu.memory_space<vmem>>, vector<10x8xf32>
    tpu.vector_store %arg6[%c0_11, %c0_12], %12 {strides = array<i32>} : memref<10x8xf32, #tpu.memory_space<vmem>>, vector<10x8xf32>,
    return
  }
  func.func @transform_0(%arg0: i32) -> (i32, i32) {
    %c0_i32 = arith.constant 0 : i32
    %c0_i32_0 = arith.constant 0 : i32
    %c0_i32_1 = arith.constant 0 : i32
    return %c0_i32, %c0_i32_0 : i32, i32
  }
  func.func @transform_1(%arg0: i32) -> (i32, i32) {
    %c0_i32 = arith.constant 0 : i32
    %c0_i32_0 = arith.constant 0 : i32
    %c0_i32_1 = arith.constant 0 : i32
    return %c0_i32, %c0_i32_0 : i32, i32
  }
  func.func @transform_2(%arg0: i32) -> (i32, i32) {
    %c0_i32 = arith.constant 0 : i32
    %c0_i32_0 = arith.constant 0 : i32
    %c0_i32_1 = arith.constant 0 : i32
    return %c0_i32, %c0_i32_0 : i32, i32
  }
  func.func @transform_3(%arg0: i32) -> (i32, i32) {
    %c0_i32 = arith.constant 0 : i32
    %c0_i32_0 = arith.constant 0 : i32
    %c0_i32_1 = arith.constant 0 : i32
    return %c0_i32, %c0_i32_0 : i32, i32
  }
  func.func @transform_4(%arg0: i32) -> (i32, i32) {
    %c0_i32 = arith.constant 0 : i32
    %c0_i32_0 = arith.constant 0 : i32
    %c0_i32_1 = arith.constant 0 : i32
    return %c0_i32, %c0_i32_0 : i32, i32
  }
  func.func @transform_5(%arg0: i32) -> (i32, i32) {
    %c0_i32 = arith.constant 0 : i32
    %c0_i32_0 = arith.constant 0 : i32
    %c0_i32_1 = arith.constant 0 : i32
    return %c0_i32, %c0_i32_0 : i32, i32
  }
}

</mosaic_0001>

<llo_original>
// kernel: model_forward.3
$region0: #{model_forward.3}
  #allocation0 [shape = 'u32[]', space=smem, size = 0x4, offset = 0x4, fixed_abs, tag = 'smem constant byte address 0x4 - core index']
  #allocation1 [shape = 'u32[72,128]{1,0:T(1,128)}', space=vmem, size = 0x9000, scoped, tag = 'internal scratch']
  %s0 = inlined_call_operand.vmem [shape: f32[4,80,1568], index: 0, kind: input, shape index: {}]
  %s1 = inlined_call_operand.vmem [shape: f32[8,80], index: 1, kind: input, shape index: {}]
  %s2 = inlined_call_operand.vmem [shape: f32[8,1], index: 2, kind: input, shape index: {}]
  %s3 = inlined_call_operand.vmem [shape: f32[8,1568], index: 3, kind: output, shape index: {}]
  %s4 = sld [smem:[#allocation0]]
  $region22: #{model_forward.3} parent=0
    _
  %s6 = ssub.s32 1, %s4
  %s7 = scalar_select 0, %s6, %s4
  // Predicated region
  $region2: #{model_forward.3} parent=0 // pred_check
    _
  $region3: #{model_forward.3} parent=0 // pred_check_branch
    %9 = sbr.rel (0) target = $region5
  $region4: #{model_forward.3} parent=0 // pred_region
    _
  $region5: #{model_forward.3} parent=0 // pred_fallthru
    _
  // Predicated region
  $region6: #{model_forward.3} parent=0 // pred_check
    _
  $region7: #{model_forward.3} parent=0 // pred_check_branch
    %11 = sbr.rel (0) target = $region9
  $region8: #{model_forward.3} parent=0 // pred_region
    _
  $region9: #{model_forward.3} parent=0 // pred_fallthru
    _
  // Predicated region
  $region10: #{model_forward.3} parent=0 // pred_check
    _
  $region11: #{model_forward.3} parent=0 // pred_check_branch
    %13 = sbr.rel (0) target = $region13
  $region12: #{model_forward.3} parent=0 // pred_region
    _
  $region13: #{model_forward.3} parent=0 // pred_fallthru
    _
  %v14 = vld [vmem:[%s1] sm:$0xff]
  %v15 = vld [vmem:[%s0] sm:$0xff]
  %v16 = vld [vmem:[%s0 + $0x8] sm:$0xff]
  %v17 = vld [vmem:[%s0 + $0x10] sm:$0xff]
  %v18 = vld [vmem:[%s0 + $0x18] sm:$0xff]
  %v19 = vld [vmem:[%s0 + $0x20] sm:$0xff]
  %v20 = vld [vmem:[%s0 + $0x28] sm:$0xff]
  %v21 = vld [vmem:[%s0 + $0x30] sm:$0xff]
  %v22 = vld [vmem:[%s0 + $0x38] sm:$0xff]
  %v23 = vld [vmem:[%s0 + $0x40] sm:$0xff]
  %v24 = vld [vmem:[%s0 + $0x48] sm:$0xff]
  %v25 = vld [vmem:[%s0 + $0x50] sm:$0xff]
  %v26 = vld [vmem:[%s0 + $0x58] sm:$0xff]
  %v27 = vld [vmem:[%s0 + $0x60] sm:$0xff]
  %v28 = vld [vmem:[%s0 + $0x68] sm:$0xff]
  %v29 = vld [vmem:[%s0 + $0x70] sm:$0xff]
  %v30 = vld [vmem:[%s0 + $0x78] sm:$0xff]
  %v31 = vld [vmem:[%s0 + $0x80] sm:$0xff]
  %v32 = vld [vmem:[%s0 + $0x88] sm:$0xff]
  %v33 = vld [vmem:[%s0 + $0x90] sm:$0xff]
  %v34 = vld [vmem:[%s0 + $0x98] sm:$0xff]
  %v35 = vld [vmem:[%s0 + $0xa0] sm:$0xff]
  %v36 = vld [vmem:[%s0 + $0xa8] sm:$0xff]
  %v37 = vld [vmem:[%s0 + $0xb0] sm:$0xff]
  %v38 = vld [vmem:[%s0 + $0xb8] sm:$0xff]
  %v39 = vld [vmem:[%s0 + $0xc0] sm:$0xff]
  %v40 = vld [vmem:[%s0 + $0xc8] sm:$0xff]
  %v41 = vld [vmem:[%s0 + $0xd0] sm:$0xff]
  %v42 = vld [vmem:[%s0 + $0xd8] sm:$0xff]
  %v43 = vld [vmem:[%s0 + $0xe0] sm:$0xff]
  %v44 = vld [vmem:[%s0 + $0xe8] sm:$0xff]
  %v45 = vld [vmem:[%s0 + $0xf0] sm:$0xff]
  %v46 = vld [vmem:[%s0 + $0xf8] sm:$0xff]
  %v47 = vld [vmem:[%s0 + $0x100] sm:$0xff]
  %v48 = vld [vmem:[%s0 + $0x108] sm:$0xff]
  %v49 = vld [vmem:[%s0 + $0x110] sm:$0xff]
  %v50 = vld [vmem:[%s0 + $0x118] sm:$0xff]
  %v51 = vld [vmem:[%s0 + $0x120] sm:$0xff]
  %v52 = vld [vmem:[%s0 + $0x128] sm:$0xff]
  %v53 = vld [vmem:[%s0 + $0x130] sm:$0xff]
  %v54 = vld [vmem:[%s0 + $0x138] sm:$0xff]
  %v55 = vld [vmem:[%s0 + $0x140] sm:$0xff]
  %v56 = vld [vmem:[%s0 + $0x148] sm:$0xff]
  %v57 = vld [vmem:[%s0 + $0x150] sm:$0xff]
  %v58 = vld [vmem:[%s0 + $0x158] sm:$0xff]
  %v59 = vld [vmem:[%s0 + $0x160] sm:$0xff]
  %v60 = vld [vmem:[%s0 + $0x168] sm:$0xff]
  %v61 = vld [vmem:[%s0 + $0x170] sm:$0xff]
  %v62 = vld [vmem:[%s0 + $0x178] sm:$0xff]
  %v63 = vld [vmem:[%s0 + $0x180] sm:$0xff]
  %v64 = vld [vmem:[%s0 + $0x188] sm:$0xff]
  %v65 = vld [vmem:[%s0 + $0x190] sm:$0xff]
  %v66 = vld [vmem:[%s0 + $0x198] sm:$0xff]
  %v67 = vld [vmem:[%s0 + $0x1a0] sm:$0xff]
  %v68 = vld [vmem:[%s0 + $0x1a8] sm:$0xff]
  %v69 = vld [vmem:[%s0 + $0x1b0] sm:$0xff]
  %v70 = vld [vmem:[%s0 + $0x1b8] sm:$0xff]
  %v71 = vld [vmem:[%s0 + $0x1c0] sm:$0xff]
  %v72 = vld [vmem:[%s0 + $0x1c8] sm:$0xff]
  %v73 = vld [vmem:[%s0 + $0x1d0] sm:$0xff]
  %v74 = vld [vmem:[%s0 + $0x1d8] sm:$0xff]
  %v75 = vld [vmem:[%s0 + $0x1e0] sm:$0xff]
  %v76 = vld [vmem:[%s0 + $0x1e8] sm:$0xff]
  %v77 = vld [vmem:[%s0 + $0x1f0] sm:$0xff]
  %v78 = vld [vmem:[%s0 + $0x1f8] sm:$0xff]
  %v79 = vld [vmem:[%s0 + $0x200] sm:$0xff]
  %v80 = vld [vmem:[%s0 + $0x208] sm:$0xff]
  %v81 = vld [vmem:[%s0 + $0x210] sm:$0xff]
  %v82 = vld [vmem:[%s0 + $0x218] sm:$0xff]
  %v83 = vld [vmem:[%s0 + $0x220] sm:$0xff]
  %v84 = vld [vmem:[%s0 + $0x228] sm:$0xff]
  %v85 = vld [vmem:[%s0 + $0x230] sm:$0xff]
  %v86 = vld [vmem:[%s0 + $0x238] sm:$0xff]
  %v87 = vld [vmem:[%s0 + $0x240] sm:$0xff]
  %v88 = vld [vmem:[%s0 + $0x248] sm:$0xff]
  %v89 = vld [vmem:[%s0 + $0x250] sm:$0xff]
  %v90 = vld [vmem:[%s0 + $0x258] sm:$0xff]
  %v91 = vld [vmem:[%s0 + $0x260] sm:$0xff]
  %v92 = vld [vmem:[%s0 + $0x268] sm:$0xff]
  %v93 = vld [vmem:[%s0 + $0x270] sm:$0xff]
  %v94 = vld [vmem:[%s0 + $0x278] sm:$0xff]
  %v95 = vld [vmem:[%s0 + $0x280] sm:$0xff]
  %v96 = vld [vmem:[%s0 + $0x288] sm:$0xff]
  %v97 = vld [vmem:[%s0 + $0x290] sm:$0xff]
  %v98 = vld [vmem:[%s0 + $0x298] sm:$0xff]
  %v99 = vld [vmem:[%s0 + $0x2a0] sm:$0xff]
  %v100 = vld [vmem:[%s0 + $0x2a8] sm:$0xff]
  %v101 = vld [vmem:[%s0 + $0x2b0] sm:$0xff]
  %v102 = vld [vmem:[%s0 + $0x2b8] sm:$0xff]
  %v103 = vld [vmem:[%s0 + $0x2c0] sm:$0xff]
  %v104 = vld [vmem:[%s0 + $0x2c8] sm:$0xff]
  %v105 = vld [vmem:[%s0 + $0x2d0] sm:$0xff]
  %v106 = vld [vmem:[%s0 + $0x2d8] sm:$0xff]
  %v107 = vld [vmem:[%s0 + $0x2e0] sm:$0xff]
  %v108 = vld [vmem:[%s0 + $0x2e8] sm:$0xff]
  %v109 = vld [vmem:[%s0 + $0x2f0] sm:$0xff]
  %v110 = vld [vmem:[%s0 + $0x2f8] sm:$0xff]
  %v111 = vld [vmem:[%s0 + $0x300] sm:$0xff]
  %v112 = vld [vmem:[%s0 + $0x308] sm:$0xff]
  %v113 = vld [vmem:[%s0 + $0x310] sm:$0xff]
  %v114 = vld [vmem:[%s0 + $0x318] sm:$0xff]
  %v115 = vld [vmem:[%s0 + $0x320] sm:$0xff]
  %v116 = vld [vmem:[%s0 + $0x328] sm:$0xff]
  %v117 = vld [vmem:[%s0 + $0x330] sm:$0xff]
  %v118 = vld [vmem:[%s0 + $0x338] sm:$0xff]
  %v119 = vld [vmem:[%s0 + $0x340] sm:$0xff]
  %v120 = vld [vmem:[%s0 + $0x348] sm:$0xff]
  %v121 = vld [vmem:[%s0 + $0x350] sm:$0xff]
  %v122 = vld [vmem:[%s0 + $0x358] sm:$0xff]
  %v123 = vld [vmem:[%s0 + $0x360] sm:$0xff]
  %v124 = vld [vmem:[%s0 + $0x368] sm:$0xff]
  %v125 = vld [vmem:[%s0 + $0x370] sm:$0xff]
  %v126 = vld [vmem:[%s0 + $0x378] sm:$0xff]
  %v127 = vld [vmem:[%s0 + $0x380] sm:$0xff]
  %v128 = vld [vmem:[%s0 + $0x388] sm:$0xff]
  %v129 = vld [vmem:[%s0 + $0x390] sm:$0xff]
  %v130 = vld [vmem:[%s0 + $0x398] sm:$0xff]
  %v131 = vld [vmem:[%s0 + $0x3a0] sm:$0xff]
  %v132 = vld [vmem:[%s0 + $0x3a8] sm:$0xff]
  %v133 = vld [vmem:[%s0 + $0x3b0] sm:$0xff]
  %v134 = vld [vmem:[%s0 + $0x3b8] sm:$0xff]
  %v135 = vld [vmem:[%s0 + $0x3c0] sm:$0xff]
  %v136 = vld [vmem:[%s0 + $0x3c8] sm:$0xff]
  %v137 = vld [vmem:[%s0 + $0x3d0] sm:$0xff]
  %v138 = vld [vmem:[%s0 + $0x3d8] sm:$0xff]
  %v139 = vld [vmem:[%s0 + $0x3e0] sm:$0xff]
  %v140 = vld [vmem:[%s0 + $0x3e8] sm:$0xff]
  %v141 = vld [vmem:[%s0 + $0x3f0] sm:$0xff]
  %v142 = vld [vmem:[%s0 + $0x3f8] sm:$0xff]
  %v143 = vld [vmem:[%s0 + $0x400] sm:$0xff]
  %v144 = vld [vmem:[%s0 + $0x408] sm:$0xff]
  %vm145 = vcmask 654336
  %v147 = vsel %vm145, %v14, 0
  %149 = vmatpush.msra.mxu0 0.0
  %150 = vmatpush.msra.mxu0 0.0
  %151 = vmatpush.msra.mxu0 0.0
  %152 = vmatpush.msra.mxu0 0.0
  %153 = vmatpush.msra.mxu0 0.0
  %154 = vmatpush.msra.mxu0 0.0
  %155 = vmatpush.msra.mxu0 %v132
  %156 = vmatpush.msra.mxu0 %v119
  %157 = vmatpush.msra.mxu0 %v106
  %158 = vmatpush.msra.mxu0 %v93
  %159 = vmatpush.msra.mxu0 %v80
  %160 = vmatpush.msra.mxu0 %v67
  %161 = vmatpush.msra.mxu0 %v54
  %162 = vmatpush.msra.mxu0 %v41
  %163 = vmatpush.msra.mxu0 %v28
  %164 = vmatpush.msra.mxu0 %v15
  %165 = vmatmul.f32.gmra.mxu0 %v147
  %v166 = vpop.f32.mrf.mxu0
  %v167 = vadd.f32 0.0, %v166
  %168 = vdwg.mxu0
  %169 = vmatpush.msra.mxu0 0.0
  %170 = vmatpush.msra.mxu0 0.0
  %171 = vmatpush.msra.mxu0 0.0
  %172 = vmatpush.msra.mxu0 0.0
  %173 = vmatpush.msra.mxu0 0.0
  %174 = vmatpush.msra.mxu0 0.0
  %175 = vmatpush.msra.mxu0 %v133
  %176 = vmatpush.msra.mxu0 %v120
  %177 = vmatpush.msra.mxu0 %v107
  %178 = vmatpush.msra.mxu0 %v94
  %179 = vmatpush.msra.mxu0 %v81
  %180 = vmatpush.msra.mxu0 %v68
  %181 = vmatpush.msra.mxu0 %v55
  %182 = vmatpush.msra.mxu0 %v42
  %183 = vmatpush.msra.mxu0 %v29
  %184 = vmatpush.msra.mxu0 %v16
  %185 = vmatmul.f32.gmra.mxu0 %v147
  %v186 = vpop.f32.mrf.mxu0
  %v187 = vadd.f32 0.0, %v186
  %188 = vdwg.mxu0
  %189 = vmatpush.msra.mxu0 0.0
  %190 = vmatpush.msra.mxu0 0.0
  %191 = vmatpush.msra.mxu0 0.0
  %192 = vmatpush.msra.mxu0 0.0
  %193 = vmatpush.msra.mxu0 0.0
  %194 = vmatpush.msra.mxu0 0.0
  %195 = vmatpush.msra.mxu0 %v134
  %196 = vmatpush.msra.mxu0 %v121
  %197 = vmatpush.msra.mxu0 %v108
  %198 = vmatpush.msra.mxu0 %v95
  %199 = vmatpush.msra.mxu0 %v82
  %200 = vmatpush.msra.mxu0 %v69
  %201 = vmatpush.msra.mxu0 %v56
  %202 = vmatpush.msra.mxu0 %v43
  %203 = vmatpush.msra.mxu0 %v30
  %204 = vmatpush.msra.mxu0 %v17
  %205 = vmatmul.f32.gmra.mxu0 %v147
  %v206 = vpop.f32.mrf.mxu0
  %v207 = vadd.f32 0.0, %v206
  %208 = vdwg.mxu0
  %209 = vmatpush.msra.mxu0 0.0
  %210 = vmatpush.msra.mxu0 0.0
  %211 = vmatpush.msra.mxu0 0.0
  %212 = vmatpush.msra.mxu0 0.0
  %213 = vmatpush.msra.mxu0 0.0
  %214 = vmatpush.msra.mxu0 0.0
  %215 = vmatpush.msra.mxu0 %v135
  %216 = vmatpush.msra.mxu0 %v122
  %217 = vmatpush.msra.mxu0 %v109
  %218 = vmatpush.msra.mxu0 %v96
  %219 = vmatpush.msra.mxu0 %v83
  %220 = vmatpush.msra.mxu0 %v70
  %221 = vmatpush.msra.mxu0 %v57
  %222 = vmatpush.msra.mxu0 %v44
  %223 = vmatpush.msra.mxu0 %v31
  %224 = vmatpush.msra.mxu0 %v18
  %225 = vmatmul.f32.gmra.mxu0 %v147
  %v226 = vpop.f32.mrf.mxu0
  %v227 = vadd.f32 0.0, %v226
  %228 = vdwg.mxu0
  %229 = vmatpush.msra.mxu0 0.0
  %230 = vmatpush.msra.mxu0 0.0
  %231 = vmatpush.msra.mxu0 0.0
  %232 = vmatpush.msra.mxu0 0.0
  %233 = vmatpush.msra.mxu0 0.0
  %234 = vmatpush.msra.mxu0 0.0
  %235 = vmatpush.msra.mxu0 %v136
  %236 = vmatpush.msra.mxu0 %v123
  %237 = vmatpush.msra.mxu0 %v110
  %238 = vmatpush.msra.mxu0 %v97
  %239 = vmatpush.msra.mxu0 %v84
  %240 = vmatpush.msra.mxu0 %v71
  %241 = vmatpush.msra.mxu0 %v58
  %242 = vmatpush.msra.mxu0 %v45
  %243 = vmatpush.msra.mxu0 %v32
  %244 = vmatpush.msra.mxu0 %v19
  %245 = vmatmul.f32.gmra.mxu0 %v147
  %v246 = vpop.f32.mrf.mxu0
  %v247 = vadd.f32 0.0, %v246
  %248 = vdwg.mxu0
  %249 = vmatpush.msra.mxu0 0.0
  %250 = vmatpush.msra.mxu0 0.0
  %251 = vmatpush.msra.mxu0 0.0
  %252 = vmatpush.msra.mxu0 0.0
  %253 = vmatpush.msra.mxu0 0.0
  %254 = vmatpush.msra.mxu0 0.0
  %255 = vmatpush.msra.mxu0 %v137
  %256 = vmatpush.msra.mxu0 %v124
  %257 = vmatpush.msra.mxu0 %v111
  %258 = vmatpush.msra.mxu0 %v98
  %259 = vmatpush.msra.mxu0 %v85
  %260 = vmatpush.msra.mxu0 %v72
  %261 = vmatpush.msra.mxu0 %v59
  %262 = vmatpush.msra.mxu0 %v46
  %263 = vmatpush.msra.mxu0 %v33
  %264 = vmatpush.msra.mxu0 %v20
  %265 = vmatmul.f32.gmra.mxu0 %v147
  %v266 = vpop.f32.mrf.mxu0
  %v267 = vadd.f32 0.0, %v266
  %268 = vdwg.mxu0
  %269 = vmatpush.msra.mxu0 0.0
  %270 = vmatpush.msra.mxu0 0.0
  %271 = vmatpush.msra.mxu0 0.0
  %272 = vmatpush.msra.mxu0 0.0
  %273 = vmatpush.msra.mxu0 0.0
  %274 = vmatpush.msra.mxu0 0.0
  %275 = vmatpush.msra.mxu0 %v138
  %276 = vmatpush.msra.mxu0 %v125
  %277 = vmatpush.msra.mxu0 %v112
  %278 = vmatpush.msra.mxu0 %v99
  %279 = vmatpush.msra.mxu0 %v86
  %280 = vmatpush.msra.mxu0 %v73
  %281 = vmatpush.msra.mxu0 %v60
  %282 = vmatpush.msra.mxu0 %v47
  %283 = vmatpush.msra.mxu0 %v34
  %284 = vmatpush.msra.mxu0 %v21
  %285 = vmatmul.f32.gmra.mxu0 %v147
  %v286 = vpop.f32.mrf.mxu0
  %v287 = vadd.f32 0.0, %v286
  %288 = vdwg.mxu0
  %289 = vmatpush.msra.mxu0 0.0
  %290 = vmatpush.msra.mxu0 0.0
  %291 = vmatpush.msra.mxu0 0.0
  %292 = vmatpush.msra.mxu0 0.0
  %293 = vmatpush.msra.mxu0 0.0
  %294 = vmatpush.msra.mxu0 0.0
  %295 = vmatpush.msra.mxu0 %v139
  %296 = vmatpush.msra.mxu0 %v126
  %297 = vmatpush.msra.mxu0 %v113
  %298 = vmatpush.msra.mxu0 %v100
  %299 = vmatpush.msra.mxu0 %v87
  %300 = vmatpush.msra.mxu0 %v74
  %301 = vmatpush.msra.mxu0 %v61
  %302 = vmatpush.msra.mxu0 %v48
  %303 = vmatpush.msra.mxu0 %v35
  %304 = vmatpush.msra.mxu0 %v22
  %305 = vmatmul.f32.gmra.mxu0 %v147
  %v306 = vpop.f32.mrf.mxu0
  %v307 = vadd.f32 0.0, %v306
  %308 = vdwg.mxu0
  %309 = vmatpush.msra.mxu0 0.0
  %310 = vmatpush.msra.mxu0 0.0
  %311 = vmatpush.msra.mxu0 0.0
  %312 = vmatpush.msra.mxu0 0.0
  %313 = vmatpush.msra.mxu0 0.0
  %314 = vmatpush.msra.mxu0 0.0
  %315 = vmatpush.msra.mxu0 %v140
  %316 = vmatpush.msra.mxu0 %v127
  %317 = vmatpush.msra.mxu0 %v114
  %318 = vmatpush.msra.mxu0 %v101
  %319 = vmatpush.msra.mxu0 %v88
  %320 = vmatpush.msra.mxu0 %v75
  %321 = vmatpush.msra.mxu0 %v62
  %322 = vmatpush.msra.mxu0 %v49
  %323 = vmatpush.msra.mxu0 %v36
  %324 = vmatpush.msra.mxu0 %v23
  %325 = vmatmul.f32.gmra.mxu0 %v147
  %v326 = vpop.f32.mrf.mxu0
  %v327 = vadd.f32 0.0, %v326
  %328 = vdwg.mxu0
  %329 = vmatpush.msra.mxu0 0.0
  %330 = vmatpush.msra.mxu0 0.0
  %331 = vmatpush.msra.mxu0 0.0
  %332 = vmatpush.msra.mxu0 0.0
  %333 = vmatpush.msra.mxu0 0.0
  %334 = vmatpush.msra.mxu0 0.0
  %335 = vmatpush.msra.mxu0 %v141
  %336 = vmatpush.msra.mxu0 %v128
  %337 = vmatpush.msra.mxu0 %v115
  %338 = vmatpush.msra.mxu0 %v102
  %339 = vmatpush.msra.mxu0 %v89
  %340 = vmatpush.msra.mxu0 %v76
  %341 = vmatpush.msra.mxu0 %v63
  %342 = vmatpush.msra.mxu0 %v50
  %343 = vmatpush.msra.mxu0 %v37
  %344 = vmatpush.msra.mxu0 %v24
  %345 = vmatmul.f32.gmra.mxu0 %v147
  %v346 = vpop.f32.mrf.mxu0
  %v347 = vadd.f32 0.0, %v346
  %348 = vdwg.mxu0
  %349 = vmatpush.msra.mxu0 0.0
  %350 = vmatpush.msra.mxu0 0.0
  %351 = vmatpush.msra.mxu0 0.0
  %352 = vmatpush.msra.mxu0 0.0
  %353 = vmatpush.msra.mxu0 0.0
  %354 = vmatpush.msra.mxu0 0.0
  %355 = vmatpush.msra.mxu0 %v142
  %356 = vmatpush.msra.mxu0 %v129
  %357 = vmatpush.msra.mxu0 %v116
  %358 = vmatpush.msra.mxu0 %v103
  %359 = vmatpush.msra.mxu0 %v90
  %360 = vmatpush.msra.mxu0 %v77
  %361 = vmatpush.msra.mxu0 %v64
  %362 = vmatpush.msra.mxu0 %v51
  %363 = vmatpush.msra.mxu0 %v38
  %364 = vmatpush.msra.mxu0 %v25
  %365 = vmatmul.f32.gmra.mxu0 %v147
  %v366 = vpop.f32.mrf.mxu0
  %v367 = vadd.f32 0.0, %v366
  %368 = vdwg.mxu0
  %369 = vmatpush.msra.mxu0 0.0
  %370 = vmatpush.msra.mxu0 0.0
  %371 = vmatpush.msra.mxu0 0.0
  %372 = vmatpush.msra.mxu0 0.0
  %373 = vmatpush.msra.mxu0 0.0
  %374 = vmatpush.msra.mxu0 0.0
  %375 = vmatpush.msra.mxu0 %v143
  %376 = vmatpush.msra.mxu0 %v130
  %377 = vmatpush.msra.mxu0 %v117
  %378 = vmatpush.msra.mxu0 %v104
  %379 = vmatpush.msra.mxu0 %v91
  %380 = vmatpush.msra.mxu0 %v78
  %381 = vmatpush.msra.mxu0 %v65
  %382 = vmatpush.msra.mxu0 %v52
  %383 = vmatpush.msra.mxu0 %v39
  %384 = vmatpush.msra.mxu0 %v26
  %385 = vmatmul.f32.gmra.mxu0 %v147
  %v386 = vpop.f32.mrf.mxu0
  %v387 = vadd.f32 0.0, %v386
  %388 = vdwg.mxu0
  %389 = vmatpush.msra.mxu0 0.0
  %390 = vmatpush.msra.mxu0 0.0
  %391 = vmatpush.msra.mxu0 0.0
  %392 = vmatpush.msra.mxu0 0.0
  %393 = vmatpush.msra.mxu0 0.0
  %394 = vmatpush.msra.mxu0 0.0
  %395 = vmatpush.msra.mxu0 %v144
  %396 = vmatpush.msra.mxu0 %v131
  %397 = vmatpush.msra.mxu0 %v118
  %398 = vmatpush.msra.mxu0 %v105
  %399 = vmatpush.msra.mxu0 %v92
  %400 = vmatpush.msra.mxu0 %v79
  %401 = vmatpush.msra.mxu0 %v66
  %402 = vmatpush.msra.mxu0 %v53
  %403 = vmatpush.msra.mxu0 %v40
  %404 = vmatpush.msra.mxu0 %v27
  %405 = vmatmul.f32.gmra.mxu0 %v147
  %v406 = vpop.f32.mrf.mxu0
  %v407 = vadd.f32 0.0, %v406
  %408 = vdwg.mxu0
  %s409 = scalar_lea.vmem %s0, 1040
  %v410 = vld [vmem:[%s409] sm:$0xff]
  %v411 = vld [vmem:[%s409 + $0x8] sm:$0xff]
  %v412 = vld [vmem:[%s409 + $0x10] sm:$0xff]
  %v413 = vld [vmem:[%s409 + $0x18] sm:$0xff]
  %v414 = vld [vmem:[%s409 + $0x20] sm:$0xff]
  %v415 = vld [vmem:[%s409 + $0x28] sm:$0xff]
  %v416 = vld [vmem:[%s409 + $0x30] sm:$0xff]
  %v417 = vld [vmem:[%s409 + $0x38] sm:$0xff]
  %v418 = vld [vmem:[%s409 + $0x40] sm:$0xff]
  %v419 = vld [vmem:[%s409 + $0x48] sm:$0xff]
  %v420 = vld [vmem:[%s409 + $0x50] sm:$0xff]
  %v421 = vld [vmem:[%s409 + $0x58] sm:$0xff]
  %v422 = vld [vmem:[%s409 + $0x60] sm:$0xff]
  %v423 = vld [vmem:[%s409 + $0x68] sm:$0xff]
  %v424 = vld [vmem:[%s409 + $0x70] sm:$0xff]
  %v425 = vld [vmem:[%s409 + $0x78] sm:$0xff]
  %v426 = vld [vmem:[%s409 + $0x80] sm:$0xff]
  %v427 = vld [vmem:[%s409 + $0x88] sm:$0xff]
  %v428 = vld [vmem:[%s409 + $0x90] sm:$0xff]
  %v429 = vld [vmem:[%s409 + $0x98] sm:$0xff]
  %v430 = vld [vmem:[%s409 + $0xa0] sm:$0xff]
  %v431 = vld [vmem:[%s409 + $0xa8] sm:$0xff]
  %v432 = vld [vmem:[%s409 + $0xb0] sm:$0xff]
  %v433 = vld [vmem:[%s409 + $0xb8] sm:$0xff]
  %v434 = vld [vmem:[%s409 + $0xc0] sm:$0xff]
  %v435 = vld [vmem:[%s409 + $0xc8] sm:$0xff]
  %v436 = vld [vmem:[%s409 + $0xd0] sm:$0xff]
  %v437 = vld [vmem:[%s409 + $0xd8] sm:$0xff]
  %v438 = vld [vmem:[%s409 + $0xe0] sm:$0xff]
  %v439 = vld [vmem:[%s409 + $0xe8] sm:$0xff]
  %v440 = vld [vmem:[%s409 + $0xf0] sm:$0xff]
  %v441 = vld [vmem:[%s409 + $0xf8] sm:$0xff]
  %v442 = vld [vmem:[%s409 + $0x100] sm:$0xff]
  %v443 = vld [vmem:[%s409 + $0x108] sm:$0xff]
  %v444 = vld [vmem:[%s409 + $0x110] sm:$0xff]
  %v445 = vld [vmem:[%s409 + $0x118] sm:$0xff]
  %v446 = vld [vmem:[%s409 + $0x120] sm:$0xff]
  %v447 = vld [vmem:[%s409 + $0x128] sm:$0xff]
  %v448 = vld [vmem:[%s409 + $0x130] sm:$0xff]
  %v449 = vld [vmem:[%s409 + $0x138] sm:$0xff]
  %v450 = vld [vmem:[%s409 + $0x140] sm:$0xff]
  %v451 = vld [vmem:[%s409 + $0x148] sm:$0xff]
  %v452 = vld [vmem:[%s409 + $0x150] sm:$0xff]
  %v453 = vld [vmem:[%s409 + $0x158] sm:$0xff]
  %v454 = vld [vmem:[%s409 + $0x160] sm:$0xff]
  %v455 = vld [vmem:[%s409 + $0x168] sm:$0xff]
  %v456 = vld [vmem:[%s409 + $0x170] sm:$0xff]
  %v457 = vld [vmem:[%s409 + $0x178] sm:$0xff]
  %v458 = vld [vmem:[%s409 + $0x180] sm:$0xff]
  %v459 = vld [vmem:[%s409 + $0x188] sm:$0xff]
  %v460 = vld [vmem:[%s409 + $0x190] sm:$0xff]
  %v461 = vld [vmem:[%s409 + $0x198] sm:$0xff]
  %v462 = vld [vmem:[%s409 + $0x1a0] sm:$0xff]
  %v463 = vld [vmem:[%s409 + $0x1a8] sm:$0xff]
  %v464 = vld [vmem:[%s409 + $0x1b0] sm:$0xff]
  %v465 = vld [vmem:[%s409 + $0x1b8] sm:$0xff]
  %v466 = vld [vmem:[%s409 + $0x1c0] sm:$0xff]
  %v467 = vld [vmem:[%s409 + $0x1c8] sm:$0xff]
  %v468 = vld [vmem:[%s409 + $0x1d0] sm:$0xff]
  %v469 = vld [vmem:[%s409 + $0x1d8] sm:$0xff]
  %v470 = vld [vmem:[%s409 + $0x1e0] sm:$0xff]
  %v471 = vld [vmem:[%s409 + $0x1e8] sm:$0xff]
  %v472 = vld [vmem:[%s409 + $0x1f0] sm:$0xff]
  %v473 = vld [vmem:[%s409 + $0x1f8] sm:$0xff]
  %v474 = vld [vmem:[%s409 + $0x200] sm:$0xff]
  %v475 = vld [vmem:[%s409 + $0x208] sm:$0xff]
  %v476 = vld [vmem:[%s409 + $0x210] sm:$0xff]
  %v477 = vld [vmem:[%s409 + $0x218] sm:$0xff]
  %v478 = vld [vmem:[%s409 + $0x220] sm:$0xff]
  %v479 = vld [vmem:[%s409 + $0x228] sm:$0xff]
  %v480 = vld [vmem:[%s409 + $0x230] sm:$0xff]
  %v481 = vld [vmem:[%s409 + $0x238] sm:$0xff]
  %v482 = vld [vmem:[%s409 + $0x240] sm:$0xff]
  %v483 = vld [vmem:[%s409 + $0x248] sm:$0xff]
  %v484 = vld [vmem:[%s409 + $0x250] sm:$0xff]
  %v485 = vld [vmem:[%s409 + $0x258] sm:$0xff]
  %v486 = vld [vmem:[%s409 + $0x260] sm:$0xff]
  %v487 = vld [vmem:[%s409 + $0x268] sm:$0xff]
  %v488 = vld [vmem:[%s409 + $0x270] sm:$0xff]
  %v489 = vld [vmem:[%s409 + $0x278] sm:$0xff]
  %v490 = vld [vmem:[%s409 + $0x280] sm:$0xff]
  %v491 = vld [vmem:[%s409 + $0x288] sm:$0xff]
  %v492 = vld [vmem:[%s409 + $0x290] sm:$0xff]
  %v493 = vld [vmem:[%s409 + $0x298] sm:$0xff]
  %v494 = vld [vmem:[%s409 + $0x2a0] sm:$0xff]
  %v495 = vld [vmem:[%s409 + $0x2a8] sm:$0xff]
  %v496 = vld [vmem:[%s409 + $0x2b0] sm:$0xff]
  %v497 = vld [vmem:[%s409 + $0x2b8] sm:$0xff]
  %v498 = vld [vmem:[%s409 + $0x2c0] sm:$0xff]
  %v499 = vld [vmem:[%s409 + $0x2c8] sm:$0xff]
  %v500 = vld [vmem:[%s409 + $0x2d0] sm:$0xff]
  %v501 = vld [vmem:[%s409 + $0x2d8] sm:$0xff]
  %v502 = vld [vmem:[%s409 + $0x2e0] sm:$0xff]
  %v503 = vld [vmem:[%s409 + $0x2e8] sm:$0xff]
  %v504 = vld [vmem:[%s409 + $0x2f0] sm:$0xff]
  %v505 = vld [vmem:[%s409 + $0x2f8] sm:$0xff]
  %v506 = vld [vmem:[%s409 + $0x300] sm:$0xff]
  %v507 = vld [vmem:[%s409 + $0x308] sm:$0xff]
  %v508 = vld [vmem:[%s409 + $0x310] sm:$0xff]
  %v509 = vld [vmem:[%s409 + $0x318] sm:$0xff]
  %v510 = vld [vmem:[%s409 + $0x320] sm:$0xff]
  %v511 = vld [vmem:[%s409 + $0x328] sm:$0xff]
  %v512 = vld [vmem:[%s409 + $0x330] sm:$0xff]
  %v513 = vld [vmem:[%s409 + $0x338] sm:$0xff]
  %v514 = vld [vmem:[%s409 + $0x340] sm:$0xff]
  %v515 = vld [vmem:[%s409 + $0x348] sm:$0xff]
  %v516 = vld [vmem:[%s409 + $0x350] sm:$0xff]
  %v517 = vld [vmem:[%s409 + $0x358] sm:$0xff]
  %v518 = vld [vmem:[%s409 + $0x360] sm:$0xff]
  %v519 = vld [vmem:[%s409 + $0x368] sm:$0xff]
  %v520 = vld [vmem:[%s409 + $0x370] sm:$0xff]
  %v521 = vld [vmem:[%s409 + $0x378] sm:$0xff]
  %v522 = vld [vmem:[%s409 + $0x380] sm:$0xff]
  %v523 = vld [vmem:[%s409 + $0x388] sm:$0xff]
  %v524 = vld [vmem:[%s409 + $0x390] sm:$0xff]
  %v525 = vld [vmem:[%s409 + $0x398] sm:$0xff]
  %v526 = vld [vmem:[%s409 + $0x3a0] sm:$0xff]
  %v527 = vld [vmem:[%s409 + $0x3a8] sm:$0xff]
  %v528 = vld [vmem:[%s409 + $0x3b0] sm:$0xff]
  %v529 = vld [vmem:[%s409 + $0x3b8] sm:$0xff]
  %v530 = vld [vmem:[%s409 + $0x3c0] sm:$0xff]
  %v531 = vld [vmem:[%s409 + $0x3c8] sm:$0xff]
  %v532 = vld [vmem:[%s409 + $0x3d0] sm:$0xff]
  %v533 = vld [vmem:[%s409 + $0x3d8] sm:$0xff]
  %v534 = vld [vmem:[%s409 + $0x3e0] sm:$0xff]
  %v535 = vld [vmem:[%s409 + $0x3e8] sm:$0xff]
  %v536 = vld [vmem:[%s409 + $0x3f0] sm:$0xff]
  %v537 = vld [vmem:[%s409 + $0x3f8] sm:$0xff]
  %v538 = vld [vmem:[%s409 + $0x400] sm:$0xff]
  %v539 = vld [vmem:[%s409 + $0x408] sm:$0xff]
  %540 = vmatpush.msra.mxu0 0.0
  %541 = vmatpush.msra.mxu0 0.0
  %542 = vmatpush.msra.mxu0 0.0
  %543 = vmatpush.msra.mxu0 0.0
  %544 = vmatpush.msra.mxu0 0.0
  %545 = vmatpush.msra.mxu0 0.0
  %546 = vmatpush.msra.mxu0 %v527
  %547 = vmatpush.msra.mxu0 %v514
  %548 = vmatpush.msra.mxu0 %v501
  %549 = vmatpush.msra.mxu0 %v488
  %550 = vmatpush.msra.mxu0 %v475
  %551 = vmatpush.msra.mxu0 %v462
  %552 = vmatpush.msra.mxu0 %v449
  %553 = vmatpush.msra.mxu0 %v436
  %554 = vmatpush.msra.mxu0 %v423
  %555 = vmatpush.msra.mxu0 %v410
  %556 = vmatmul.f32.gmra.mxu0 %v147
  %v557 = vpop.f32.mrf.mxu0
  %v558 = vadd.f32 0.0, %v557
  %559 = vdwg.mxu0
  %560 = vmatpush.msra.mxu0 0.0
  %561 = vmatpush.msra.mxu0 0.0
  %562 = vmatpush.msra.mxu0 0.0
  %563 = vmatpush.msra.mxu0 0.0
  %564 = vmatpush.msra.mxu0 0.0
  %565 = vmatpush.msra.mxu0 0.0
  %566 = vmatpush.msra.mxu0 %v528
  %567 = vmatpush.msra.mxu0 %v515
  %568 = vmatpush.msra.mxu0 %v502
  %569 = vmatpush.msra.mxu0 %v489
  %570 = vmatpush.msra.mxu0 %v476
  %571 = vmatpush.msra.mxu0 %v463
  %572 = vmatpush.msra.mxu0 %v450
  %573 = vmatpush.msra.mxu0 %v437
  %574 = vmatpush.msra.mxu0 %v424
  %575 = vmatpush.msra.mxu0 %v411
  %576 = vmatmul.f32.gmra.mxu0 %v147
  %v577 = vpop.f32.mrf.mxu0
  %v578 = vadd.f32 0.0, %v577
  %579 = vdwg.mxu0
  %580 = vmatpush.msra.mxu0 0.0
  %581 = vmatpush.msra.mxu0 0.0
  %582 = vmatpush.msra.mxu0 0.0
  %583 = vmatpush.msra.mxu0 0.0
  %584 = vmatpush.msra.mxu0 0.0
  %585 = vmatpush.msra.mxu0 0.0
  %586 = vmatpush.msra.mxu0 %v529
  %587 = vmatpush.msra.mxu0 %v516
  %588 = vmatpush.msra.mxu0 %v503
  %589 = vmatpush.msra.mxu0 %v490
  %590 = vmatpush.msra.mxu0 %v477
  %591 = vmatpush.msra.mxu0 %v464
  %592 = vmatpush.msra.mxu0 %v451
  %593 = vmatpush.msra.mxu0 %v438
  %594 = vmatpush.msra.mxu0 %v425
  %595 = vmatpush.msra.mxu0 %v412
  %596 = vmatmul.f32.gmra.mxu0 %v147
  %v597 = vpop.f32.mrf.mxu0
  %v598 = vadd.f32 0.0, %v597
  %599 = vdwg.mxu0
  %600 = vmatpush.msra.mxu0 0.0
  %601 = vmatpush.msra.mxu0 0.0
  %602 = vmatpush.msra.mxu0 0.0
  %603 = vmatpush.msra.mxu0 0.0
  %604 = vmatpush.msra.mxu0 0.0
  %605 = vmatpush.msra.mxu0 0.0
  %606 = vmatpush.msra.mxu0 %v530
  %607 = vmatpush.msra.mxu0 %v517
  %608 = vmatpush.msra.mxu0 %v504
  %609 = vmatpush.msra.mxu0 %v491
  %610 = vmatpush.msra.mxu0 %v478
  %611 = vmatpush.msra.mxu0 %v465
  %612 = vmatpush.msra.mxu0 %v452
  %613 = vmatpush.msra.mxu0 %v439
  %614 = vmatpush.msra.mxu0 %v426
  %615 = vmatpush.msra.mxu0 %v413
  %616 = vmatmul.f32.gmra.mxu0 %v147
  %v617 = vpop.f32.mrf.mxu0
  %v618 = vadd.f32 0.0, %v617
  %619 = vdwg.mxu0
  %620 = vmatpush.msra.mxu0 0.0
  %621 = vmatpush.msra.mxu0 0.0
  %622 = vmatpush.msra.mxu0 0.0
  %623 = vmatpush.msra.mxu0 0.0
  %624 = vmatpush.msra.mxu0 0.0
  %625 = vmatpush.msra.mxu0 0.0
  %626 = vmatpush.msra.mxu0 %v531
  %627 = vmatpush.msra.mxu0 %v518
  %628 = vmatpush.msra.mxu0 %v505
  %629 = vmatpush.msra.mxu0 %v492
  %630 = vmatpush.msra.mxu0 %v479
  %631 = vmatpush.msra.mxu0 %v466
  %632 = vmatpush.msra.mxu0 %v453
  %633 = vmatpush.msra.mxu0 %v440
  %634 = vmatpush.msra.mxu0 %v427
  %635 = vmatpush.msra.mxu0 %v414
  %636 = vmatmul.f32.gmra.mxu0 %v147
  %v637 = vpop.f32.mrf.mxu0
  %v638 = vadd.f32 0.0, %v637
  %639 = vdwg.mxu0
  %640 = vmatpush.msra.mxu0 0.0
  %641 = vmatpush.msra.mxu0 0.0
  %642 = vmatpush.msra.mxu0 0.0
  %643 = vmatpush.msra.mxu0 0.0
  %644 = vmatpush.msra.mxu0 0.0
  %645 = vmatpush.msra.mxu0 0.0
  %646 = vmatpush.msra.mxu0 %v532
  %647 = vmatpush.msra.mxu0 %v519
  %648 = vmatpush.msra.mxu0 %v506
  %649 = vmatpush.msra.mxu0 %v493
  %650 = vmatpush.msra.mxu0 %v480
  %651 = vmatpush.msra.mxu0 %v467
  %652 = vmatpush.msra.mxu0 %v454
  %653 = vmatpush.msra.mxu0 %v441
  %654 = vmatpush.msra.mxu0 %v428
  %655 = vmatpush.msra.mxu0 %v415
  %656 = vmatmul.f32.gmra.mxu0 %v147
  %v657 = vpop.f32.mrf.mxu0
  %v658 = vadd.f32 0.0, %v657
  %659 = vdwg.mxu0
  %660 = vmatpush.msra.mxu0 0.0
  %661 = vmatpush.msra.mxu0 0.0
  %662 = vmatpush.msra.mxu0 0.0
  %663 = vmatpush.msra.mxu0 0.0
  %664 = vmatpush.msra.mxu0 0.0
  %665 = vmatpush.msra.mxu0 0.0
  %666 = vmatpush.msra.mxu0 %v533
  %667 = vmatpush.msra.mxu0 %v520
  %668 = vmatpush.msra.mxu0 %v507
  %669 = vmatpush.msra.mxu0 %v494
  %670 = vmatpush.msra.mxu0 %v481
  %671 = vmatpush.msra.mxu0 %v468
  %672 = vmatpush.msra.mxu0 %v455
  %673 = vmatpush.msra.mxu0 %v442
  %674 = vmatpush.msra.mxu0 %v429
  %675 = vmatpush.msra.mxu0 %v416
  %676 = vmatmul.f32.gmra.mxu0 %v147
  %v677 = vpop.f32.mrf.mxu0
  %v678 = vadd.f32 0.0, %v677
  %679 = vdwg.mxu0
  %680 = vmatpush.msra.mxu0 0.0
  %681 = vmatpush.msra.mxu0 0.0
  %682 = vmatpush.msra.mxu0 0.0
  %683 = vmatpush.msra.mxu0 0.0
  %684 = vmatpush.msra.mxu0 0.0
  %685 = vmatpush.msra.mxu0 0.0
  %686 = vmatpush.msra.mxu0 %v534
  %687 = vmatpush.msra.mxu0 %v521
  %688 = vmatpush.msra.mxu0 %v508
  %689 = vmatpush.msra.mxu0 %v495
  %690 = vmatpush.msra.mxu0 %v482
  %691 = vmatpush.msra.mxu0 %v469
  %692 = vmatpush.msra.mxu0 %v456
  %693 = vmatpush.msra.mxu0 %v443
  %694 = vmatpush.msra.mxu0 %v430
  %695 = vmatpush.msra.mxu0 %v417
  %696 = vmatmul.f32.gmra.mxu0 %v147
  %v697 = vpop.f32.mrf.mxu0
  %v698 = vadd.f32 0.0, %v697
  %699 = vdwg.mxu0
  %700 = vmatpush.msra.mxu0 0.0
  %701 = vmatpush.msra.mxu0 0.0
  %702 = vmatpush.msra.mxu0 0.0
  %703 = vmatpush.msra.mxu0 0.0
  %704 = vmatpush.msra.mxu0 0.0
  %705 = vmatpush.msra.mxu0 0.0
  %706 = vmatpush.msra.mxu0 %v535
  %707 = vmatpush.msra.mxu0 %v522
  %708 = vmatpush.msra.mxu0 %v509
  %709 = vmatpush.msra.mxu0 %v496
  %710 = vmatpush.msra.mxu0 %v483
  %711 = vmatpush.msra.mxu0 %v470
  %712 = vmatpush.msra.mxu0 %v457
  %713 = vmatpush.msra.mxu0 %v444
  %714 = vmatpush.msra.mxu0 %v431
  %715 = vmatpush.msra.mxu0 %v418
  %716 = vmatmul.f32.gmra.mxu0 %v147
  %v717 = vpop.f32.mrf.mxu0
  %v718 = vadd.f32 0.0, %v717
  %719 = vdwg.mxu0
  %720 = vmatpush.msra.mxu0 0.0
  %721 = vmatpush.msra.mxu0 0.0
  %722 = vmatpush.msra.mxu0 0.0
  %723 = vmatpush.msra.mxu0 0.0
  %724 = vmatpush.msra.mxu0 0.0
  %725 = vmatpush.msra.mxu0 0.0
  %726 = vmatpush.msra.mxu0 %v536
  %727 = vmatpush.msra.mxu0 %v523
  %728 = vmatpush.msra.mxu0 %v510
  %729 = vmatpush.msra.mxu0 %v497
  %730 = vmatpush.msra.mxu0 %v484
  %731 = vmatpush.msra.mxu0 %v471
  %732 = vmatpush.msra.mxu0 %v458
  %733 = vmatpush.msra.mxu0 %v445
  %734 = vmatpush.msra.mxu0 %v432
  %735 = vmatpush.msra.mxu0 %v419
  %736 = vmatmul.f32.gmra.mxu0 %v147
  %v737 = vpop.f32.mrf.mxu0
  %v738 = vadd.f32 0.0, %v737
  %739 = vdwg.mxu0
  %740 = vmatpush.msra.mxu0 0.0
  %741 = vmatpush.msra.mxu0 0.0
  %742 = vmatpush.msra.mxu0 0.0
  %743 = vmatpush.msra.mxu0 0.0
  %744 = vmatpush.msra.mxu0 0.0
  %745 = vmatpush.msra.mxu0 0.0
  %746 = vmatpush.msra.mxu0 %v537
  %747 = vmatpush.msra.mxu0 %v524
  %748 = vmatpush.msra.mxu0 %v511
  %749 = vmatpush.msra.mxu0 %v498
  %750 = vmatpush.msra.mxu0 %v485
  %751 = vmatpush.msra.mxu0 %v472
  %752 = vmatpush.msra.mxu0 %v459
  %753 = vmatpush.msra.mxu0 %v446
  %754 = vmatpush.msra.mxu0 %v433
  %755 = vmatpush.msra.mxu0 %v420
  %756 = vmatmul.f32.gmra.mxu0 %v147
  %v757 = vpop.f32.mrf.mxu0
  %v758 = vadd.f32 0.0, %v757
  %759 = vdwg.mxu0
  %760 = vmatpush.msra.mxu0 0.0
  %761 = vmatpush.msra.mxu0 0.0
  %762 = vmatpush.msra.mxu0 0.0
  %763 = vmatpush.msra.mxu0 0.0
  %764 = vmatpush.msra.mxu0 0.0
  %765 = vmatpush.msra.mxu0 0.0
  %766 = vmatpush.msra.mxu0 %v538
  %767 = vmatpush.msra.mxu0 %v525
  %768 = vmatpush.msra.mxu0 %v512
  %769 = vmatpush.msra.mxu0 %v499
  %770 = vmatpush.msra.mxu0 %v486
  %771 = vmatpush.msra.mxu0 %v473
  %772 = vmatpush.msra.mxu0 %v460
  %773 = vmatpush.msra.mxu0 %v447
  %774 = vmatpush.msra.mxu0 %v434
  %775 = vmatpush.msra.mxu0 %v421
  %776 = vmatmul.f32.gmra.mxu0 %v147
  %v777 = vpop.f32.mrf.mxu0
  %v778 = vadd.f32 0.0, %v777
  %779 = vdwg.mxu0
  %780 = vmatpush.msra.mxu0 0.0
  %781 = vmatpush.msra.mxu0 0.0
  %782 = vmatpush.msra.mxu0 0.0
  %783 = vmatpush.msra.mxu0 0.0
  %784 = vmatpush.msra.mxu0 0.0
  %785 = vmatpush.msra.mxu0 0.0
  %786 = vmatpush.msra.mxu0 %v539
  %787 = vmatpush.msra.mxu0 %v526
  %788 = vmatpush.msra.mxu0 %v513
  %789 = vmatpush.msra.mxu0 %v500
  %790 = vmatpush.msra.mxu0 %v487
  %791 = vmatpush.msra.mxu0 %v474
  %792 = vmatpush.msra.mxu0 %v461
  %793 = vmatpush.msra.mxu0 %v448
  %794 = vmatpush.msra.mxu0 %v435
  %795 = vmatpush.msra.mxu0 %v422
  %796 = vmatmul.f32.gmra.mxu0 %v147
  %v797 = vpop.f32.mrf.mxu0
  %v798 = vadd.f32 0.0, %v797
  %799 = vdwg.mxu0
  %v800 = vmax.f32 %v167, %v558
  %v801 = vmax.f32 %v187, %v578
  %v802 = vmax.f32 %v207, %v598
  %v803 = vmax.f32 %v227, %v618
  %v804 = vmax.f32 %v247, %v638
  %v805 = vmax.f32 %v267, %v658
  %v806 = vmax.f32 %v287, %v678
  %v807 = vmax.f32 %v307, %v698
  %v808 = vmax.f32 %v327, %v718
  %v809 = vmax.f32 %v347, %v738
  %v810 = vmax.f32 %v367, %v758
  %v811 = vmax.f32 %v387, %v778
  %v812 = vmax.f32 %v407, %v798
  %s813 = scalar_lea.vmem %s0, 2080
  %v814 = vld [vmem:[%s813] sm:$0xff]
  %v815 = vld [vmem:[%s813 + $0x8] sm:$0xff]
  %v816 = vld [vmem:[%s813 + $0x10] sm:$0xff]
  %v817 = vld [vmem:[%s813 + $0x18] sm:$0xff]
  %v818 = vld [vmem:[%s813 + $0x20] sm:$0xff]
  %v819 = vld [vmem:[%s813 + $0x28] sm:$0xff]
  %v820 = vld [vmem:[%s813 + $0x30] sm:$0xff]
  %v821 = vld [vmem:[%s813 + $0x38] sm:$0xff]
  %v822 = vld [vmem:[%s813 + $0x40] sm:$0xff]
  %v823 = vld [vmem:[%s813 + $0x48] sm:$0xff]
  %v824 = vld [vmem:[%s813 + $0x50] sm:$0xff]
  %v825 = vld [vmem:[%s813 + $0x58] sm:$0xff]
  %v826 = vld [vmem:[%s813 + $0x60] sm:$0xff]
  %v827 = vld [vmem:[%s813 + $0x68] sm:$0xff]
  %v828 = vld [vmem:[%s813 + $0x70] sm:$0xff]
  %v829 = vld [vmem:[%s813 + $0x78] sm:$0xff]
  %v830 = vld [vmem:[%s813 + $0x80] sm:$0xff]
  %v831 = vld [vmem:[%s813 + $0x88] sm:$0xff]
  %v832 = vld [vmem:[%s813 + $0x90] sm:$0xff]
  %v833 = vld [vmem:[%s813 + $0x98] sm:$0xff]
  %v834 = vld [vmem:[%s813 + $0xa0] sm:$0xff]
  %v835 = vld [vmem:[%s813 + $0xa8] sm:$0xff]
  %v836 = vld [vmem:[%s813 + $0xb0] sm:$0xff]
  %v837 = vld [vmem:[%s813 + $0xb8] sm:$0xff]
  %v838 = vld [vmem:[%s813 + $0xc0] sm:$0xff]
  %v839 = vld [vmem:[%s813 + $0xc8] sm:$0xff]
  %v840 = vld [vmem:[%s813 + $0xd0] sm:$0xff]
  %v841 = vld [vmem:[%s813 + $0xd8] sm:$0xff]
  %v842 = vld [vmem:[%s813 + $0xe0] sm:$0xff]
  %v843 = vld [vmem:[%s813 + $0xe8] sm:$0xff]
  %v844 = vld [vmem:[%s813 + $0xf0] sm:$0xff]
  %v845 = vld [vmem:[%s813 + $0xf8] sm:$0xff]
  %v846 = vld [vmem:[%s813 + $0x100] sm:$0xff]
  %v847 = vld [vmem:[%s813 + $0x108] sm:$0xff]
  %v848 = vld [vmem:[%s813 + $0x110] sm:$0xff]
  %v849 = vld [vmem:[%s813 + $0x118] sm:$0xff]
  %v850 = vld [vmem:[%s813 + $0x120] sm:$0xff]
  %v851 = vld [vmem:[%s813 + $0x128] sm:$0xff]
  %v852 = vld [vmem:[%s813 + $0x130] sm:$0xff]
  %v853 = vld [vmem:[%s813 + $0x138] sm:$0xff]
  %v854 = vld [vmem:[%s813 + $0x140] sm:$0xff]
  %v855 = vld [vmem:[%s813 + $0x148] sm:$0xff]
  %v856 = vld [vmem:[%s813 + $0x150] sm:$0xff]
  %v857 = vld [vmem:[%s813 + $0x158] sm:$0xff]
  %v858 = vld [vmem:[%s813 + $0x160] sm:$0xff]
  %v859 = vld [vmem:[%s813 + $0x168] sm:$0xff]
  %v860 = vld [vmem:[%s813 + $0x170] sm:$0xff]
  %v861 = vld [vmem:[%s813 + $0x178] sm:$0xff]
  %v862 = vld [vmem:[%s813 + $0x180] sm:$0xff]
  %v863 = vld [vmem:[%s813 + $0x188] sm:$0xff]
  %v864 = vld [vmem:[%s813 + $0x190] sm:$0xff]
  %v865 = vld [vmem:[%s813 + $0x198] sm:$0xff]
  %v866 = vld [vmem:[%s813 + $0x1a0] sm:$0xff]
  %v867 = vld [vmem:[%s813 + $0x1a8] sm:$0xff]
  %v868 = vld [vmem:[%s813 + $0x1b0] sm:$0xff]
  %v869 = vld [vmem:[%s813 + $0x1b8] sm:$0xff]
  %v870 = vld [vmem:[%s813 + $0x1c0] sm:$0xff]
  %v871 = vld [vmem:[%s813 + $0x1c8] sm:$0xff]
  %v872 = vld [vmem:[%s813 + $0x1d0] sm:$0xff]
  %v873 = vld [vmem:[%s813 + $0x1d8] sm:$0xff]
  %v874 = vld [vmem:[%s813 + $0x1e0] sm:$0xff]
  %v875 = vld [vmem:[%s813 + $0x1e8] sm:$0xff]
  %v876 = vld [vmem:[%s813 + $0x1f0] sm:$0xff]
  %v877 = vld [vmem:[%s813 + $0x1f8] sm:$0xff]
  %v878 = vld [vmem:[%s813 + $0x200] sm:$0xff]
  %v879 = vld [vmem:[%s813 + $0x208] sm:$0xff]
  %v880 = vld [vmem:[%s813 + $0x210] sm:$0xff]
  %v881 = vld [vmem:[%s813 + $0x218] sm:$0xff]
  %v882 = vld [vmem:[%s813 + $0x220] sm:$0xff]
  %v883 = vld [vmem:[%s813 + $0x228] sm:$0xff]
  %v884 = vld [vmem:[%s813 + $0x230] sm:$0xff]
  %v885 = vld [vmem:[%s813 + $0x238] sm:$0xff]
  %v886 = vld [vmem:[%s813 + $0x240] sm:$0xff]
  %v887 = vld [vmem:[%s813 + $0x248] sm:$0xff]
  %v888 = vld [vmem:[%s813 + $0x250] sm:$0xff]
  %v889 = vld [vmem:[%s813 + $0x258] sm:$0xff]
  %v890 = vld [vmem:[%s813 + $0x260] sm:$0xff]
  %v891 = vld [vmem:[%s813 + $0x268] sm:$0xff]
  %v892 = vld [vmem:[%s813 + $0x270] sm:$0xff]
  %v893 = vld [vmem:[%s813 + $0x278] sm:$0xff]
  %v894 = vld [vmem:[%s813 + $0x280] sm:$0xff]
  %v895 = vld [vmem:[%s813 + $0x288] sm:$0xff]
  %v896 = vld [vmem:[%s813 + $0x290] sm:$0xff]
  %v897 = vld [vmem:[%s813 + $0x298] sm:$0xff]
  %v898 = vld [vmem:[%s813 + $0x2a0] sm:$0xff]
  %v899 = vld [vmem:[%s813 + $0x2a8] sm:$0xff]
  %v900 = vld [vmem:[%s813 + $0x2b0] sm:$0xff]
  %v901 = vld [vmem:[%s813 + $0x2b8] sm:$0xff]
  %v902 = vld [vmem:[%s813 + $0x2c0] sm:$0xff]
  %v903 = vld [vmem:[%s813 + $0x2c8] sm:$0xff]
  %v904 = vld [vmem:[%s813 + $0x2d0] sm:$0xff]
  %v905 = vld [vmem:[%s813 + $0x2d8] sm:$0xff]
  %v906 = vld [vmem:[%s813 + $0x2e0] sm:$0xff]
  %v907 = vld [vmem:[%s813 + $0x2e8] sm:$0xff]
  %v908 = vld [vmem:[%s813 + $0x2f0] sm:$0xff]
  %v909 = vld [vmem:[%s813 + $0x2f8] sm:$0xff]
  %v910 = vld [vmem:[%s813 + $0x300] sm:$0xff]
  %v911 = vld [vmem:[%s813 + $0x308] sm:$0xff]
  %v912 = vld [vmem:[%s813 + $0x310] sm:$0xff]
  %v913 = vld [vmem:[%s813 + $0x318] sm:$0xff]
  %v914 = vld [vmem:[%s813 + $0x320] sm:$0xff]
  %v915 = vld [vmem:[%s813 + $0x328] sm:$0xff]
  %v916 = vld [vmem:[%s813 + $0x330] sm:$0xff]
  %v917 = vld [vmem:[%s813 + $0x338] sm:$0xff]
  %v918 = vld [vmem:[%s813 + $0x340] sm:$0xff]
  %v919 = vld [vmem:[%s813 + $0x348] sm:$0xff]
  %v920 = vld [vmem:[%s813 + $0x350] sm:$0xff]
  %v921 = vld [vmem:[%s813 + $0x358] sm:$0xff]
  %v922 = vld [vmem:[%s813 + $0x360] sm:$0xff]
  %v923 = vld [vmem:[%s813 + $0x368] sm:$0xff]
  %v924 = vld [vmem:[%s813 + $0x370] sm:$0xff]
  %v925 = vld [vmem:[%s813 + $0x378] sm:$0xff]
  %v926 = vld [vmem:[%s813 + $0x380] sm:$0xff]
  %v927 = vld [vmem:[%s813 + $0x388] sm:$0xff]
  %v928 = vld [vmem:[%s813 + $0x390] sm:$0xff]
  %v929 = vld [vmem:[%s813 + $0x398] sm:$0xff]
  %v930 = vld [vmem:[%s813 + $0x3a0] sm:$0xff]
  %v931 = vld [vmem:[%s813 + $0x3a8] sm:$0xff]
  %v932 = vld [vmem:[%s813 + $0x3b0] sm:$0xff]
  %v933 = vld [vmem:[%s813 + $0x3b8] sm:$0xff]
  %v934 = vld [vmem:[%s813 + $0x3c0] sm:$0xff]
  %v935 = vld [vmem:[%s813 + $0x3c8] sm:$0xff]
  %v936 = vld [vmem:[%s813 + $0x3d0] sm:$0xff]
  %v937 = vld [vmem:[%s813 + $0x3d8] sm:$0xff]
  %v938 = vld [vmem:[%s813 + $0x3e0] sm:$0xff]
  %v939 = vld [vmem:[%s813 + $0x3e8] sm:$0xff]
  %v940 = vld [vmem:[%s813 + $0x3f0] sm:$0xff]
  %v941 = vld [vmem:[%s813 + $0x3f8] sm:$0xff]
  %v942 = vld [vmem:[%s813 + $0x400] sm:$0xff]
  %v943 = vld [vmem:[%s813 + $0x408] sm:$0xff]
  %944 = vmatpush.msra.mxu0 0.0
  %945 = vmatpush.msra.mxu0 0.0
  %946 = vmatpush.msra.mxu0 0.0
  %947 = vmatpush.msra.mxu0 0.0
  %948 = vmatpush.msra.mxu0 0.0
  %949 = vmatpush.msra.mxu0 0.0
  %950 = vmatpush.msra.mxu0 %v931
  %951 = vmatpush.msra.mxu0 %v918
  %952 = vmatpush.msra.mxu0 %v905
  %953 = vmatpush.msra.mxu0 %v892
  %954 = vmatpush.msra.mxu0 %v879
  %955 = vmatpush.msra.mxu0 %v866
  %956 = vmatpush.msra.mxu0 %v853
  %957 = vmatpush.msra.mxu0 %v840
  %958 = vmatpush.msra.mxu0 %v827
  %959 = vmatpush.msra.mxu0 %v814
  %960 = vmatmul.f32.gmra.mxu0 %v147
  %v961 = vpop.f32.mrf.mxu0
  %v962 = vadd.f32 0.0, %v961
  %963 = vdwg.mxu0
  %964 = vmatpush.msra.mxu0 0.0
  %965 = vmatpush.msra.mxu0 0.0
  %966 = vmatpush.msra.mxu0 0.0
  %967 = vmatpush.msra.mxu0 0.0
  %968 = vmatpush.msra.mxu0 0.0
  %969 = vmatpush.msra.mxu0 0.0
  %970 = vmatpush.msra.mxu0 %v932
  %971 = vmatpush.msra.mxu0 %v919
  %972 = vmatpush.msra.mxu0 %v906
  %973 = vmatpush.msra.mxu0 %v893
  %974 = vmatpush.msra.mxu0 %v880
  %975 = vmatpush.msra.mxu0 %v867
  %976 = vmatpush.msra.mxu0 %v854
  %977 = vmatpush.msra.mxu0 %v841
  %978 = vmatpush.msra.mxu0 %v828
  %979 = vmatpush.msra.mxu0 %v815
  %980 = vmatmul.f32.gmra.mxu0 %v147
  %v981 = vpop.f32.mrf.mxu0
  %v982 = vadd.f32 0.0, %v981
  %983 = vdwg.mxu0
  %984 = vmatpush.msra.mxu0 0.0
  %985 = vmatpush.msra.mxu0 0.0
  %986 = vmatpush.msra.mxu0 0.0
  %987 = vmatpush.msra.mxu0 0.0
  %988 = vmatpush.msra.mxu0 0.0
  %989 = vmatpush.msra.mxu0 0.0
  %990 = vmatpush.msra.mxu0 %v933
  %991 = vmatpush.msra.mxu0 %v920
  %992 = vmatpush.msra.mxu0 %v907
  %993 = vmatpush.msra.mxu0 %v894
  %994 = vmatpush.msra.mxu0 %v881
  %995 = vmatpush.msra.mxu0 %v868
  %996 = vmatpush.msra.mxu0 %v855
  %997 = vmatpush.msra.mxu0 %v842
  %998 = vmatpush.msra.mxu0 %v829
  %999 = vmatpush.msra.mxu0 %v816
  %1000 = vmatmul.f32.gmra.mxu0 %v147
  %v1001 = vpop.f32.mrf.mxu0
  %v1002 = vadd.f32 0.0, %v1001
  %1003 = vdwg.mxu0
  %1004 = vmatpush.msra.mxu0 0.0
  %1005 = vmatpush.msra.mxu0 0.0
  %1006 = vmatpush.msra.mxu0 0.0
  %1007 = vmatpush.msra.mxu0 0.0
  %1008 = vmatpush.msra.mxu0 0.0
  %1009 = vmatpush.msra.mxu0 0.0
  %1010 = vmatpush.msra.mxu0 %v934
  %1011 = vmatpush.msra.mxu0 %v921
  %1012 = vmatpush.msra.mxu0 %v908
  %1013 = vmatpush.msra.mxu0 %v895
  %1014 = vmatpush.msra.mxu0 %v882
  %1015 = vmatpush.msra.mxu0 %v869
  %1016 = vmatpush.msra.mxu0 %v856
  %1017 = vmatpush.msra.mxu0 %v843
  %1018 = vmatpush.msra.mxu0 %v830
  %1019 = vmatpush.msra.mxu0 %v817
  %1020 = vmatmul.f32.gmra.mxu0 %v147
  %v1021 = vpop.f32.mrf.mxu0
  %v1022 = vadd.f32 0.0, %v1021
  %1023 = vdwg.mxu0
  %1024 = vmatpush.msra.mxu0 0.0
  %1025 = vmatpush.msra.mxu0 0.0
  %1026 = vmatpush.msra.mxu0 0.0
  %1027 = vmatpush.msra.mxu0 0.0
  %1028 = vmatpush.msra.mxu0 0.0
  %1029 = vmatpush.msra.mxu0 0.0
  %1030 = vmatpush.msra.mxu0 %v935
  %1031 = vmatpush.msra.mxu0 %v922
  %1032 = vmatpush.msra.mxu0 %v909
  %1033 = vmatpush.msra.mxu0 %v896
  %1034 = vmatpush.msra.mxu0 %v883
  %1035 = vmatpush.msra.mxu0 %v870
  %1036 = vmatpush.msra.mxu0 %v857
  %1037 = vmatpush.msra.mxu0 %v844
  %1038 = vmatpush.msra.mxu0 %v831
  %1039 = vmatpush.msra.mxu0 %v818
  %1040 = vmatmul.f32.gmra.mxu0 %v147
  %v1041 = vpop.f32.mrf.mxu0
  %v1042 = vadd.f32 0.0, %v1041
  %1043 = vdwg.mxu0
  %1044 = vmatpush.msra.mxu0 0.0
  %1045 = vmatpush.msra.mxu0 0.0
  %1046 = vmatpush.msra.mxu0 0.0
  %1047 = vmatpush.msra.mxu0 0.0
  %1048 = vmatpush.msra.mxu0 0.0
  %1049 = vmatpush.msra.mxu0 0.0
  %1050 = vmatpush.msra.mxu0 %v936
  %1051 = vmatpush.msra.mxu0 %v923
  %1052 = vmatpush.msra.mxu0 %v910
  %1053 = vmatpush.msra.mxu0 %v897
  %1054 = vmatpush.msra.mxu0 %v884
  %1055 = vmatpush.msra.mxu0 %v871
  %1056 = vmatpush.msra.mxu0 %v858
  %1057 = vmatpush.msra.mxu0 %v845
  %1058 = vmatpush.msra.mxu0 %v832
  %1059 = vmatpush.msra.mxu0 %v819
  %1060 = vmatmul.f32.gmra.mxu0 %v147
  %v1061 = vpop.f32.mrf.mxu0
  %v1062 = vadd.f32 0.0, %v1061
  %1063 = vdwg.mxu0
  %1064 = vmatpush.msra.mxu0 0.0
  %1065 = vmatpush.msra.mxu0 0.0
  %1066 = vmatpush.msra.mxu0 0.0
  %1067 = vmatpush.msra.mxu0 0.0
  %1068 = vmatpush.msra.mxu0 0.0
  %1069 = vmatpush.msra.mxu0 0.0
  %1070 = vmatpush.msra.mxu0 %v937
  %1071 = vmatpush.msra.mxu0 %v924
  %1072 = vmatpush.msra.mxu0 %v911
  %1073 = vmatpush.msra.mxu0 %v898
  %1074 = vmatpush.msra.mxu0 %v885
  %1075 = vmatpush.msra.mxu0 %v872
  %1076 = vmatpush.msra.mxu0 %v859
  %1077 = vmatpush.msra.mxu0 %v846
  %1078 = vmatpush.msra.mxu0 %v833
  %1079 = vmatpush.msra.mxu0 %v820
  %1080 = vmatmul.f32.gmra.mxu0 %v147
  %v1081 = vpop.f32.mrf.mxu0
  %v1082 = vadd.f32 0.0, %v1081
  %1083 = vdwg.mxu0
  %1084 = vmatpush.msra.mxu0 0.0
  %1085 = vmatpush.msra.mxu0 0.0
  %1086 = vmatpush.msra.mxu0 0.0
  %1087 = vmatpush.msra.mxu0 0.0
  %1088 = vmatpush.msra.mxu0 0.0
  %1089 = vmatpush.msra.mxu0 0.0
  %1090 = vmatpush.msra.mxu0 %v938
  %1091 = vmatpush.msra.mxu0 %v925
  %1092 = vmatpush.msra.mxu0 %v912
  %1093 = vmatpush.msra.mxu0 %v899
  %1094 = vmatpush.msra.mxu0 %v886
  %1095 = vmatpush.msra.mxu0 %v873
  %1096 = vmatpush.msra.mxu0 %v860
  %1097 = vmatpush.msra.mxu0 %v847
  %1098 = vmatpush.msra.mxu0 %v834
  %1099 = vmatpush.msra.mxu0 %v821
  %1100 = vmatmul.f32.gmra.mxu0 %v147
  %v1101 = vpop.f32.mrf.mxu0
  %v1102 = vadd.f32 0.0, %v1101
  %1103 = vdwg.mxu0
  %1104 = vmatpush.msra.mxu0 0.0
  %1105 = vmatpush.msra.mxu0 0.0
  %1106 = vmatpush.msra.mxu0 0.0
  %1107 = vmatpush.msra.mxu0 0.0
  %1108 = vmatpush.msra.mxu0 0.0
  %1109 = vmatpush.msra.mxu0 0.0
  %1110 = vmatpush.msra.mxu0 %v939
  %1111 = vmatpush.msra.mxu0 %v926
  %1112 = vmatpush.msra.mxu0 %v913
  %1113 = vmatpush.msra.mxu0 %v900
  %1114 = vmatpush.msra.mxu0 %v887
  %1115 = vmatpush.msra.mxu0 %v874
  %1116 = vmatpush.msra.mxu0 %v861
  %1117 = vmatpush.msra.mxu0 %v848
  %1118 = vmatpush.msra.mxu0 %v835
  %1119 = vmatpush.msra.mxu0 %v822
  %1120 = vmatmul.f32.gmra.mxu0 %v147
  %v1121 = vpop.f32.mrf.mxu0
  %v1122 = vadd.f32 0.0, %v1121
  %1123 = vdwg.mxu0
  %1124 = vmatpush.msra.mxu0 0.0
  %1125 = vmatpush.msra.mxu0 0.0
  %1126 = vmatpush.msra.mxu0 0.0
  %1127 = vmatpush.msra.mxu0 0.0
  %1128 = vmatpush.msra.mxu0 0.0
  %1129 = vmatpush.msra.mxu0 0.0
  %1130 = vmatpush.msra.mxu0 %v940
  %1131 = vmatpush.msra.mxu0 %v927
  %1132 = vmatpush.msra.mxu0 %v914
  %1133 = vmatpush.msra.mxu0 %v901
  %1134 = vmatpush.msra.mxu0 %v888
  %1135 = vmatpush.msra.mxu0 %v875
  %1136 = vmatpush.msra.mxu0 %v862
  %1137 = vmatpush.msra.mxu0 %v849
  %1138 = vmatpush.msra.mxu0 %v836
  %1139 = vmatpush.msra.mxu0 %v823
  %1140 = vmatmul.f32.gmra.mxu0 %v147
  %v1141 = vpop.f32.mrf.mxu0
  %v1142 = vadd.f32 0.0, %v1141
  %1143 = vdwg.mxu0
  %1144 = vmatpush.msra.mxu0 0.0
  %1145 = vmatpush.msra.mxu0 0.0
  %1146 = vmatpush.msra.mxu0 0.0
  %1147 = vmatpush.msra.mxu0 0.0
  %1148 = vmatpush.msra.mxu0 0.0
  %1149 = vmatpush.msra.mxu0 0.0
  %1150 = vmatpush.msra.mxu0 %v941
  %1151 = vmatpush.msra.mxu0 %v928
  %1152 = vmatpush.msra.mxu0 %v915
  %1153 = vmatpush.msra.mxu0 %v902
  %1154 = vmatpush.msra.mxu0 %v889
  %1155 = vmatpush.msra.mxu0 %v876
  %1156 = vmatpush.msra.mxu0 %v863
  %1157 = vmatpush.msra.mxu0 %v850
  %1158 = vmatpush.msra.mxu0 %v837
  %1159 = vmatpush.msra.mxu0 %v824
  %1160 = vmatmul.f32.gmra.mxu0 %v147
  %v1161 = vpop.f32.mrf.mxu0
  %v1162 = vadd.f32 0.0, %v1161
  %1163 = vdwg.mxu0
  %1164 = vmatpush.msra.mxu0 0.0
  %1165 = vmatpush.msra.mxu0 0.0
  %1166 = vmatpush.msra.mxu0 0.0
  %1167 = vmatpush.msra.mxu0 0.0
  %1168 = vmatpush.msra.mxu0 0.0
  %1169 = vmatpush.msra.mxu0 0.0
  %1170 = vmatpush.msra.mxu0 %v942
  %1171 = vmatpush.msra.mxu0 %v929
  %1172 = vmatpush.msra.mxu0 %v916
  %1173 = vmatpush.msra.mxu0 %v903
  %1174 = vmatpush.msra.mxu0 %v890
  %1175 = vmatpush.msra.mxu0 %v877
  %1176 = vmatpush.msra.mxu0 %v864
  %1177 = vmatpush.msra.mxu0 %v851
  %1178 = vmatpush.msra.mxu0 %v838
  %1179 = vmatpush.msra.mxu0 %v825
  %1180 = vmatmul.f32.gmra.mxu0 %v147
  %v1181 = vpop.f32.mrf.mxu0
  %v1182 = vadd.f32 0.0, %v1181
  %1183 = vdwg.mxu0
  %1184 = vmatpush.msra.mxu0 0.0
  %1185 = vmatpush.msra.mxu0 0.0
  %1186 = vmatpush.msra.mxu0 0.0
  %1187 = vmatpush.msra.mxu0 0.0
  %1188 = vmatpush.msra.mxu0 0.0
  %1189 = vmatpush.msra.mxu0 0.0
  %1190 = vmatpush.msra.mxu0 %v943
  %1191 = vmatpush.msra.mxu0 %v930
  %1192 = vmatpush.msra.mxu0 %v917
  %1193 = vmatpush.msra.mxu0 %v904
  %1194 = vmatpush.msra.mxu0 %v891
  %1195 = vmatpush.msra.mxu0 %v878
  %1196 = vmatpush.msra.mxu0 %v865
  %1197 = vmatpush.msra.mxu0 %v852
  %1198 = vmatpush.msra.mxu0 %v839
  %1199 = vmatpush.msra.mxu0 %v826
  %1200 = vmatmul.f32.gmra.mxu0 %v147
  %v1201 = vpop.f32.mrf.mxu0
  %v1202 = vadd.f32 0.0, %v1201
  %1203 = vdwg.mxu0
  %v1204 = vmax.f32 %v800, %v962
  %v1205 = vmax.f32 %v801, %v982
  %v1206 = vmax.f32 %v802, %v1002
  %v1207 = vmax.f32 %v803, %v1022
  %v1208 = vmax.f32 %v804, %v1042
  %v1209 = vmax.f32 %v805, %v1062
  %v1210 = vmax.f32 %v806, %v1082
  %v1211 = vmax.f32 %v807, %v1102
  %v1212 = vmax.f32 %v808, %v1122
  %v1213 = vmax.f32 %v809, %v1142
  %v1214 = vmax.f32 %v810, %v1162
  %v1215 = vmax.f32 %v811, %v1182
  %v1216 = vmax.f32 %v812, %v1202
  %s1217 = scalar_lea.vmem %s0, 3120
  %v1218 = vld [vmem:[%s1217] sm:$0xff]
  %v1219 = vld [vmem:[%s1217 + $0x8] sm:$0xff]
  %v1220 = vld [vmem:[%s1217 + $0x10] sm:$0xff]
  %v1221 = vld [vmem:[%s1217 + $0x18] sm:$0xff]
  %v1222 = vld [vmem:[%s1217 + $0x20] sm:$0xff]
  %v1223 = vld [vmem:[%s1217 + $0x28] sm:$0xff]
  %v1224 = vld [vmem:[%s1217 + $0x30] sm:$0xff]
  %v1225 = vld [vmem:[%s1217 + $0x38] sm:$0xff]
  %v1226 = vld [vmem:[%s1217 + $0x40] sm:$0xff]
  %v1227 = vld [vmem:[%s1217 + $0x48] sm:$0xff]
  %v1228 = vld [vmem:[%s1217 + $0x50] sm:$0xff]
  %v1229 = vld [vmem:[%s1217 + $0x58] sm:$0xff]
  %v1230 = vld [vmem:[%s1217 + $0x60] sm:$0xff]
  %v1231 = vld [vmem:[%s1217 + $0x68] sm:$0xff]
  %v1232 = vld [vmem:[%s1217 + $0x70] sm:$0xff]
  %v1233 = vld [vmem:[%s1217 + $0x78] sm:$0xff]
  %v1234 = vld [vmem:[%s1217 + $0x80] sm:$0xff]
  %v1235 = vld [vmem:[%s1217 + $0x88] sm:$0xff]
  %v1236 = vld [vmem:[%s1217 + $0x90] sm:$0xff]
  %v1237 = vld [vmem:[%s1217 + $0x98] sm:$0xff]
  %v1238 = vld [vmem:[%s1217 + $0xa0] sm:$0xff]
  %v1239 = vld [vmem:[%s1217 + $0xa8] sm:$0xff]
  %v1240 = vld [vmem:[%s1217 + $0xb0] sm:$0xff]
  %v1241 = vld [vmem:[%s1217 + $0xb8] sm:$0xff]
  %v1242 = vld [vmem:[%s1217 + $0xc0] sm:$0xff]
  %v1243 = vld [vmem:[%s1217 + $0xc8] sm:$0xff]
  %v1244 = vld [vmem:[%s1217 + $0xd0] sm:$0xff]
  %v1245 = vld [vmem:[%s1217 + $0xd8] sm:$0xff]
  %v1246 = vld [vmem:[%s1217 + $0xe0] sm:$0xff]
  %v1247 = vld [vmem:[%s1217 + $0xe8] sm:$0xff]
  %v1248 = vld [vmem:[%s1217 + $0xf0] sm:$0xff]
  %v1249 = vld [vmem:[%s1217 + $0xf8] sm:$0xff]
  %v1250 = vld [vmem:[%s1217 + $0x100] sm:$0xff]
  %v1251 = vld [vmem:[%s1217 + $0x108] sm:$0xff]
  %v1252 = vld [vmem:[%s1217 + $0x110] sm:$0xff]
  %v1253 = vld [vmem:[%s1217 + $0x118] sm:$0xff]
  %v1254 = vld [vmem:[%s1217 + $0x120] sm:$0xff]
  %v1255 = vld [vmem:[%s1217 + $0x128] sm:$0xff]
  %v1256 = vld [vmem:[%s1217 + $0x130] sm:$0xff]
  %v1257 = vld [vmem:[%s1217 + $0x138] sm:$0xff]
  %v1258 = vld [vmem:[%s1217 + $0x140] sm:$0xff]
  %v1259 = vld [vmem:[%s1217 + $0x148] sm:$0xff]
  %v1260 = vld [vmem:[%s1217 + $0x150] sm:$0xff]
  %v1261 = vld [vmem:[%s1217 + $0x158] sm:$0xff]
  %v1262 = vld [vmem:[%s1217 + $0x160] sm:$0xff]
  %v1263 = vld [vmem:[%s1217 + $0x168] sm:$0xff]
  %v1264 = vld [vmem:[%s1217 + $0x170] sm:$0xff]
  %v1265 = vld [vmem:[%s1217 + $0x178] sm:$0xff]
  %v1266 = vld [vmem:[%s1217 + $0x180] sm:$0xff]
  %v1267 = vld [vmem:[%s1217 + $0x188] sm:$0xff]
  %v1268 = vld [vmem:[%s1217 + $0x190] sm:$0xff]
  %v1269 = vld [vmem:[%s1217 + $0x198] sm:$0xff]
  %v1270 = vld [vmem:[%s1217 + $0x1a0] sm:$0xff]
  %v1271 = vld [vmem:[%s1217 + $0x1a8] sm:$0xff]
  %v1272 = vld [vmem:[%s1217 + $0x1b0] sm:$0xff]
  %v1273 = vld [vmem:[%s1217 + $0x1b8] sm:$0xff]
  %v1274 = vld [vmem:[%s1217 + $0x1c0] sm:$0xff]
  %v1275 = vld [vmem:[%s1217 + $0x1c8] sm:$0xff]
  %v1276 = vld [vmem:[%s1217 + $0x1d0] sm:$0xff]
  %v1277 = vld [vmem:[%s1217 + $0x1d8] sm:$0xff]
  %v1278 = vld [vmem:[%s1217 + $0x1e0] sm:$0xff]
  %v1279 = vld [vmem:[%s1217 + $0x1e8] sm:$0xff]
  %v1280 = vld [vmem:[%s1217 + $0x1f0] sm:$0xff]
  %v1281 = vld [vmem:[%s1217 + $0x1f8] sm:$0xff]
  %v1282 = vld [vmem:[%s1217 + $0x200] sm:$0xff]
  %v1283 = vld [vmem:[%s1217 + $0x208] sm:$0xff]
  %v1284 = vld [vmem:[%s1217 + $0x210] sm:$0xff]
  %v1285 = vld [vmem:[%s1217 + $0x218] sm:$0xff]
  %v1286 = vld [vmem:[%s1217 + $0x220] sm:$0xff]
  %v1287 = vld [vmem:[%s1217 + $0x228] sm:$0xff]
  %v1288 = vld [vmem:[%s1217 + $0x230] sm:$0xff]
  %v1289 = vld [vmem:[%s1217 + $0x238] sm:$0xff]
  %v1290 = vld [vmem:[%s1217 + $0x240] sm:$0xff]
  %v1291 = vld [vmem:[%s1217 + $0x248] sm:$0xff]
  %v1292 = vld [vmem:[%s1217 + $0x250] sm:$0xff]
  %v1293 = vld [vmem:[%s1217 + $0x258] sm:$0xff]
  %v1294 = vld [vmem:[%s1217 + $0x260] sm:$0xff]
  %v1295 = vld [vmem:[%s1217 + $0x268] sm:$0xff]
  %v1296 = vld [vmem:[%s1217 + $0x270] sm:$0xff]
  %v1297 = vld [vmem:[%s1217 + $0x278] sm:$0xff]
  %v1298 = vld [vmem:[%s1217 + $0x280] sm:$0xff]
  %v1299 = vld [vmem:[%s1217 + $0x288] sm:$0xff]
  %v1300 = vld [vmem:[%s1217 + $0x290] sm:$0xff]
  %v1301 = vld [vmem:[%s1217 + $0x298] sm:$0xff]
  %v1302 = vld [vmem:[%s1217 + $0x2a0] sm:$0xff]
  %v1303 = vld [vmem:[%s1217 + $0x2a8] sm:$0xff]
  %v1304 = vld [vmem:[%s1217 + $0x2b0] sm:$0xff]
  %v1305 = vld [vmem:[%s1217 + $0x2b8] sm:$0xff]
  %v1306 = vld [vmem:[%s1217 + $0x2c0] sm:$0xff]
  %v1307 = vld [vmem:[%s1217 + $0x2c8] sm:$0xff]
  %v1308 = vld [vmem:[%s1217 + $0x2d0] sm:$0xff]
  %v1309 = vld [vmem:[%s1217 + $0x2d8] sm:$0xff]
  %v1310 = vld [vmem:[%s1217 + $0x2e0] sm:$0xff]
  %v1311 = vld [vmem:[%s1217 + $0x2e8] sm:$0xff]
  %v1312 = vld [vmem:[%s1217 + $0x2f0] sm:$0xff]
  %v1313 = vld [vmem:[%s1217 + $0x2f8] sm:$0xff]
  %v1314 = vld [vmem:[%s1217 + $0x300] sm:$0xff]
  %v1315 = vld [vmem:[%s1217 + $0x308] sm:$0xff]
  %v1316 = vld [vmem:[%s1217 + $0x310] sm:$0xff]
  %v1317 = vld [vmem:[%s1217 + $0x318] sm:$0xff]
  %v1318 = vld [vmem:[%s1217 + $0x320] sm:$0xff]
  %v1319 = vld [vmem:[%s1217 + $0x328] sm:$0xff]
  %v1320 = vld [vmem:[%s1217 + $0x330] sm:$0xff]
  %v1321 = vld [vmem:[%s1217 + $0x338] sm:$0xff]
  %v1322 = vld [vmem:[%s1217 + $0x340] sm:$0xff]
  %v1323 = vld [vmem:[%s1217 + $0x348] sm:$0xff]
  %v1324 = vld [vmem:[%s1217 + $0x350] sm:$0xff]
  %v1325 = vld [vmem:[%s1217 + $0x358] sm:$0xff]
  %v1326 = vld [vmem:[%s1217 + $0x360] sm:$0xff]
  %v1327 = vld [vmem:[%s1217 + $0x368] sm:$0xff]
  %v1328 = vld [vmem:[%s1217 + $0x370] sm:$0xff]
  %v1329 = vld [vmem:[%s1217 + $0x378] sm:$0xff]
  %v1330 = vld [vmem:[%s1217 + $0x380] sm:$0xff]
  %v1331 = vld [vmem:[%s1217 + $0x388] sm:$0xff]
  %v1332 = vld [vmem:[%s1217 + $0x390] sm:$0xff]
  %v1333 = vld [vmem:[%s1217 + $0x398] sm:$0xff]
  %v1334 = vld [vmem:[%s1217 + $0x3a0] sm:$0xff]
  %v1335 = vld [vmem:[%s1217 + $0x3a8] sm:$0xff]
  %v1336 = vld [vmem:[%s1217 + $0x3b0] sm:$0xff]
  %v1337 = vld [vmem:[%s1217 + $0x3b8] sm:$0xff]
  %v1338 = vld [vmem:[%s1217 + $0x3c0] sm:$0xff]
  %v1339 = vld [vmem:[%s1217 + $0x3c8] sm:$0xff]
  %v1340 = vld [vmem:[%s1217 + $0x3d0] sm:$0xff]
  %v1341 = vld [vmem:[%s1217 + $0x3d8] sm:$0xff]
  %v1342 = vld [vmem:[%s1217 + $0x3e0] sm:$0xff]
  %v1343 = vld [vmem:[%s1217 + $0x3e8] sm:$0xff]
  %v1344 = vld [vmem:[%s1217 + $0x3f0] sm:$0xff]
  %v1345 = vld [vmem:[%s1217 + $0x3f8] sm:$0xff]
  %v1346 = vld [vmem:[%s1217 + $0x400] sm:$0xff]
  %v1347 = vld [vmem:[%s1217 + $0x408] sm:$0xff]
  %1348 = vmatpush.msra.mxu0 0.0
  %1349 = vmatpush.msra.mxu0 0.0
  %1350 = vmatpush.msra.mxu0 0.0
  %1351 = vmatpush.msra.mxu0 0.0
  %1352 = vmatpush.msra.mxu0 0.0
  %1353 = vmatpush.msra.mxu0 0.0
  %1354 = vmatpush.msra.mxu0 %v1335
  %1355 = vmatpush.msra.mxu0 %v1322
  %1356 = vmatpush.msra.mxu0 %v1309
  %1357 = vmatpush.msra.mxu0 %v1296
  %1358 = vmatpush.msra.mxu0 %v1283
  %1359 = vmatpush.msra.mxu0 %v1270
  %1360 = vmatpush.msra.mxu0 %v1257
  %1361 = vmatpush.msra.mxu0 %v1244
  %1362 = vmatpush.msra.mxu0 %v1231
  %1363 = vmatpush.msra.mxu0 %v1218
  %1364 = vmatmul.f32.gmra.mxu0 %v147
  %v1365 = vpop.f32.mrf.mxu0
  %v1366 = vadd.f32 0.0, %v1365
  %1367 = vdwg.mxu0
  %1368 = vmatpush.msra.mxu0 0.0
  %1369 = vmatpush.msra.mxu0 0.0
  %1370 = vmatpush.msra.mxu0 0.0
  %1371 = vmatpush.msra.mxu0 0.0
  %1372 = vmatpush.msra.mxu0 0.0
  %1373 = vmatpush.msra.mxu0 0.0
  %1374 = vmatpush.msra.mxu0 %v1336
  %1375 = vmatpush.msra.mxu0 %v1323
  %1376 = vmatpush.msra.mxu0 %v1310
  %1377 = vmatpush.msra.mxu0 %v1297
  %1378 = vmatpush.msra.mxu0 %v1284
  %1379 = vmatpush.msra.mxu0 %v1271
  %1380 = vmatpush.msra.mxu0 %v1258
  %1381 = vmatpush.msra.mxu0 %v1245
  %1382 = vmatpush.msra.mxu0 %v1232
  %1383 = vmatpush.msra.mxu0 %v1219
  %1384 = vmatmul.f32.gmra.mxu0 %v147
  %v1385 = vpop.f32.mrf.mxu0
  %v1386 = vadd.f32 0.0, %v1385
  %1387 = vdwg.mxu0
  %1388 = vmatpush.msra.mxu0 0.0
  %1389 = vmatpush.msra.mxu0 0.0
  %1390 = vmatpush.msra.mxu0 0.0
  %1391 = vmatpush.msra.mxu0 0.0
  %1392 = vmatpush.msra.mxu0 0.0
  %1393 = vmatpush.msra.mxu0 0.0
  %1394 = vmatpush.msra.mxu0 %v1337
  %1395 = vmatpush.msra.mxu0 %v1324
  %1396 = vmatpush.msra.mxu0 %v1311
  %1397 = vmatpush.msra.mxu0 %v1298
  %1398 = vmatpush.msra.mxu0 %v1285
  %1399 = vmatpush.msra.mxu0 %v1272
  %1400 = vmatpush.msra.mxu0 %v1259
  %1401 = vmatpush.msra.mxu0 %v1246
  %1402 = vmatpush.msra.mxu0 %v1233
  %1403 = vmatpush.msra.mxu0 %v1220
  %1404 = vmatmul.f32.gmra.mxu0 %v147
  %v1405 = vpop.f32.mrf.mxu0
  %v1406 = vadd.f32 0.0, %v1405
  %1407 = vdwg.mxu0
  %1408 = vmatpush.msra.mxu0 0.0
  %1409 = vmatpush.msra.mxu0 0.0
  %1410 = vmatpush.msra.mxu0 0.0
  %1411 = vmatpush.msra.mxu0 0.0
  %1412 = vmatpush.msra.mxu0 0.0
  %1413 = vmatpush.msra.mxu0 0.0
  %1414 = vmatpush.msra.mxu0 %v1338
  %1415 = vmatpush.msra.mxu0 %v1325
  %1416 = vmatpush.msra.mxu0 %v1312
  %1417 = vmatpush.msra.mxu0 %v1299
  %1418 = vmatpush.msra.mxu0 %v1286
  %1419 = vmatpush.msra.mxu0 %v1273
  %1420 = vmatpush.msra.mxu0 %v1260
  %1421 = vmatpush.msra.mxu0 %v1247
  %1422 = vmatpush.msra.mxu0 %v1234
  %1423 = vmatpush.msra.mxu0 %v1221
  %1424 = vmatmul.f32.gmra.mxu0 %v147
  %v1425 = vpop.f32.mrf.mxu0
  %v1426 = vadd.f32 0.0, %v1425
  %1427 = vdwg.mxu0
  %1428 = vmatpush.msra.mxu0 0.0
  %1429 = vmatpush.msra.mxu0 0.0
  %1430 = vmatpush.msra.mxu0 0.0
  %1431 = vmatpush.msra.mxu0 0.0
  %1432 = vmatpush.msra.mxu0 0.0
  %1433 = vmatpush.msra.mxu0 0.0
  %1434 = vmatpush.msra.mxu0 %v1339
  %1435 = vmatpush.msra.mxu0 %v1326
  %1436 = vmatpush.msra.mxu0 %v1313
  %1437 = vmatpush.msra.mxu0 %v1300
  %1438 = vmatpush.msra.mxu0 %v1287
  %1439 = vmatpush.msra.mxu0 %v1274
  %1440 = vmatpush.msra.mxu0 %v1261
  %1441 = vmatpush.msra.mxu0 %v1248
  %1442 = vmatpush.msra.mxu0 %v1235
  %1443 = vmatpush.msra.mxu0 %v1222
  %1444 = vmatmul.f32.gmra.mxu0 %v147
  %v1445 = vpop.f32.mrf.mxu0
  %v1446 = vadd.f32 0.0, %v1445
  %1447 = vdwg.mxu0
  %1448 = vmatpush.msra.mxu0 0.0
  %1449 = vmatpush.msra.mxu0 0.0
  %1450 = vmatpush.msra.mxu0 0.0
  %1451 = vmatpush.msra.mxu0 0.0
  %1452 = vmatpush.msra.mxu0 0.0
  %1453 = vmatpush.msra.mxu0 0.0
  %1454 = vmatpush.msra.mxu0 %v1340
  %1455 = vmatpush.msra.mxu0 %v1327
  %1456 = vmatpush.msra.mxu0 %v1314
  %1457 = vmatpush.msra.mxu0 %v1301
  %1458 = vmatpush.msra.mxu0 %v1288
  %1459 = vmatpush.msra.mxu0 %v1275
  %1460 = vmatpush.msra.mxu0 %v1262
  %1461 = vmatpush.msra.mxu0 %v1249
  %1462 = vmatpush.msra.mxu0 %v1236
  %1463 = vmatpush.msra.mxu0 %v1223
  %1464 = vmatmul.f32.gmra.mxu0 %v147
  %v1465 = vpop.f32.mrf.mxu0
  %v1466 = vadd.f32 0.0, %v1465
  %1467 = vdwg.mxu0
  %1468 = vmatpush.msra.mxu0 0.0
  %1469 = vmatpush.msra.mxu0 0.0
  %1470 = vmatpush.msra.mxu0 0.0
  %1471 = vmatpush.msra.mxu0 0.0
  %1472 = vmatpush.msra.mxu0 0.0
  %1473 = vmatpush.msra.mxu0 0.0
  %1474 = vmatpush.msra.mxu0 %v1341
  %1475 = vmatpush.msra.mxu0 %v1328
  %1476 = vmatpush.msra.mxu0 %v1315
  %1477 = vmatpush.msra.mxu0 %v1302
  %1478 = vmatpush.msra.mxu0 %v1289
  %1479 = vmatpush.msra.mxu0 %v1276
  %1480 = vmatpush.msra.mxu0 %v1263
  %1481 = vmatpush.msra.mxu0 %v1250
  %1482 = vmatpush.msra.mxu0 %v1237
  %1483 = vmatpush.msra.mxu0 %v1224
  %1484 = vmatmul.f32.gmra.mxu0 %v147
  %v1485 = vpop.f32.mrf.mxu0
  %v1486 = vadd.f32 0.0, %v1485
  %1487 = vdwg.mxu0
  %1488 = vmatpush.msra.mxu0 0.0
  %1489 = vmatpush.msra.mxu0 0.0
  %1490 = vmatpush.msra.mxu0 0.0
  %1491 = vmatpush.msra.mxu0 0.0
  %1492 = vmatpush.msra.mxu0 0.0
  %1493 = vmatpush.msra.mxu0 0.0
  %1494 = vmatpush.msra.mxu0 %v1342
  %1495 = vmatpush.msra.mxu0 %v1329
  %1496 = vmatpush.msra.mxu0 %v1316
  %1497 = vmatpush.msra.mxu0 %v1303
  %1498 = vmatpush.msra.mxu0 %v1290
  %1499 = vmatpush.msra.mxu0 %v1277
  %1500 = vmatpush.msra.mxu0 %v1264
  %1501 = vmatpush.msra.mxu0 %v1251
  %1502 = vmatpush.msra.mxu0 %v1238
  %1503 = vmatpush.msra.mxu0 %v1225
  %1504 = vmatmul.f32.gmra.mxu0 %v147
  %v1505 = vpop.f32.mrf.mxu0
  %v1506 = vadd.f32 0.0, %v1505
  %1507 = vdwg.mxu0
  %1508 = vmatpush.msra.mxu0 0.0
  %1509 = vmatpush.msra.mxu0 0.0
  %1510 = vmatpush.msra.mxu0 0.0
  %1511 = vmatpush.msra.mxu0 0.0
  %1512 = vmatpush.msra.mxu0 0.0
  %1513 = vmatpush.msra.mxu0 0.0
  %1514 = vmatpush.msra.mxu0 %v1343
  %1515 = vmatpush.msra.mxu0 %v1330
  %1516 = vmatpush.msra.mxu0 %v1317
  %1517 = vmatpush.msra.mxu0 %v1304
  %1518 = vmatpush.msra.mxu0 %v1291
  %1519 = vmatpush.msra.mxu0 %v1278
  %1520 = vmatpush.msra.mxu0 %v1265
  %1521 = vmatpush.msra.mxu0 %v1252
  %1522 = vmatpush.msra.mxu0 %v1239
  %1523 = vmatpush.msra.mxu0 %v1226
  %1524 = vmatmul.f32.gmra.mxu0 %v147
  %v1525 = vpop.f32.mrf.mxu0
  %v1526 = vadd.f32 0.0, %v1525
  %1527 = vdwg.mxu0
  %1528 = vmatpush.msra.mxu0 0.0
  %1529 = vmatpush.msra.mxu0 0.0
  %1530 = vmatpush.msra.mxu0 0.0
  %1531 = vmatpush.msra.mxu0 0.0
  %1532 = vmatpush.msra.mxu0 0.0
  %1533 = vmatpush.msra.mxu0 0.0
  %1534 = vmatpush.msra.mxu0 %v1344
  %1535 = vmatpush.msra.mxu0 %v1331
  %1536 = vmatpush.msra.mxu0 %v1318
  %1537 = vmatpush.msra.mxu0 %v1305
  %1538 = vmatpush.msra.mxu0 %v1292
  %1539 = vmatpush.msra.mxu0 %v1279
  %1540 = vmatpush.msra.mxu0 %v1266
  %1541 = vmatpush.msra.mxu0 %v1253
  %1542 = vmatpush.msra.mxu0 %v1240
  %1543 = vmatpush.msra.mxu0 %v1227
  %1544 = vmatmul.f32.gmra.mxu0 %v147
  %v1545 = vpop.f32.mrf.mxu0
  %v1546 = vadd.f32 0.0, %v1545
  %1547 = vdwg.mxu0
  %1548 = vmatpush.msra.mxu0 0.0
  %1549 = vmatpush.msra.mxu0 0.0
  %1550 = vmatpush.msra.mxu0 0.0
  %1551 = vmatpush.msra.mxu0 0.0
  %1552 = vmatpush.msra.mxu0 0.0
  %1553 = vmatpush.msra.mxu0 0.0
  %1554 = vmatpush.msra.mxu0 %v1345
  %1555 = vmatpush.msra.mxu0 %v1332
  %1556 = vmatpush.msra.mxu0 %v1319
  %1557 = vmatpush.msra.mxu0 %v1306
  %1558 = vmatpush.msra.mxu0 %v1293
  %1559 = vmatpush.msra.mxu0 %v1280
  %1560 = vmatpush.msra.mxu0 %v1267
  %1561 = vmatpush.msra.mxu0 %v1254
  %1562 = vmatpush.msra.mxu0 %v1241
  %1563 = vmatpush.msra.mxu0 %v1228
  %1564 = vmatmul.f32.gmra.mxu0 %v147
  %v1565 = vpop.f32.mrf.mxu0
  %v1566 = vadd.f32 0.0, %v1565
  %1567 = vdwg.mxu0
  %1568 = vmatpush.msra.mxu0 0.0
  %1569 = vmatpush.msra.mxu0 0.0
  %1570 = vmatpush.msra.mxu0 0.0
  %1571 = vmatpush.msra.mxu0 0.0
  %1572 = vmatpush.msra.mxu0 0.0
  %1573 = vmatpush.msra.mxu0 0.0
  %1574 = vmatpush.msra.mxu0 %v1346
  %1575 = vmatpush.msra.mxu0 %v1333
  %1576 = vmatpush.msra.mxu0 %v1320
  %1577 = vmatpush.msra.mxu0 %v1307
  %1578 = vmatpush.msra.mxu0 %v1294
  %1579 = vmatpush.msra.mxu0 %v1281
  %1580 = vmatpush.msra.mxu0 %v1268
  %1581 = vmatpush.msra.mxu0 %v1255
  %1582 = vmatpush.msra.mxu0 %v1242
  %1583 = vmatpush.msra.mxu0 %v1229
  %1584 = vmatmul.f32.gmra.mxu0 %v147
  %v1585 = vpop.f32.mrf.mxu0
  %v1586 = vadd.f32 0.0, %v1585
  %1587 = vdwg.mxu0
  %1588 = vmatpush.msra.mxu0 0.0
  %1589 = vmatpush.msra.mxu0 0.0
  %1590 = vmatpush.msra.mxu0 0.0
  %1591 = vmatpush.msra.mxu0 0.0
  %1592 = vmatpush.msra.mxu0 0.0
  %1593 = vmatpush.msra.mxu0 0.0
  %1594 = vmatpush.msra.mxu0 %v1347
  %1595 = vmatpush.msra.mxu0 %v1334
  %1596 = vmatpush.msra.mxu0 %v1321
  %1597 = vmatpush.msra.mxu0 %v1308
  %1598 = vmatpush.msra.mxu0 %v1295
  %1599 = vmatpush.msra.mxu0 %v1282
  %1600 = vmatpush.msra.mxu0 %v1269
  %1601 = vmatpush.msra.mxu0 %v1256
  %1602 = vmatpush.msra.mxu0 %v1243
  %1603 = vmatpush.msra.mxu0 %v1230
  %1604 = vmatmul.f32.gmra.mxu0 %v147
  %v1605 = vpop.f32.mrf.mxu0
  %v1606 = vadd.f32 0.0, %v1605
  %1607 = vdwg.mxu0
  %v1608 = vmax.f32 %v1204, %v1366
  %v1609 = vmax.f32 %v1205, %v1386
  %v1610 = vmax.f32 %v1206, %v1406
  %v1611 = vmax.f32 %v1207, %v1426
  %v1612 = vmax.f32 %v1208, %v1446
  %v1613 = vmax.f32 %v1209, %v1466
  %v1614 = vmax.f32 %v1210, %v1486
  %v1615 = vmax.f32 %v1211, %v1506
  %v1616 = vmax.f32 %v1212, %v1526
  %v1617 = vmax.f32 %v1213, %v1546
  %v1618 = vmax.f32 %v1214, %v1566
  %v1619 = vmax.f32 %v1215, %v1586
  %v1620 = vmax.f32 %v1216, %v1606
  %v1621 = vld [vmem:[%s2] sm:$0xff]
  %1623 = vset.pattern.permute.xlu0 0
  %1624 = vperm.xlu0 %1623, %v1621
  %v1625 = vpop.permute.xlu0 %1624
  %v1627 = vadd.f32 %v1608, %v1625
  %v1628 = vadd.f32 %v1609, %v1625
  %v1629 = vadd.f32 %v1610, %v1625
  %v1630 = vadd.f32 %v1611, %v1625
  %v1631 = vadd.f32 %v1612, %v1625
  %v1632 = vadd.f32 %v1613, %v1625
  %v1633 = vadd.f32 %v1614, %v1625
  %v1634 = vadd.f32 %v1615, %v1625
  %v1635 = vadd.f32 %v1616, %v1625
  %v1636 = vadd.f32 %v1617, %v1625
  %v1637 = vadd.f32 %v1618, %v1625
  %v1638 = vadd.f32 %v1619, %v1625
  %v1639 = vadd.f32 %v1620, %v1625
  %v1640 = vmax.f32 %v1627, 0.0
  %v1641 = vmax.f32 %v1628, 0.0
  %v1642 = vmax.f32 %v1629, 0.0
  %v1643 = vmax.f32 %v1630, 0.0
  %v1644 = vmax.f32 %v1631, 0.0
  %v1645 = vmax.f32 %v1632, 0.0
  %v1646 = vmax.f32 %v1633, 0.0
  %v1647 = vmax.f32 %v1634, 0.0
  %v1648 = vmax.f32 %v1635, 0.0
  %v1649 = vmax.f32 %v1636, 0.0
  %v1650 = vmax.f32 %v1637, 0.0
  %v1651 = vmax.f32 %v1638, 0.0
  %v1652 = vmax.f32 %v1639, 0.0
  %1653 = vst [vmem:[%s3] sm:$0xff] %v1640
  %1654 = vst [vmem:[%s3 + $0x8] sm:$0xff] %v1641
  %1655 = vst [vmem:[%s3 + $0x10] sm:$0xff] %v1642
  %1656 = vst [vmem:[%s3 + $0x18] sm:$0xff] %v1643
  %1657 = vst [vmem:[%s3 + $0x20] sm:$0xff] %v1644
  %1658 = vst [vmem:[%s3 + $0x28] sm:$0xff] %v1645
  %1659 = vst [vmem:[%s3 + $0x30] sm:$0xff] %v1646
  %1660 = vst [vmem:[%s3 + $0x38] sm:$0xff] %v1647
  %1661 = vst [vmem:[%s3 + $0x40] sm:$0xff] %v1648
  %1662 = vst [vmem:[%s3 + $0x48] sm:$0xff] %v1649
  %1663 = vst [vmem:[%s3 + $0x50] sm:$0xff] %v1650
  %1664 = vst [vmem:[%s3 + $0x58] sm:$0xff] %v1651
  %vm1665 = vcmask 261120
  %1666 = vst.msk [vmem:[%s3 + $0x60] sm:$0xff] %vm1665, %v1652
  // Predicated region
  $region14: #{model_forward.3} parent=0 // pred_check
    _
  $region15: #{model_forward.3} parent=0 // pred_check_branch
    %1668 = sbr.rel (0) target = $region17
  $region16: #{model_forward.3} parent=0 // pred_region
    _
  $region17: #{model_forward.3} parent=0 // pred_fallthru
    _
  // Predicated region
  $region18: #{model_forward.3} parent=0 // pred_check
    _
  $region19: #{model_forward.3} parent=0 // pred_check_branch
    %1670 = sbr.rel (0) target = $region21
  $region20: #{model_forward.3} parent=0 // pred_region
    _
  $region21: #{model_forward.3} parent=0 // pred_fallthru
    _

// kernel: model_forward.4
$region0: #{model_forward.4}
  #allocation0 [shape = 'u32[]', space=smem, size = 0x4, offset = 0x4, fixed_abs, tag = 'smem constant byte address 0x4 - core index']
  #allocation1 [shape = 'u32[72,128]{1,0:T(1,128)}', space=vmem, size = 0x9000, scoped, tag = 'internal scratch']
  %s0 = inlined_call_operand.vmem [shape: f32[4,200,392], index: 0, kind: input, shape index: {}]
  %s1 = inlined_call_operand.vmem [shape: f32[16,200], index: 1, kind: input, shape index: {}]
  %s2 = inlined_call_operand.vmem [shape: f32[16,1], index: 2, kind: input, shape index: {}]
  %s3 = inlined_call_operand.vmem [shape: f32[16,392], index: 3, kind: output, shape index: {}]
  %s4 = sld [smem:[#allocation0]]
  $region22: #{model_forward.4} parent=0
    _
  %s6 = ssub.s32 1, %s4
  %s7 = scalar_select 0, %s6, %s4
  // Predicated region
  $region2: #{model_forward.4} parent=0 // pred_check
    _
  $region3: #{model_forward.4} parent=0 // pred_check_branch
    %9 = sbr.rel (0) target = $region5
  $region4: #{model_forward.4} parent=0 // pred_region
    _
  $region5: #{model_forward.4} parent=0 // pred_fallthru
    _
  // Predicated region
  $region6: #{model_forward.4} parent=0 // pred_check
    _
  $region7: #{model_forward.4} parent=0 // pred_check_branch
    %11 = sbr.rel (0) target = $region9
  $region8: #{model_forward.4} parent=0 // pred_region
    _
  $region9: #{model_forward.4} parent=0 // pred_fallthru
    _
  // Predicated region
  $region10: #{model_forward.4} parent=0 // pred_check
    _
  $region11: #{model_forward.4} parent=0 // pred_check_branch
    %13 = sbr.rel (0) target = $region13
  $region12: #{model_forward.4} parent=0 // pred_region
    _
  $region13: #{model_forward.4} parent=0 // pred_fallthru
    _
  %v14 = vld [vmem:[%s1] sm:$0xff]
  %v15 = vld [vmem:[%s1 + $0x8] sm:$0xff]
  %v16 = vld [vmem:[%s1 + $0x10] sm:$0xff]
  %v17 = vld [vmem:[%s1 + $0x18] sm:$0xff]
  %v18 = vld [vmem:[%s0] sm:$0xff]
  %v19 = vld [vmem:[%s0 + $0x8] sm:$0xff]
  %v20 = vld [vmem:[%s0 + $0x10] sm:$0xff]
  %v21 = vld [vmem:[%s0 + $0x18] sm:$0xff]
  %v22 = vld [vmem:[%s0 + $0x20] sm:$0xff]
  %v23 = vld [vmem:[%s0 + $0x28] sm:$0xff]
  %v24 = vld [vmem:[%s0 + $0x30] sm:$0xff]
  %v25 = vld [vmem:[%s0 + $0x38] sm:$0xff]
  %v26 = vld [vmem:[%s0 + $0x40] sm:$0xff]
  %v27 = vld [vmem:[%s0 + $0x48] sm:$0xff]
  %v28 = vld [vmem:[%s0 + $0x50] sm:$0xff]
  %v29 = vld [vmem:[%s0 + $0x58] sm:$0xff]
  %v30 = vld [vmem:[%s0 + $0x60] sm:$0xff]
  %v31 = vld [vmem:[%s0 + $0x68] sm:$0xff]
  %v32 = vld [vmem:[%s0 + $0x70] sm:$0xff]
  %v33 = vld [vmem:[%s0 + $0x78] sm:$0xff]
  %v34 = vld [vmem:[%s0 + $0x80] sm:$0xff]
  %v35 = vld [vmem:[%s0 + $0x88] sm:$0xff]
  %v36 = vld [vmem:[%s0 + $0x90] sm:$0xff]
  %v37 = vld [vmem:[%s0 + $0x98] sm:$0xff]
  %v38 = vld [vmem:[%s0 + $0xa0] sm:$0xff]
  %v39 = vld [vmem:[%s0 + $0xa8] sm:$0xff]
  %v40 = vld [vmem:[%s0 + $0xb0] sm:$0xff]
  %v41 = vld [vmem:[%s0 + $0xb8] sm:$0xff]
  %v42 = vld [vmem:[%s0 + $0xc0] sm:$0xff]
  %v43 = vld [vmem:[%s0 + $0xc8] sm:$0xff]
  %v44 = vld [vmem:[%s0 + $0xd0] sm:$0xff]
  %v45 = vld [vmem:[%s0 + $0xd8] sm:$0xff]
  %v46 = vld [vmem:[%s0 + $0xe0] sm:$0xff]
  %v47 = vld [vmem:[%s0 + $0xe8] sm:$0xff]
  %v48 = vld [vmem:[%s0 + $0xf0] sm:$0xff]
  %v49 = vld [vmem:[%s0 + $0xf8] sm:$0xff]
  %v50 = vld [vmem:[%s0 + $0x100] sm:$0xff]
  %v51 = vld [vmem:[%s0 + $0x108] sm:$0xff]
  %v52 = vld [vmem:[%s0 + $0x110] sm:$0xff]
  %v53 = vld [vmem:[%s0 + $0x118] sm:$0xff]
  %v54 = vld [vmem:[%s0 + $0x120] sm:$0xff]
  %v55 = vld [vmem:[%s0 + $0x128] sm:$0xff]
  %v56 = vld [vmem:[%s0 + $0x130] sm:$0xff]
  %v57 = vld [vmem:[%s0 + $0x138] sm:$0xff]
  %v58 = vld [vmem:[%s0 + $0x140] sm:$0xff]
  %v59 = vld [vmem:[%s0 + $0x148] sm:$0xff]
  %v60 = vld [vmem:[%s0 + $0x150] sm:$0xff]
  %v61 = vld [vmem:[%s0 + $0x158] sm:$0xff]
  %v62 = vld [vmem:[%s0 + $0x160] sm:$0xff]
  %v63 = vld [vmem:[%s0 + $0x168] sm:$0xff]
  %v64 = vld [vmem:[%s0 + $0x170] sm:$0xff]
  %v65 = vld [vmem:[%s0 + $0x178] sm:$0xff]
  %v66 = vld [vmem:[%s0 + $0x180] sm:$0xff]
  %v67 = vld [vmem:[%s0 + $0x188] sm:$0xff]
  %v68 = vld [vmem:[%s0 + $0x190] sm:$0xff]
  %v69 = vld [vmem:[%s0 + $0x198] sm:$0xff]
  %v70 = vld [vmem:[%s0 + $0x1a0] sm:$0xff]
  %v71 = vld [vmem:[%s0 + $0x1a8] sm:$0xff]
  %v72 = vld [vmem:[%s0 + $0x1b0] sm:$0xff]
  %v73 = vld [vmem:[%s0 + $0x1b8] sm:$0xff]
  %v74 = vld [vmem:[%s0 + $0x1c0] sm:$0xff]
  %v75 = vld [vmem:[%s0 + $0x1c8] sm:$0xff]
  %v76 = vld [vmem:[%s0 + $0x1d0] sm:$0xff]
  %v77 = vld [vmem:[%s0 + $0x1d8] sm:$0xff]
  %v78 = vld [vmem:[%s0 + $0x1e0] sm:$0xff]
  %v79 = vld [vmem:[%s0 + $0x1e8] sm:$0xff]
  %v80 = vld [vmem:[%s0 + $0x1f0] sm:$0xff]
  %v81 = vld [vmem:[%s0 + $0x1f8] sm:$0xff]
  %v82 = vld [vmem:[%s0 + $0x200] sm:$0xff]
  %v83 = vld [vmem:[%s0 + $0x208] sm:$0xff]
  %v84 = vld [vmem:[%s0 + $0x210] sm:$0xff]
  %v85 = vld [vmem:[%s0 + $0x218] sm:$0xff]
  %v86 = vld [vmem:[%s0 + $0x220] sm:$0xff]
  %v87 = vld [vmem:[%s0 + $0x228] sm:$0xff]
  %v88 = vld [vmem:[%s0 + $0x230] sm:$0xff]
  %v89 = vld [vmem:[%s0 + $0x238] sm:$0xff]
  %v90 = vld [vmem:[%s0 + $0x240] sm:$0xff]
  %v91 = vld [vmem:[%s0 + $0x248] sm:$0xff]
  %v92 = vld [vmem:[%s0 + $0x250] sm:$0xff]
  %v93 = vld [vmem:[%s0 + $0x258] sm:$0xff]
  %v94 = vld [vmem:[%s0 + $0x260] sm:$0xff]
  %v95 = vld [vmem:[%s0 + $0x268] sm:$0xff]
  %v96 = vld [vmem:[%s0 + $0x270] sm:$0xff]
  %v97 = vld [vmem:[%s0 + $0x278] sm:$0xff]
  %v98 = vld [vmem:[%s0 + $0x280] sm:$0xff]
  %v99 = vld [vmem:[%s0 + $0x288] sm:$0xff]
  %v100 = vld [vmem:[%s0 + $0x290] sm:$0xff]
  %v101 = vld [vmem:[%s0 + $0x298] sm:$0xff]
  %v102 = vld [vmem:[%s0 + $0x2a0] sm:$0xff]
  %v103 = vld [vmem:[%s0 + $0x2a8] sm:$0xff]
  %v104 = vld [vmem:[%s0 + $0x2b0] sm:$0xff]
  %v105 = vld [vmem:[%s0 + $0x2b8] sm:$0xff]
  %v106 = vld [vmem:[%s0 + $0x2c0] sm:$0xff]
  %v107 = vld [vmem:[%s0 + $0x2c8] sm:$0xff]
  %v108 = vld [vmem:[%s0 + $0x2d0] sm:$0xff]
  %v109 = vld [vmem:[%s0 + $0x2d8] sm:$0xff]
  %v110 = vld [vmem:[%s0 + $0x2e0] sm:$0xff]
  %v111 = vld [vmem:[%s0 + $0x2e8] sm:$0xff]
  %v112 = vld [vmem:[%s0 + $0x2f0] sm:$0xff]
  %v113 = vld [vmem:[%s0 + $0x2f8] sm:$0xff]
  %v114 = vld [vmem:[%s0 + $0x300] sm:$0xff]
  %v115 = vld [vmem:[%s0 + $0x308] sm:$0xff]
  %v116 = vld [vmem:[%s0 + $0x310] sm:$0xff]
  %v117 = vld [vmem:[%s0 + $0x318] sm:$0xff]
  %vm118 = vcmask 588800
  %v120 = vsel %vm118, %v15, 0
  %v123 = vsel %vm118, %v17, 0
  %125 = vmatpush.msra.mxu0 %v78
  %126 = vmatpush.msra.mxu0 %v74
  %127 = vmatpush.msra.mxu0 %v70
  %128 = vmatpush.msra.mxu0 %v66
  %129 = vmatpush.msra.mxu0 %v62
  %130 = vmatpush.msra.mxu0 %v58
  %131 = vmatpush.msra.mxu0 %v54
  %132 = vmatpush.msra.mxu0 %v50
  %133 = vmatpush.msra.mxu0 %v46
  %134 = vmatpush.msra.mxu0 %v42
  %135 = vmatpush.msra.mxu0 %v38
  %136 = vmatpush.msra.mxu0 %v34
  %137 = vmatpush.msra.mxu0 %v30
  %138 = vmatpush.msra.mxu0 %v26
  %139 = vmatpush.msra.mxu0 %v22
  %140 = vmatpush.msra.mxu0 %v18
  %141 = vmatmul.f32.gmra.mxu0 %v14
  %v142 = vpop.f32.mrf.mxu0
  %v143 = vadd.f32 0.0, %v142
  %144 = vmatmul.f32.gmra.mxu0 %v16
  %v145 = vpop.f32.mrf.mxu0
  %v146 = vadd.f32 0.0, %v145
  %147 = vdwg.mxu0
  %148 = vmatpush.msra.mxu0 0.0
  %149 = vmatpush.msra.mxu0 0.0
  %150 = vmatpush.msra.mxu0 0.0
  %151 = vmatpush.msra.mxu0 0.0
  %152 = vmatpush.msra.mxu0 0.0
  %153 = vmatpush.msra.mxu0 0.0
  %154 = vmatpush.msra.mxu0 0.0
  %155 = vmatpush.msra.mxu0 %v114
  %156 = vmatpush.msra.mxu0 %v110
  %157 = vmatpush.msra.mxu0 %v106
  %158 = vmatpush.msra.mxu0 %v102
  %159 = vmatpush.msra.mxu0 %v98
  %160 = vmatpush.msra.mxu0 %v94
  %161 = vmatpush.msra.mxu0 %v90
  %162 = vmatpush.msra.mxu0 %v86
  %163 = vmatpush.msra.mxu0 %v82
  %164 = vmatmul.f32.gmra.mxu0 %v120
  %v165 = vpop.f32.mrf.mxu0
  %v166 = vadd.f32 %v143, %v165
  %167 = vmatmul.f32.gmra.mxu0 %v123
  %v168 = vpop.f32.mrf.mxu0
  %v169 = vadd.f32 %v146, %v168
  %170 = vdwg.mxu0
  %171 = vmatpush.msra.mxu0 %v79
  %172 = vmatpush.msra.mxu0 %v75
  %173 = vmatpush.msra.mxu0 %v71
  %174 = vmatpush.msra.mxu0 %v67
  %175 = vmatpush.msra.mxu0 %v63
  %176 = vmatpush.msra.mxu0 %v59
  %177 = vmatpush.msra.mxu0 %v55
  %178 = vmatpush.msra.mxu0 %v51
  %179 = vmatpush.msra.mxu0 %v47
  %180 = vmatpush.msra.mxu0 %v43
  %181 = vmatpush.msra.mxu0 %v39
  %182 = vmatpush.msra.mxu0 %v35
  %183 = vmatpush.msra.mxu0 %v31
  %184 = vmatpush.msra.mxu0 %v27
  %185 = vmatpush.msra.mxu0 %v23
  %186 = vmatpush.msra.mxu0 %v19
  %187 = vmatmul.f32.gmra.mxu0 %v14
  %v188 = vpop.f32.mrf.mxu0
  %v189 = vadd.f32 0.0, %v188
  %190 = vmatmul.f32.gmra.mxu0 %v16
  %v191 = vpop.f32.mrf.mxu0
  %v192 = vadd.f32 0.0, %v191
  %193 = vdwg.mxu0
  %194 = vmatpush.msra.mxu0 0.0
  %195 = vmatpush.msra.mxu0 0.0
  %196 = vmatpush.msra.mxu0 0.0
  %197 = vmatpush.msra.mxu0 0.0
  %198 = vmatpush.msra.mxu0 0.0
  %199 = vmatpush.msra.mxu0 0.0
  %200 = vmatpush.msra.mxu0 0.0
  %201 = vmatpush.msra.mxu0 %v115
  %202 = vmatpush.msra.mxu0 %v111
  %203 = vmatpush.msra.mxu0 %v107
  %204 = vmatpush.msra.mxu0 %v103
  %205 = vmatpush.msra.mxu0 %v99
  %206 = vmatpush.msra.mxu0 %v95
  %207 = vmatpush.msra.mxu0 %v91
  %208 = vmatpush.msra.mxu0 %v87
  %209 = vmatpush.msra.mxu0 %v83
  %210 = vmatmul.f32.gmra.mxu0 %v120
  %v211 = vpop.f32.mrf.mxu0
  %v212 = vadd.f32 %v189, %v211
  %213 = vmatmul.f32.gmra.mxu0 %v123
  %v214 = vpop.f32.mrf.mxu0
  %v215 = vadd.f32 %v192, %v214
  %216 = vdwg.mxu0
  %217 = vmatpush.msra.mxu0 %v80
  %218 = vmatpush.msra.mxu0 %v76
  %219 = vmatpush.msra.mxu0 %v72
  %220 = vmatpush.msra.mxu0 %v68
  %221 = vmatpush.msra.mxu0 %v64
  %222 = vmatpush.msra.mxu0 %v60
  %223 = vmatpush.msra.mxu0 %v56
  %224 = vmatpush.msra.mxu0 %v52
  %225 = vmatpush.msra.mxu0 %v48
  %226 = vmatpush.msra.mxu0 %v44
  %227 = vmatpush.msra.mxu0 %v40
  %228 = vmatpush.msra.mxu0 %v36
  %229 = vmatpush.msra.mxu0 %v32
  %230 = vmatpush.msra.mxu0 %v28
  %231 = vmatpush.msra.mxu0 %v24
  %232 = vmatpush.msra.mxu0 %v20
  %233 = vmatmul.f32.gmra.mxu0 %v14
  %v234 = vpop.f32.mrf.mxu0
  %v235 = vadd.f32 0.0, %v234
  %236 = vmatmul.f32.gmra.mxu0 %v16
  %v237 = vpop.f32.mrf.mxu0
  %v238 = vadd.f32 0.0, %v237
  %239 = vdwg.mxu0
  %240 = vmatpush.msra.mxu0 0.0
  %241 = vmatpush.msra.mxu0 0.0
  %242 = vmatpush.msra.mxu0 0.0
  %243 = vmatpush.msra.mxu0 0.0
  %244 = vmatpush.msra.mxu0 0.0
  %245 = vmatpush.msra.mxu0 0.0
  %246 = vmatpush.msra.mxu0 0.0
  %247 = vmatpush.msra.mxu0 %v116
  %248 = vmatpush.msra.mxu0 %v112
  %249 = vmatpush.msra.mxu0 %v108
  %250 = vmatpush.msra.mxu0 %v104
  %251 = vmatpush.msra.mxu0 %v100
  %252 = vmatpush.msra.mxu0 %v96
  %253 = vmatpush.msra.mxu0 %v92
  %254 = vmatpush.msra.mxu0 %v88
  %255 = vmatpush.msra.mxu0 %v84
  %256 = vmatmul.f32.gmra.mxu0 %v120
  %v257 = vpop.f32.mrf.mxu0
  %v258 = vadd.f32 %v235, %v257
  %259 = vmatmul.f32.gmra.mxu0 %v123
  %v260 = vpop.f32.mrf.mxu0
  %v261 = vadd.f32 %v238, %v260
  %262 = vdwg.mxu0
  %263 = vmatpush.msra.mxu0 %v81
  %264 = vmatpush.msra.mxu0 %v77
  %265 = vmatpush.msra.mxu0 %v73
  %266 = vmatpush.msra.mxu0 %v69
  %267 = vmatpush.msra.mxu0 %v65
  %268 = vmatpush.msra.mxu0 %v61
  %269 = vmatpush.msra.mxu0 %v57
  %270 = vmatpush.msra.mxu0 %v53
  %271 = vmatpush.msra.mxu0 %v49
  %272 = vmatpush.msra.mxu0 %v45
  %273 = vmatpush.msra.mxu0 %v41
  %274 = vmatpush.msra.mxu0 %v37
  %275 = vmatpush.msra.mxu0 %v33
  %276 = vmatpush.msra.mxu0 %v29
  %277 = vmatpush.msra.mxu0 %v25
  %278 = vmatpush.msra.mxu0 %v21
  %279 = vmatmul.f32.gmra.mxu0 %v14
  %v280 = vpop.f32.mrf.mxu0
  %v281 = vadd.f32 0.0, %v280
  %282 = vmatmul.f32.gmra.mxu0 %v16
  %v283 = vpop.f32.mrf.mxu0
  %v284 = vadd.f32 0.0, %v283
  %285 = vdwg.mxu0
  %286 = vmatpush.msra.mxu0 0.0
  %287 = vmatpush.msra.mxu0 0.0
  %288 = vmatpush.msra.mxu0 0.0
  %289 = vmatpush.msra.mxu0 0.0
  %290 = vmatpush.msra.mxu0 0.0
  %291 = vmatpush.msra.mxu0 0.0
  %292 = vmatpush.msra.mxu0 0.0
  %293 = vmatpush.msra.mxu0 %v117
  %294 = vmatpush.msra.mxu0 %v113
  %295 = vmatpush.msra.mxu0 %v109
  %296 = vmatpush.msra.mxu0 %v105
  %297 = vmatpush.msra.mxu0 %v101
  %298 = vmatpush.msra.mxu0 %v97
  %299 = vmatpush.msra.mxu0 %v93
  %300 = vmatpush.msra.mxu0 %v89
  %301 = vmatpush.msra.mxu0 %v85
  %302 = vmatmul.f32.gmra.mxu0 %v120
  %v303 = vpop.f32.mrf.mxu0
  %v304 = vadd.f32 %v281, %v303
  %305 = vmatmul.f32.gmra.mxu0 %v123
  %v306 = vpop.f32.mrf.mxu0
  %v307 = vadd.f32 %v284, %v306
  %308 = vdwg.mxu0
  %s309 = scalar_lea.vmem %s0, 800
  %v310 = vld [vmem:[%s309] sm:$0xff]
  %v311 = vld [vmem:[%s309 + $0x8] sm:$0xff]
  %v312 = vld [vmem:[%s309 + $0x10] sm:$0xff]
  %v313 = vld [vmem:[%s309 + $0x18] sm:$0xff]
  %v314 = vld [vmem:[%s309 + $0x20] sm:$0xff]
  %v315 = vld [vmem:[%s309 + $0x28] sm:$0xff]
  %v316 = vld [vmem:[%s309 + $0x30] sm:$0xff]
  %v317 = vld [vmem:[%s309 + $0x38] sm:$0xff]
  %v318 = vld [vmem:[%s309 + $0x40] sm:$0xff]
  %v319 = vld [vmem:[%s309 + $0x48] sm:$0xff]
  %v320 = vld [vmem:[%s309 + $0x50] sm:$0xff]
  %v321 = vld [vmem:[%s309 + $0x58] sm:$0xff]
  %v322 = vld [vmem:[%s309 + $0x60] sm:$0xff]
  %v323 = vld [vmem:[%s309 + $0x68] sm:$0xff]
  %v324 = vld [vmem:[%s309 + $0x70] sm:$0xff]
  %v325 = vld [vmem:[%s309 + $0x78] sm:$0xff]
  %v326 = vld [vmem:[%s309 + $0x80] sm:$0xff]
  %v327 = vld [vmem:[%s309 + $0x88] sm:$0xff]
  %v328 = vld [vmem:[%s309 + $0x90] sm:$0xff]
  %v329 = vld [vmem:[%s309 + $0x98] sm:$0xff]
  %v330 = vld [vmem:[%s309 + $0xa0] sm:$0xff]
  %v331 = vld [vmem:[%s309 + $0xa8] sm:$0xff]
  %v332 = vld [vmem:[%s309 + $0xb0] sm:$0xff]
  %v333 = vld [vmem:[%s309 + $0xb8] sm:$0xff]
  %v334 = vld [vmem:[%s309 + $0xc0] sm:$0xff]
  %v335 = vld [vmem:[%s309 + $0xc8] sm:$0xff]
  %v336 = vld [vmem:[%s309 + $0xd0] sm:$0xff]
  %v337 = vld [vmem:[%s309 + $0xd8] sm:$0xff]
  %v338 = vld [vmem:[%s309 + $0xe0] sm:$0xff]
  %v339 = vld [vmem:[%s309 + $0xe8] sm:$0xff]
  %v340 = vld [vmem:[%s309 + $0xf0] sm:$0xff]
  %v341 = vld [vmem:[%s309 + $0xf8] sm:$0xff]
  %v342 = vld [vmem:[%s309 + $0x100] sm:$0xff]
  %v343 = vld [vmem:[%s309 + $0x108] sm:$0xff]
  %v344 = vld [vmem:[%s309 + $0x110] sm:$0xff]
  %v345 = vld [vmem:[%s309 + $0x118] sm:$0xff]
  %v346 = vld [vmem:[%s309 + $0x120] sm:$0xff]
  %v347 = vld [vmem:[%s309 + $0x128] sm:$0xff]
  %v348 = vld [vmem:[%s309 + $0x130] sm:$0xff]
  %v349 = vld [vmem:[%s309 + $0x138] sm:$0xff]
  %v350 = vld [vmem:[%s309 + $0x140] sm:$0xff]
  %v351 = vld [vmem:[%s309 + $0x148] sm:$0xff]
  %v352 = vld [vmem:[%s309 + $0x150] sm:$0xff]
  %v353 = vld [vmem:[%s309 + $0x158] sm:$0xff]
  %v354 = vld [vmem:[%s309 + $0x160] sm:$0xff]
  %v355 = vld [vmem:[%s309 + $0x168] sm:$0xff]
  %v356 = vld [vmem:[%s309 + $0x170] sm:$0xff]
  %v357 = vld [vmem:[%s309 + $0x178] sm:$0xff]
  %v358 = vld [vmem:[%s309 + $0x180] sm:$0xff]
  %v359 = vld [vmem:[%s309 + $0x188] sm:$0xff]
  %v360 = vld [vmem:[%s309 + $0x190] sm:$0xff]
  %v361 = vld [vmem:[%s309 + $0x198] sm:$0xff]
  %v362 = vld [vmem:[%s309 + $0x1a0] sm:$0xff]
  %v363 = vld [vmem:[%s309 + $0x1a8] sm:$0xff]
  %v364 = vld [vmem:[%s309 + $0x1b0] sm:$0xff]
  %v365 = vld [vmem:[%s309 + $0x1b8] sm:$0xff]
  %v366 = vld [vmem:[%s309 + $0x1c0] sm:$0xff]
  %v367 = vld [vmem:[%s309 + $0x1c8] sm:$0xff]
  %v368 = vld [vmem:[%s309 + $0x1d0] sm:$0xff]
  %v369 = vld [vmem:[%s309 + $0x1d8] sm:$0xff]
  %v370 = vld [vmem:[%s309 + $0x1e0] sm:$0xff]
  %v371 = vld [vmem:[%s309 + $0x1e8] sm:$0xff]
  %v372 = vld [vmem:[%s309 + $0x1f0] sm:$0xff]
  %v373 = vld [vmem:[%s309 + $0x1f8] sm:$0xff]
  %v374 = vld [vmem:[%s309 + $0x200] sm:$0xff]
  %v375 = vld [vmem:[%s309 + $0x208] sm:$0xff]
  %v376 = vld [vmem:[%s309 + $0x210] sm:$0xff]
  %v377 = vld [vmem:[%s309 + $0x218] sm:$0xff]
  %v378 = vld [vmem:[%s309 + $0x220] sm:$0xff]
  %v379 = vld [vmem:[%s309 + $0x228] sm:$0xff]
  %v380 = vld [vmem:[%s309 + $0x230] sm:$0xff]
  %v381 = vld [vmem:[%s309 + $0x238] sm:$0xff]
  %v382 = vld [vmem:[%s309 + $0x240] sm:$0xff]
  %v383 = vld [vmem:[%s309 + $0x248] sm:$0xff]
  %v384 = vld [vmem:[%s309 + $0x250] sm:$0xff]
  %v385 = vld [vmem:[%s309 + $0x258] sm:$0xff]
  %v386 = vld [vmem:[%s309 + $0x260] sm:$0xff]
  %v387 = vld [vmem:[%s309 + $0x268] sm:$0xff]
  %v388 = vld [vmem:[%s309 + $0x270] sm:$0xff]
  %v389 = vld [vmem:[%s309 + $0x278] sm:$0xff]
  %v390 = vld [vmem:[%s309 + $0x280] sm:$0xff]
  %v391 = vld [vmem:[%s309 + $0x288] sm:$0xff]
  %v392 = vld [vmem:[%s309 + $0x290] sm:$0xff]
  %v393 = vld [vmem:[%s309 + $0x298] sm:$0xff]
  %v394 = vld [vmem:[%s309 + $0x2a0] sm:$0xff]
  %v395 = vld [vmem:[%s309 + $0x2a8] sm:$0xff]
  %v396 = vld [vmem:[%s309 + $0x2b0] sm:$0xff]
  %v397 = vld [vmem:[%s309 + $0x2b8] sm:$0xff]
  %v398 = vld [vmem:[%s309 + $0x2c0] sm:$0xff]
  %v399 = vld [vmem:[%s309 + $0x2c8] sm:$0xff]
  %v400 = vld [vmem:[%s309 + $0x2d0] sm:$0xff]
  %v401 = vld [vmem:[%s309 + $0x2d8] sm:$0xff]
  %v402 = vld [vmem:[%s309 + $0x2e0] sm:$0xff]
  %v403 = vld [vmem:[%s309 + $0x2e8] sm:$0xff]
  %v404 = vld [vmem:[%s309 + $0x2f0] sm:$0xff]
  %v405 = vld [vmem:[%s309 + $0x2f8] sm:$0xff]
  %v406 = vld [vmem:[%s309 + $0x300] sm:$0xff]
  %v407 = vld [vmem:[%s309 + $0x308] sm:$0xff]
  %v408 = vld [vmem:[%s309 + $0x310] sm:$0xff]
  %v409 = vld [vmem:[%s309 + $0x318] sm:$0xff]
  %410 = vmatpush.msra.mxu0 %v370
  %411 = vmatpush.msra.mxu0 %v366
  %412 = vmatpush.msra.mxu0 %v362
  %413 = vmatpush.msra.mxu0 %v358
  %414 = vmatpush.msra.mxu0 %v354
  %415 = vmatpush.msra.mxu0 %v350
  %416 = vmatpush.msra.mxu0 %v346
  %417 = vmatpush.msra.mxu0 %v342
  %418 = vmatpush.msra.mxu0 %v338
  %419 = vmatpush.msra.mxu0 %v334
  %420 = vmatpush.msra.mxu0 %v330
  %421 = vmatpush.msra.mxu0 %v326
  %422 = vmatpush.msra.mxu0 %v322
  %423 = vmatpush.msra.mxu0 %v318
  %424 = vmatpush.msra.mxu0 %v314
  %425 = vmatpush.msra.mxu0 %v310
  %426 = vmatmul.f32.gmra.mxu0 %v14
  %v427 = vpop.f32.mrf.mxu0
  %v428 = vadd.f32 0.0, %v427
  %429 = vmatmul.f32.gmra.mxu0 %v16
  %v430 = vpop.f32.mrf.mxu0
  %v431 = vadd.f32 0.0, %v430
  %432 = vdwg.mxu0
  %433 = vmatpush.msra.mxu0 0.0
  %434 = vmatpush.msra.mxu0 0.0
  %435 = vmatpush.msra.mxu0 0.0
  %436 = vmatpush.msra.mxu0 0.0
  %437 = vmatpush.msra.mxu0 0.0
  %438 = vmatpush.msra.mxu0 0.0
  %439 = vmatpush.msra.mxu0 0.0
  %440 = vmatpush.msra.mxu0 %v406
  %441 = vmatpush.msra.mxu0 %v402
  %442 = vmatpush.msra.mxu0 %v398
  %443 = vmatpush.msra.mxu0 %v394
  %444 = vmatpush.msra.mxu0 %v390
  %445 = vmatpush.msra.mxu0 %v386
  %446 = vmatpush.msra.mxu0 %v382
  %447 = vmatpush.msra.mxu0 %v378
  %448 = vmatpush.msra.mxu0 %v374
  %449 = vmatmul.f32.gmra.mxu0 %v120
  %v450 = vpop.f32.mrf.mxu0
  %v451 = vadd.f32 %v428, %v450
  %452 = vmatmul.f32.gmra.mxu0 %v123
  %v453 = vpop.f32.mrf.mxu0
  %v454 = vadd.f32 %v431, %v453
  %455 = vdwg.mxu0
  %456 = vmatpush.msra.mxu0 %v371
  %457 = vmatpush.msra.mxu0 %v367
  %458 = vmatpush.msra.mxu0 %v363
  %459 = vmatpush.msra.mxu0 %v359
  %460 = vmatpush.msra.mxu0 %v355
  %461 = vmatpush.msra.mxu0 %v351
  %462 = vmatpush.msra.mxu0 %v347
  %463 = vmatpush.msra.mxu0 %v343
  %464 = vmatpush.msra.mxu0 %v339
  %465 = vmatpush.msra.mxu0 %v335
  %466 = vmatpush.msra.mxu0 %v331
  %467 = vmatpush.msra.mxu0 %v327
  %468 = vmatpush.msra.mxu0 %v323
  %469 = vmatpush.msra.mxu0 %v319
  %470 = vmatpush.msra.mxu0 %v315
  %471 = vmatpush.msra.mxu0 %v311
  %472 = vmatmul.f32.gmra.mxu0 %v14
  %v473 = vpop.f32.mrf.mxu0
  %v474 = vadd.f32 0.0, %v473
  %475 = vmatmul.f32.gmra.mxu0 %v16
  %v476 = vpop.f32.mrf.mxu0
  %v477 = vadd.f32 0.0, %v476
  %478 = vdwg.mxu0
  %479 = vmatpush.msra.mxu0 0.0
  %480 = vmatpush.msra.mxu0 0.0
  %481 = vmatpush.msra.mxu0 0.0
  %482 = vmatpush.msra.mxu0 0.0
  %483 = vmatpush.msra.mxu0 0.0
  %484 = vmatpush.msra.mxu0 0.0
  %485 = vmatpush.msra.mxu0 0.0
  %486 = vmatpush.msra.mxu0 %v407
  %487 = vmatpush.msra.mxu0 %v403
  %488 = vmatpush.msra.mxu0 %v399
  %489 = vmatpush.msra.mxu0 %v395
  %490 = vmatpush.msra.mxu0 %v391
  %491 = vmatpush.msra.mxu0 %v387
  %492 = vmatpush.msra.mxu0 %v383
  %493 = vmatpush.msra.mxu0 %v379
  %494 = vmatpush.msra.mxu0 %v375
  %495 = vmatmul.f32.gmra.mxu0 %v120
  %v496 = vpop.f32.mrf.mxu0
  %v497 = vadd.f32 %v474, %v496
  %498 = vmatmul.f32.gmra.mxu0 %v123
  %v499 = vpop.f32.mrf.mxu0
  %v500 = vadd.f32 %v477, %v499
  %501 = vdwg.mxu0
  %502 = vmatpush.msra.mxu0 %v372
  %503 = vmatpush.msra.mxu0 %v368
  %504 = vmatpush.msra.mxu0 %v364
  %505 = vmatpush.msra.mxu0 %v360
  %506 = vmatpush.msra.mxu0 %v356
  %507 = vmatpush.msra.mxu0 %v352
  %508 = vmatpush.msra.mxu0 %v348
  %509 = vmatpush.msra.mxu0 %v344
  %510 = vmatpush.msra.mxu0 %v340
  %511 = vmatpush.msra.mxu0 %v336
  %512 = vmatpush.msra.mxu0 %v332
  %513 = vmatpush.msra.mxu0 %v328
  %514 = vmatpush.msra.mxu0 %v324
  %515 = vmatpush.msra.mxu0 %v320
  %516 = vmatpush.msra.mxu0 %v316
  %517 = vmatpush.msra.mxu0 %v312
  %518 = vmatmul.f32.gmra.mxu0 %v14
  %v519 = vpop.f32.mrf.mxu0
  %v520 = vadd.f32 0.0, %v519
  %521 = vmatmul.f32.gmra.mxu0 %v16
  %v522 = vpop.f32.mrf.mxu0
  %v523 = vadd.f32 0.0, %v522
  %524 = vdwg.mxu0
  %525 = vmatpush.msra.mxu0 0.0
  %526 = vmatpush.msra.mxu0 0.0
  %527 = vmatpush.msra.mxu0 0.0
  %528 = vmatpush.msra.mxu0 0.0
  %529 = vmatpush.msra.mxu0 0.0
  %530 = vmatpush.msra.mxu0 0.0
  %531 = vmatpush.msra.mxu0 0.0
  %532 = vmatpush.msra.mxu0 %v408
  %533 = vmatpush.msra.mxu0 %v404
  %534 = vmatpush.msra.mxu0 %v400
  %535 = vmatpush.msra.mxu0 %v396
  %536 = vmatpush.msra.mxu0 %v392
  %537 = vmatpush.msra.mxu0 %v388
  %538 = vmatpush.msra.mxu0 %v384
  %539 = vmatpush.msra.mxu0 %v380
  %540 = vmatpush.msra.mxu0 %v376
  %541 = vmatmul.f32.gmra.mxu0 %v120
  %v542 = vpop.f32.mrf.mxu0
  %v543 = vadd.f32 %v520, %v542
  %544 = vmatmul.f32.gmra.mxu0 %v123
  %v545 = vpop.f32.mrf.mxu0
  %v546 = vadd.f32 %v523, %v545
  %547 = vdwg.mxu0
  %548 = vmatpush.msra.mxu0 %v373
  %549 = vmatpush.msra.mxu0 %v369
  %550 = vmatpush.msra.mxu0 %v365
  %551 = vmatpush.msra.mxu0 %v361
  %552 = vmatpush.msra.mxu0 %v357
  %553 = vmatpush.msra.mxu0 %v353
  %554 = vmatpush.msra.mxu0 %v349
  %555 = vmatpush.msra.mxu0 %v345
  %556 = vmatpush.msra.mxu0 %v341
  %557 = vmatpush.msra.mxu0 %v337
  %558 = vmatpush.msra.mxu0 %v333
  %559 = vmatpush.msra.mxu0 %v329
  %560 = vmatpush.msra.mxu0 %v325
  %561 = vmatpush.msra.mxu0 %v321
  %562 = vmatpush.msra.mxu0 %v317
  %563 = vmatpush.msra.mxu0 %v313
  %564 = vmatmul.f32.gmra.mxu0 %v14
  %v565 = vpop.f32.mrf.mxu0
  %v566 = vadd.f32 0.0, %v565
  %567 = vmatmul.f32.gmra.mxu0 %v16
  %v568 = vpop.f32.mrf.mxu0
  %v569 = vadd.f32 0.0, %v568
  %570 = vdwg.mxu0
  %571 = vmatpush.msra.mxu0 0.0
  %572 = vmatpush.msra.mxu0 0.0
  %573 = vmatpush.msra.mxu0 0.0
  %574 = vmatpush.msra.mxu0 0.0
  %575 = vmatpush.msra.mxu0 0.0
  %576 = vmatpush.msra.mxu0 0.0
  %577 = vmatpush.msra.mxu0 0.0
  %578 = vmatpush.msra.mxu0 %v409
  %579 = vmatpush.msra.mxu0 %v405
  %580 = vmatpush.msra.mxu0 %v401
  %581 = vmatpush.msra.mxu0 %v397
  %582 = vmatpush.msra.mxu0 %v393
  %583 = vmatpush.msra.mxu0 %v389
  %584 = vmatpush.msra.mxu0 %v385
  %585 = vmatpush.msra.mxu0 %v381
  %586 = vmatpush.msra.mxu0 %v377
  %587 = vmatmul.f32.gmra.mxu0 %v120
  %v588 = vpop.f32.mrf.mxu0
  %v589 = vadd.f32 %v566, %v588
  %590 = vmatmul.f32.gmra.mxu0 %v123
  %v591 = vpop.f32.mrf.mxu0
  %v592 = vadd.f32 %v569, %v591
  %593 = vdwg.mxu0
  %v594 = vmax.f32 %v166, %v451
  %v595 = vmax.f32 %v212, %v497
  %v596 = vmax.f32 %v258, %v543
  %v597 = vmax.f32 %v304, %v589
  %v598 = vmax.f32 %v169, %v454
  %v599 = vmax.f32 %v215, %v500
  %v600 = vmax.f32 %v261, %v546
  %v601 = vmax.f32 %v307, %v592
  %s602 = scalar_lea.vmem %s0, 1600
  %v603 = vld [vmem:[%s602] sm:$0xff]
  %v604 = vld [vmem:[%s602 + $0x8] sm:$0xff]
  %v605 = vld [vmem:[%s602 + $0x10] sm:$0xff]
  %v606 = vld [vmem:[%s602 + $0x18] sm:$0xff]
  %v607 = vld [vmem:[%s602 + $0x20] sm:$0xff]
  %v608 = vld [vmem:[%s602 + $0x28] sm:$0xff]
  %v609 = vld [vmem:[%s602 + $0x30] sm:$0xff]
  %v610 = vld [vmem:[%s602 + $0x38] sm:$0xff]
  %v611 = vld [vmem:[%s602 + $0x40] sm:$0xff]
  %v612 = vld [vmem:[%s602 + $0x48] sm:$0xff]
  %v613 = vld [vmem:[%s602 + $0x50] sm:$0xff]
  %v614 = vld [vmem:[%s602 + $0x58] sm:$0xff]
  %v615 = vld [vmem:[%s602 + $0x60] sm:$0xff]
  %v616 = vld [vmem:[%s602 + $0x68] sm:$0xff]
  %v617 = vld [vmem:[%s602 + $0x70] sm:$0xff]
  %v618 = vld [vmem:[%s602 + $0x78] sm:$0xff]
  %v619 = vld [vmem:[%s602 + $0x80] sm:$0xff]
  %v620 = vld [vmem:[%s602 + $0x88] sm:$0xff]
  %v621 = vld [vmem:[%s602 + $0x90] sm:$0xff]
  %v622 = vld [vmem:[%s602 + $0x98] sm:$0xff]
  %v623 = vld [vmem:[%s602 + $0xa0] sm:$0xff]
  %v624 = vld [vmem:[%s602 + $0xa8] sm:$0xff]
  %v625 = vld [vmem:[%s602 + $0xb0] sm:$0xff]
  %v626 = vld [vmem:[%s602 + $0xb8] sm:$0xff]
  %v627 = vld [vmem:[%s602 + $0xc0] sm:$0xff]
  %v628 = vld [vmem:[%s602 + $0xc8] sm:$0xff]
  %v629 = vld [vmem:[%s602 + $0xd0] sm:$0xff]
  %v630 = vld [vmem:[%s602 + $0xd8] sm:$0xff]
  %v631 = vld [vmem:[%s602 + $0xe0] sm:$0xff]
  %v632 = vld [vmem:[%s602 + $0xe8] sm:$0xff]
  %v633 = vld [vmem:[%s602 + $0xf0] sm:$0xff]
  %v634 = vld [vmem:[%s602 + $0xf8] sm:$0xff]
  %v635 = vld [vmem:[%s602 + $0x100] sm:$0xff]
  %v636 = vld [vmem:[%s602 + $0x108] sm:$0xff]
  %v637 = vld [vmem:[%s602 + $0x110] sm:$0xff]
  %v638 = vld [vmem:[%s602 + $0x118] sm:$0xff]
  %v639 = vld [vmem:[%s602 + $0x120] sm:$0xff]
  %v640 = vld [vmem:[%s602 + $0x128] sm:$0xff]
  %v641 = vld [vmem:[%s602 + $0x130] sm:$0xff]
  %v642 = vld [vmem:[%s602 + $0x138] sm:$0xff]
  %v643 = vld [vmem:[%s602 + $0x140] sm:$0xff]
  %v644 = vld [vmem:[%s602 + $0x148] sm:$0xff]
  %v645 = vld [vmem:[%s602 + $0x150] sm:$0xff]
  %v646 = vld [vmem:[%s602 + $0x158] sm:$0xff]
  %v647 = vld [vmem:[%s602 + $0x160] sm:$0xff]
  %v648 = vld [vmem:[%s602 + $0x168] sm:$0xff]
  %v649 = vld [vmem:[%s602 + $0x170] sm:$0xff]
  %v650 = vld [vmem:[%s602 + $0x178] sm:$0xff]
  %v651 = vld [vmem:[%s602 + $0x180] sm:$0xff]
  %v652 = vld [vmem:[%s602 + $0x188] sm:$0xff]
  %v653 = vld [vmem:[%s602 + $0x190] sm:$0xff]
  %v654 = vld [vmem:[%s602 + $0x198] sm:$0xff]
  %v655 = vld [vmem:[%s602 + $0x1a0] sm:$0xff]
  %v656 = vld [vmem:[%s602 + $0x1a8] sm:$0xff]
  %v657 = vld [vmem:[%s602 + $0x1b0] sm:$0xff]
  %v658 = vld [vmem:[%s602 + $0x1b8] sm:$0xff]
  %v659 = vld [vmem:[%s602 + $0x1c0] sm:$0xff]
  %v660 = vld [vmem:[%s602 + $0x1c8] sm:$0xff]
  %v661 = vld [vmem:[%s602 + $0x1d0] sm:$0xff]
  %v662 = vld [vmem:[%s602 + $0x1d8] sm:$0xff]
  %v663 = vld [vmem:[%s602 + $0x1e0] sm:$0xff]
  %v664 = vld [vmem:[%s602 + $0x1e8] sm:$0xff]
  %v665 = vld [vmem:[%s602 + $0x1f0] sm:$0xff]
  %v666 = vld [vmem:[%s602 + $0x1f8] sm:$0xff]
  %v667 = vld [vmem:[%s602 + $0x200] sm:$0xff]
  %v668 = vld [vmem:[%s602 + $0x208] sm:$0xff]
  %v669 = vld [vmem:[%s602 + $0x210] sm:$0xff]
  %v670 = vld [vmem:[%s602 + $0x218] sm:$0xff]
  %v671 = vld [vmem:[%s602 + $0x220] sm:$0xff]
  %v672 = vld [vmem:[%s602 + $0x228] sm:$0xff]
  %v673 = vld [vmem:[%s602 + $0x230] sm:$0xff]
  %v674 = vld [vmem:[%s602 + $0x238] sm:$0xff]
  %v675 = vld [vmem:[%s602 + $0x240] sm:$0xff]
  %v676 = vld [vmem:[%s602 + $0x248] sm:$0xff]
  %v677 = vld [vmem:[%s602 + $0x250] sm:$0xff]
  %v678 = vld [vmem:[%s602 + $0x258] sm:$0xff]
  %v679 = vld [vmem:[%s602 + $0x260] sm:$0xff]
  %v680 = vld [vmem:[%s602 + $0x268] sm:$0xff]
  %v681 = vld [vmem:[%s602 + $0x270] sm:$0xff]
  %v682 = vld [vmem:[%s602 + $0x278] sm:$0xff]
  %v683 = vld [vmem:[%s602 + $0x280] sm:$0xff]
  %v684 = vld [vmem:[%s602 + $0x288] sm:$0xff]
  %v685 = vld [vmem:[%s602 + $0x290] sm:$0xff]
  %v686 = vld [vmem:[%s602 + $0x298] sm:$0xff]
  %v687 = vld [vmem:[%s602 + $0x2a0] sm:$0xff]
  %v688 = vld [vmem:[%s602 + $0x2a8] sm:$0xff]
  %v689 = vld [vmem:[%s602 + $0x2b0] sm:$0xff]
  %v690 = vld [vmem:[%s602 + $0x2b8] sm:$0xff]
  %v691 = vld [vmem:[%s602 + $0x2c0] sm:$0xff]
  %v692 = vld [vmem:[%s602 + $0x2c8] sm:$0xff]
  %v693 = vld [vmem:[%s602 + $0x2d0] sm:$0xff]
  %v694 = vld [vmem:[%s602 + $0x2d8] sm:$0xff]
  %v695 = vld [vmem:[%s602 + $0x2e0] sm:$0xff]
  %v696 = vld [vmem:[%s602 + $0x2e8] sm:$0xff]
  %v697 = vld [vmem:[%s602 + $0x2f0] sm:$0xff]
  %v698 = vld [vmem:[%s602 + $0x2f8] sm:$0xff]
  %v699 = vld [vmem:[%s602 + $0x300] sm:$0xff]
  %v700 = vld [vmem:[%s602 + $0x308] sm:$0xff]
  %v701 = vld [vmem:[%s602 + $0x310] sm:$0xff]
  %v702 = vld [vmem:[%s602 + $0x318] sm:$0xff]
  %703 = vmatpush.msra.mxu0 %v663
  %704 = vmatpush.msra.mxu0 %v659
  %705 = vmatpush.msra.mxu0 %v655
  %706 = vmatpush.msra.mxu0 %v651
  %707 = vmatpush.msra.mxu0 %v647
  %708 = vmatpush.msra.mxu0 %v643
  %709 = vmatpush.msra.mxu0 %v639
  %710 = vmatpush.msra.mxu0 %v635
  %711 = vmatpush.msra.mxu0 %v631
  %712 = vmatpush.msra.mxu0 %v627
  %713 = vmatpush.msra.mxu0 %v623
  %714 = vmatpush.msra.mxu0 %v619
  %715 = vmatpush.msra.mxu0 %v615
  %716 = vmatpush.msra.mxu0 %v611
  %717 = vmatpush.msra.mxu0 %v607
  %718 = vmatpush.msra.mxu0 %v603
  %719 = vmatmul.f32.gmra.mxu0 %v14
  %v720 = vpop.f32.mrf.mxu0
  %v721 = vadd.f32 0.0, %v720
  %722 = vmatmul.f32.gmra.mxu0 %v16
  %v723 = vpop.f32.mrf.mxu0
  %v724 = vadd.f32 0.0, %v723
  %725 = vdwg.mxu0
  %726 = vmatpush.msra.mxu0 0.0
  %727 = vmatpush.msra.mxu0 0.0
  %728 = vmatpush.msra.mxu0 0.0
  %729 = vmatpush.msra.mxu0 0.0
  %730 = vmatpush.msra.mxu0 0.0
  %731 = vmatpush.msra.mxu0 0.0
  %732 = vmatpush.msra.mxu0 0.0
  %733 = vmatpush.msra.mxu0 %v699
  %734 = vmatpush.msra.mxu0 %v695
  %735 = vmatpush.msra.mxu0 %v691
  %736 = vmatpush.msra.mxu0 %v687
  %737 = vmatpush.msra.mxu0 %v683
  %738 = vmatpush.msra.mxu0 %v679
  %739 = vmatpush.msra.mxu0 %v675
  %740 = vmatpush.msra.mxu0 %v671
  %741 = vmatpush.msra.mxu0 %v667
  %742 = vmatmul.f32.gmra.mxu0 %v120
  %v743 = vpop.f32.mrf.mxu0
  %v744 = vadd.f32 %v721, %v743
  %745 = vmatmul.f32.gmra.mxu0 %v123
  %v746 = vpop.f32.mrf.mxu0
  %v747 = vadd.f32 %v724, %v746
  %748 = vdwg.mxu0
  %749 = vmatpush.msra.mxu0 %v664
  %750 = vmatpush.msra.mxu0 %v660
  %751 = vmatpush.msra.mxu0 %v656
  %752 = vmatpush.msra.mxu0 %v652
  %753 = vmatpush.msra.mxu0 %v648
  %754 = vmatpush.msra.mxu0 %v644
  %755 = vmatpush.msra.mxu0 %v640
  %756 = vmatpush.msra.mxu0 %v636
  %757 = vmatpush.msra.mxu0 %v632
  %758 = vmatpush.msra.mxu0 %v628
  %759 = vmatpush.msra.mxu0 %v624
  %760 = vmatpush.msra.mxu0 %v620
  %761 = vmatpush.msra.mxu0 %v616
  %762 = vmatpush.msra.mxu0 %v612
  %763 = vmatpush.msra.mxu0 %v608
  %764 = vmatpush.msra.mxu0 %v604
  %765 = vmatmul.f32.gmra.mxu0 %v14
  %v766 = vpop.f32.mrf.mxu0
  %v767 = vadd.f32 0.0, %v766
  %768 = vmatmul.f32.gmra.mxu0 %v16
  %v769 = vpop.f32.mrf.mxu0
  %v770 = vadd.f32 0.0, %v769
  %771 = vdwg.mxu0
  %772 = vmatpush.msra.mxu0 0.0
  %773 = vmatpush.msra.mxu0 0.0
  %774 = vmatpush.msra.mxu0 0.0
  %775 = vmatpush.msra.mxu0 0.0
  %776 = vmatpush.msra.mxu0 0.0
  %777 = vmatpush.msra.mxu0 0.0
  %778 = vmatpush.msra.mxu0 0.0
  %779 = vmatpush.msra.mxu0 %v700
  %780 = vmatpush.msra.mxu0 %v696
  %781 = vmatpush.msra.mxu0 %v692
  %782 = vmatpush.msra.mxu0 %v688
  %783 = vmatpush.msra.mxu0 %v684
  %784 = vmatpush.msra.mxu0 %v680
  %785 = vmatpush.msra.mxu0 %v676
  %786 = vmatpush.msra.mxu0 %v672
  %787 = vmatpush.msra.mxu0 %v668
  %788 = vmatmul.f32.gmra.mxu0 %v120
  %v789 = vpop.f32.mrf.mxu0
  %v790 = vadd.f32 %v767, %v789
  %791 = vmatmul.f32.gmra.mxu0 %v123
  %v792 = vpop.f32.mrf.mxu0
  %v793 = vadd.f32 %v770, %v792
  %794 = vdwg.mxu0
  %795 = vmatpush.msra.mxu0 %v665
  %796 = vmatpush.msra.mxu0 %v661
  %797 = vmatpush.msra.mxu0 %v657
  %798 = vmatpush.msra.mxu0 %v653
  %799 = vmatpush.msra.mxu0 %v649
  %800 = vmatpush.msra.mxu0 %v645
  %801 = vmatpush.msra.mxu0 %v641
  %802 = vmatpush.msra.mxu0 %v637
  %803 = vmatpush.msra.mxu0 %v633
  %804 = vmatpush.msra.mxu0 %v629
  %805 = vmatpush.msra.mxu0 %v625
  %806 = vmatpush.msra.mxu0 %v621
  %807 = vmatpush.msra.mxu0 %v617
  %808 = vmatpush.msra.mxu0 %v613
  %809 = vmatpush.msra.mxu0 %v609
  %810 = vmatpush.msra.mxu0 %v605
  %811 = vmatmul.f32.gmra.mxu0 %v14
  %v812 = vpop.f32.mrf.mxu0
  %v813 = vadd.f32 0.0, %v812
  %814 = vmatmul.f32.gmra.mxu0 %v16
  %v815 = vpop.f32.mrf.mxu0
  %v816 = vadd.f32 0.0, %v815
  %817 = vdwg.mxu0
  %818 = vmatpush.msra.mxu0 0.0
  %819 = vmatpush.msra.mxu0 0.0
  %820 = vmatpush.msra.mxu0 0.0
  %821 = vmatpush.msra.mxu0 0.0
  %822 = vmatpush.msra.mxu0 0.0
  %823 = vmatpush.msra.mxu0 0.0
  %824 = vmatpush.msra.mxu0 0.0
  %825 = vmatpush.msra.mxu0 %v701
  %826 = vmatpush.msra.mxu0 %v697
  %827 = vmatpush.msra.mxu0 %v693
  %828 = vmatpush.msra.mxu0 %v689
  %829 = vmatpush.msra.mxu0 %v685
  %830 = vmatpush.msra.mxu0 %v681
  %831 = vmatpush.msra.mxu0 %v677
  %832 = vmatpush.msra.mxu0 %v673
  %833 = vmatpush.msra.mxu0 %v669
  %834 = vmatmul.f32.gmra.mxu0 %v120
  %v835 = vpop.f32.mrf.mxu0
  %v836 = vadd.f32 %v813, %v835
  %837 = vmatmul.f32.gmra.mxu0 %v123
  %v838 = vpop.f32.mrf.mxu0
  %v839 = vadd.f32 %v816, %v838
  %840 = vdwg.mxu0
  %841 = vmatpush.msra.mxu0 %v666
  %842 = vmatpush.msra.mxu0 %v662
  %843 = vmatpush.msra.mxu0 %v658
  %844 = vmatpush.msra.mxu0 %v654
  %845 = vmatpush.msra.mxu0 %v650
  %846 = vmatpush.msra.mxu0 %v646
  %847 = vmatpush.msra.mxu0 %v642
  %848 = vmatpush.msra.mxu0 %v638
  %849 = vmatpush.msra.mxu0 %v634
  %850 = vmatpush.msra.mxu0 %v630
  %851 = vmatpush.msra.mxu0 %v626
  %852 = vmatpush.msra.mxu0 %v622
  %853 = vmatpush.msra.mxu0 %v618
  %854 = vmatpush.msra.mxu0 %v614
  %855 = vmatpush.msra.mxu0 %v610
  %856 = vmatpush.msra.mxu0 %v606
  %857 = vmatmul.f32.gmra.mxu0 %v14
  %v858 = vpop.f32.mrf.mxu0
  %v859 = vadd.f32 0.0, %v858
  %860 = vmatmul.f32.gmra.mxu0 %v16
  %v861 = vpop.f32.mrf.mxu0
  %v862 = vadd.f32 0.0, %v861
  %863 = vdwg.mxu0
  %864 = vmatpush.msra.mxu0 0.0
  %865 = vmatpush.msra.mxu0 0.0
  %866 = vmatpush.msra.mxu0 0.0
  %867 = vmatpush.msra.mxu0 0.0
  %868 = vmatpush.msra.mxu0 0.0
  %869 = vmatpush.msra.mxu0 0.0
  %870 = vmatpush.msra.mxu0 0.0
  %871 = vmatpush.msra.mxu0 %v702
  %872 = vmatpush.msra.mxu0 %v698
  %873 = vmatpush.msra.mxu0 %v694
  %874 = vmatpush.msra.mxu0 %v690
  %875 = vmatpush.msra.mxu0 %v686
  %876 = vmatpush.msra.mxu0 %v682
  %877 = vmatpush.msra.mxu0 %v678
  %878 = vmatpush.msra.mxu0 %v674
  %879 = vmatpush.msra.mxu0 %v670
  %880 = vmatmul.f32.gmra.mxu0 %v120
  %v881 = vpop.f32.mrf.mxu0
  %v882 = vadd.f32 %v859, %v881
  %883 = vmatmul.f32.gmra.mxu0 %v123
  %v884 = vpop.f32.mrf.mxu0
  %v885 = vadd.f32 %v862, %v884
  %886 = vdwg.mxu0
  %v887 = vmax.f32 %v594, %v744
  %v888 = vmax.f32 %v595, %v790
  %v889 = vmax.f32 %v596, %v836
  %v890 = vmax.f32 %v597, %v882
  %v891 = vmax.f32 %v598, %v747
  %v892 = vmax.f32 %v599, %v793
  %v893 = vmax.f32 %v600, %v839
  %v894 = vmax.f32 %v601, %v885
  %s895 = scalar_lea.vmem %s0, 2400
  %v896 = vld [vmem:[%s895] sm:$0xff]
  %v897 = vld [vmem:[%s895 + $0x8] sm:$0xff]
  %v898 = vld [vmem:[%s895 + $0x10] sm:$0xff]
  %v899 = vld [vmem:[%s895 + $0x18] sm:$0xff]
  %v900 = vld [vmem:[%s895 + $0x20] sm:$0xff]
  %v901 = vld [vmem:[%s895 + $0x28] sm:$0xff]
  %v902 = vld [vmem:[%s895 + $0x30] sm:$0xff]
  %v903 = vld [vmem:[%s895 + $0x38] sm:$0xff]
  %v904 = vld [vmem:[%s895 + $0x40] sm:$0xff]
  %v905 = vld [vmem:[%s895 + $0x48] sm:$0xff]
  %v906 = vld [vmem:[%s895 + $0x50] sm:$0xff]
  %v907 = vld [vmem:[%s895 + $0x58] sm:$0xff]
  %v908 = vld [vmem:[%s895 + $0x60] sm:$0xff]
  %v909 = vld [vmem:[%s895 + $0x68] sm:$0xff]
  %v910 = vld [vmem:[%s895 + $0x70] sm:$0xff]
  %v911 = vld [vmem:[%s895 + $0x78] sm:$0xff]
  %v912 = vld [vmem:[%s895 + $0x80] sm:$0xff]
  %v913 = vld [vmem:[%s895 + $0x88] sm:$0xff]
  %v914 = vld [vmem:[%s895 + $0x90] sm:$0xff]
  %v915 = vld [vmem:[%s895 + $0x98] sm:$0xff]
  %v916 = vld [vmem:[%s895 + $0xa0] sm:$0xff]
  %v917 = vld [vmem:[%s895 + $0xa8] sm:$0xff]
  %v918 = vld [vmem:[%s895 + $0xb0] sm:$0xff]
  %v919 = vld [vmem:[%s895 + $0xb8] sm:$0xff]
  %v920 = vld [vmem:[%s895 + $0xc0] sm:$0xff]
  %v921 = vld [vmem:[%s895 + $0xc8] sm:$0xff]
  %v922 = vld [vmem:[%s895 + $0xd0] sm:$0xff]
  %v923 = vld [vmem:[%s895 + $0xd8] sm:$0xff]
  %v924 = vld [vmem:[%s895 + $0xe0] sm:$0xff]
  %v925 = vld [vmem:[%s895 + $0xe8] sm:$0xff]
  %v926 = vld [vmem:[%s895 + $0xf0] sm:$0xff]
  %v927 = vld [vmem:[%s895 + $0xf8] sm:$0xff]
  %v928 = vld [vmem:[%s895 + $0x100] sm:$0xff]
  %v929 = vld [vmem:[%s895 + $0x108] sm:$0xff]
  %v930 = vld [vmem:[%s895 + $0x110] sm:$0xff]
  %v931 = vld [vmem:[%s895 + $0x118] sm:$0xff]
  %v932 = vld [vmem:[%s895 + $0x120] sm:$0xff]
  %v933 = vld [vmem:[%s895 + $0x128] sm:$0xff]
  %v934 = vld [vmem:[%s895 + $0x130] sm:$0xff]
  %v935 = vld [vmem:[%s895 + $0x138] sm:$0xff]
  %v936 = vld [vmem:[%s895 + $0x140] sm:$0xff]
  %v937 = vld [vmem:[%s895 + $0x148] sm:$0xff]
  %v938 = vld [vmem:[%s895 + $0x150] sm:$0xff]
  %v939 = vld [vmem:[%s895 + $0x158] sm:$0xff]
  %v940 = vld [vmem:[%s895 + $0x160] sm:$0xff]
  %v941 = vld [vmem:[%s895 + $0x168] sm:$0xff]
  %v942 = vld [vmem:[%s895 + $0x170] sm:$0xff]
  %v943 = vld [vmem:[%s895 + $0x178] sm:$0xff]
  %v944 = vld [vmem:[%s895 + $0x180] sm:$0xff]
  %v945 = vld [vmem:[%s895 + $0x188] sm:$0xff]
  %v946 = vld [vmem:[%s895 + $0x190] sm:$0xff]
  %v947 = vld [vmem:[%s895 + $0x198] sm:$0xff]
  %v948 = vld [vmem:[%s895 + $0x1a0] sm:$0xff]
  %v949 = vld [vmem:[%s895 + $0x1a8] sm:$0xff]
  %v950 = vld [vmem:[%s895 + $0x1b0] sm:$0xff]
  %v951 = vld [vmem:[%s895 + $0x1b8] sm:$0xff]
  %v952 = vld [vmem:[%s895 + $0x1c0] sm:$0xff]
  %v953 = vld [vmem:[%s895 + $0x1c8] sm:$0xff]
  %v954 = vld [vmem:[%s895 + $0x1d0] sm:$0xff]
  %v955 = vld [vmem:[%s895 + $0x1d8] sm:$0xff]
  %v956 = vld [vmem:[%s895 + $0x1e0] sm:$0xff]
  %v957 = vld [vmem:[%s895 + $0x1e8] sm:$0xff]
  %v958 = vld [vmem:[%s895 + $0x1f0] sm:$0xff]
  %v959 = vld [vmem:[%s895 + $0x1f8] sm:$0xff]
  %v960 = vld [vmem:[%s895 + $0x200] sm:$0xff]
  %v961 = vld [vmem:[%s895 + $0x208] sm:$0xff]
  %v962 = vld [vmem:[%s895 + $0x210] sm:$0xff]
  %v963 = vld [vmem:[%s895 + $0x218] sm:$0xff]
  %v964 = vld [vmem:[%s895 + $0x220] sm:$0xff]
  %v965 = vld [vmem:[%s895 + $0x228] sm:$0xff]
  %v966 = vld [vmem:[%s895 + $0x230] sm:$0xff]
  %v967 = vld [vmem:[%s895 + $0x238] sm:$0xff]
  %v968 = vld [vmem:[%s895 + $0x240] sm:$0xff]
  %v969 = vld [vmem:[%s895 + $0x248] sm:$0xff]
  %v970 = vld [vmem:[%s895 + $0x250] sm:$0xff]
  %v971 = vld [vmem:[%s895 + $0x258] sm:$0xff]
  %v972 = vld [vmem:[%s895 + $0x260] sm:$0xff]
  %v973 = vld [vmem:[%s895 + $0x268] sm:$0xff]
  %v974 = vld [vmem:[%s895 + $0x270] sm:$0xff]
  %v975 = vld [vmem:[%s895 + $0x278] sm:$0xff]
  %v976 = vld [vmem:[%s895 + $0x280] sm:$0xff]
  %v977 = vld [vmem:[%s895 + $0x288] sm:$0xff]
  %v978 = vld [vmem:[%s895 + $0x290] sm:$0xff]
  %v979 = vld [vmem:[%s895 + $0x298] sm:$0xff]
  %v980 = vld [vmem:[%s895 + $0x2a0] sm:$0xff]
  %v981 = vld [vmem:[%s895 + $0x2a8] sm:$0xff]
  %v982 = vld [vmem:[%s895 + $0x2b0] sm:$0xff]
  %v983 = vld [vmem:[%s895 + $0x2b8] sm:$0xff]
  %v984 = vld [vmem:[%s895 + $0x2c0] sm:$0xff]
  %v985 = vld [vmem:[%s895 + $0x2c8] sm:$0xff]
  %v986 = vld [vmem:[%s895 + $0x2d0] sm:$0xff]
  %v987 = vld [vmem:[%s895 + $0x2d8] sm:$0xff]
  %v988 = vld [vmem:[%s895 + $0x2e0] sm:$0xff]
  %v989 = vld [vmem:[%s895 + $0x2e8] sm:$0xff]
  %v990 = vld [vmem:[%s895 + $0x2f0] sm:$0xff]
  %v991 = vld [vmem:[%s895 + $0x2f8] sm:$0xff]
  %v992 = vld [vmem:[%s895 + $0x300] sm:$0xff]
  %v993 = vld [vmem:[%s895 + $0x308] sm:$0xff]
  %v994 = vld [vmem:[%s895 + $0x310] sm:$0xff]
  %v995 = vld [vmem:[%s895 + $0x318] sm:$0xff]
  %996 = vmatpush.msra.mxu0 %v956
  %997 = vmatpush.msra.mxu0 %v952
  %998 = vmatpush.msra.mxu0 %v948
  %999 = vmatpush.msra.mxu0 %v944
  %1000 = vmatpush.msra.mxu0 %v940
  %1001 = vmatpush.msra.mxu0 %v936
  %1002 = vmatpush.msra.mxu0 %v932
  %1003 = vmatpush.msra.mxu0 %v928
  %1004 = vmatpush.msra.mxu0 %v924
  %1005 = vmatpush.msra.mxu0 %v920
  %1006 = vmatpush.msra.mxu0 %v916
  %1007 = vmatpush.msra.mxu0 %v912
  %1008 = vmatpush.msra.mxu0 %v908
  %1009 = vmatpush.msra.mxu0 %v904
  %1010 = vmatpush.msra.mxu0 %v900
  %1011 = vmatpush.msra.mxu0 %v896
  %1012 = vmatmul.f32.gmra.mxu0 %v14
  %v1013 = vpop.f32.mrf.mxu0
  %v1014 = vadd.f32 0.0, %v1013
  %1015 = vmatmul.f32.gmra.mxu0 %v16
  %v1016 = vpop.f32.mrf.mxu0
  %v1017 = vadd.f32 0.0, %v1016
  %1018 = vdwg.mxu0
  %1019 = vmatpush.msra.mxu0 0.0
  %1020 = vmatpush.msra.mxu0 0.0
  %1021 = vmatpush.msra.mxu0 0.0
  %1022 = vmatpush.msra.mxu0 0.0
  %1023 = vmatpush.msra.mxu0 0.0
  %1024 = vmatpush.msra.mxu0 0.0
  %1025 = vmatpush.msra.mxu0 0.0
  %1026 = vmatpush.msra.mxu0 %v992
  %1027 = vmatpush.msra.mxu0 %v988
  %1028 = vmatpush.msra.mxu0 %v984
  %1029 = vmatpush.msra.mxu0 %v980
  %1030 = vmatpush.msra.mxu0 %v976
  %1031 = vmatpush.msra.mxu0 %v972
  %1032 = vmatpush.msra.mxu0 %v968
  %1033 = vmatpush.msra.mxu0 %v964
  %1034 = vmatpush.msra.mxu0 %v960
  %1035 = vmatmul.f32.gmra.mxu0 %v120
  %v1036 = vpop.f32.mrf.mxu0
  %v1037 = vadd.f32 %v1014, %v1036
  %1038 = vmatmul.f32.gmra.mxu0 %v123
  %v1039 = vpop.f32.mrf.mxu0
  %v1040 = vadd.f32 %v1017, %v1039
  %1041 = vdwg.mxu0
  %1042 = vmatpush.msra.mxu0 %v957
  %1043 = vmatpush.msra.mxu0 %v953
  %1044 = vmatpush.msra.mxu0 %v949
  %1045 = vmatpush.msra.mxu0 %v945
  %1046 = vmatpush.msra.mxu0 %v941
  %1047 = vmatpush.msra.mxu0 %v937
  %1048 = vmatpush.msra.mxu0 %v933
  %1049 = vmatpush.msra.mxu0 %v929
  %1050 = vmatpush.msra.mxu0 %v925
  %1051 = vmatpush.msra.mxu0 %v921
  %1052 = vmatpush.msra.mxu0 %v917
  %1053 = vmatpush.msra.mxu0 %v913
  %1054 = vmatpush.msra.mxu0 %v909
  %1055 = vmatpush.msra.mxu0 %v905
  %1056 = vmatpush.msra.mxu0 %v901
  %1057 = vmatpush.msra.mxu0 %v897
  %1058 = vmatmul.f32.gmra.mxu0 %v14
  %v1059 = vpop.f32.mrf.mxu0
  %v1060 = vadd.f32 0.0, %v1059
  %1061 = vmatmul.f32.gmra.mxu0 %v16
  %v1062 = vpop.f32.mrf.mxu0
  %v1063 = vadd.f32 0.0, %v1062
  %1064 = vdwg.mxu0
  %1065 = vmatpush.msra.mxu0 0.0
  %1066 = vmatpush.msra.mxu0 0.0
  %1067 = vmatpush.msra.mxu0 0.0
  %1068 = vmatpush.msra.mxu0 0.0
  %1069 = vmatpush.msra.mxu0 0.0
  %1070 = vmatpush.msra.mxu0 0.0
  %1071 = vmatpush.msra.mxu0 0.0
  %1072 = vmatpush.msra.mxu0 %v993
  %1073 = vmatpush.msra.mxu0 %v989
  %1074 = vmatpush.msra.mxu0 %v985
  %1075 = vmatpush.msra.mxu0 %v981
  %1076 = vmatpush.msra.mxu0 %v977
  %1077 = vmatpush.msra.mxu0 %v973
  %1078 = vmatpush.msra.mxu0 %v969
  %1079 = vmatpush.msra.mxu0 %v965
  %1080 = vmatpush.msra.mxu0 %v961
  %1081 = vmatmul.f32.gmra.mxu0 %v120
  %v1082 = vpop.f32.mrf.mxu0
  %v1083 = vadd.f32 %v1060, %v1082
  %1084 = vmatmul.f32.gmra.mxu0 %v123
  %v1085 = vpop.f32.mrf.mxu0
  %v1086 = vadd.f32 %v1063, %v1085
  %1087 = vdwg.mxu0
  %1088 = vmatpush.msra.mxu0 %v958
  %1089 = vmatpush.msra.mxu0 %v954
  %1090 = vmatpush.msra.mxu0 %v950
  %1091 = vmatpush.msra.mxu0 %v946
  %1092 = vmatpush.msra.mxu0 %v942
  %1093 = vmatpush.msra.mxu0 %v938
  %1094 = vmatpush.msra.mxu0 %v934
  %1095 = vmatpush.msra.mxu0 %v930
  %1096 = vmatpush.msra.mxu0 %v926
  %1097 = vmatpush.msra.mxu0 %v922
  %1098 = vmatpush.msra.mxu0 %v918
  %1099 = vmatpush.msra.mxu0 %v914
  %1100 = vmatpush.msra.mxu0 %v910
  %1101 = vmatpush.msra.mxu0 %v906
  %1102 = vmatpush.msra.mxu0 %v902
  %1103 = vmatpush.msra.mxu0 %v898
  %1104 = vmatmul.f32.gmra.mxu0 %v14
  %v1105 = vpop.f32.mrf.mxu0
  %v1106 = vadd.f32 0.0, %v1105
  %1107 = vmatmul.f32.gmra.mxu0 %v16
  %v1108 = vpop.f32.mrf.mxu0
  %v1109 = vadd.f32 0.0, %v1108
  %1110 = vdwg.mxu0
  %1111 = vmatpush.msra.mxu0 0.0
  %1112 = vmatpush.msra.mxu0 0.0
  %1113 = vmatpush.msra.mxu0 0.0
  %1114 = vmatpush.msra.mxu0 0.0
  %1115 = vmatpush.msra.mxu0 0.0
  %1116 = vmatpush.msra.mxu0 0.0
  %1117 = vmatpush.msra.mxu0 0.0
  %1118 = vmatpush.msra.mxu0 %v994
  %1119 = vmatpush.msra.mxu0 %v990
  %1120 = vmatpush.msra.mxu0 %v986
  %1121 = vmatpush.msra.mxu0 %v982
  %1122 = vmatpush.msra.mxu0 %v978
  %1123 = vmatpush.msra.mxu0 %v974
  %1124 = vmatpush.msra.mxu0 %v970
  %1125 = vmatpush.msra.mxu0 %v966
  %1126 = vmatpush.msra.mxu0 %v962
  %1127 = vmatmul.f32.gmra.mxu0 %v120
  %v1128 = vpop.f32.mrf.mxu0
  %v1129 = vadd.f32 %v1106, %v1128
  %1130 = vmatmul.f32.gmra.mxu0 %v123
  %v1131 = vpop.f32.mrf.mxu0
  %v1132 = vadd.f32 %v1109, %v1131
  %1133 = vdwg.mxu0
  %1134 = vmatpush.msra.mxu0 %v959
  %1135 = vmatpush.msra.mxu0 %v955
  %1136 = vmatpush.msra.mxu0 %v951
  %1137 = vmatpush.msra.mxu0 %v947
  %1138 = vmatpush.msra.mxu0 %v943
  %1139 = vmatpush.msra.mxu0 %v939
  %1140 = vmatpush.msra.mxu0 %v935
  %1141 = vmatpush.msra.mxu0 %v931
  %1142 = vmatpush.msra.mxu0 %v927
  %1143 = vmatpush.msra.mxu0 %v923
  %1144 = vmatpush.msra.mxu0 %v919
  %1145 = vmatpush.msra.mxu0 %v915
  %1146 = vmatpush.msra.mxu0 %v911
  %1147 = vmatpush.msra.mxu0 %v907
  %1148 = vmatpush.msra.mxu0 %v903
  %1149 = vmatpush.msra.mxu0 %v899
  %1150 = vmatmul.f32.gmra.mxu0 %v14
  %v1151 = vpop.f32.mrf.mxu0
  %v1152 = vadd.f32 0.0, %v1151
  %1153 = vmatmul.f32.gmra.mxu0 %v16
  %v1154 = vpop.f32.mrf.mxu0
  %v1155 = vadd.f32 0.0, %v1154
  %1156 = vdwg.mxu0
  %1157 = vmatpush.msra.mxu0 0.0
  %1158 = vmatpush.msra.mxu0 0.0
  %1159 = vmatpush.msra.mxu0 0.0
  %1160 = vmatpush.msra.mxu0 0.0
  %1161 = vmatpush.msra.mxu0 0.0
  %1162 = vmatpush.msra.mxu0 0.0
  %1163 = vmatpush.msra.mxu0 0.0
  %1164 = vmatpush.msra.mxu0 %v995
  %1165 = vmatpush.msra.mxu0 %v991
  %1166 = vmatpush.msra.mxu0 %v987
  %1167 = vmatpush.msra.mxu0 %v983
  %1168 = vmatpush.msra.mxu0 %v979
  %1169 = vmatpush.msra.mxu0 %v975
  %1170 = vmatpush.msra.mxu0 %v971
  %1171 = vmatpush.msra.mxu0 %v967
  %1172 = vmatpush.msra.mxu0 %v963
  %1173 = vmatmul.f32.gmra.mxu0 %v120
  %v1174 = vpop.f32.mrf.mxu0
  %v1175 = vadd.f32 %v1152, %v1174
  %1176 = vmatmul.f32.gmra.mxu0 %v123
  %v1177 = vpop.f32.mrf.mxu0
  %v1178 = vadd.f32 %v1155, %v1177
  %1179 = vdwg.mxu0
  %v1180 = vmax.f32 %v887, %v1037
  %v1181 = vmax.f32 %v888, %v1083
  %v1182 = vmax.f32 %v889, %v1129
  %v1183 = vmax.f32 %v890, %v1175
  %v1184 = vmax.f32 %v891, %v1040
  %v1185 = vmax.f32 %v892, %v1086
  %v1186 = vmax.f32 %v893, %v1132
  %v1187 = vmax.f32 %v894, %v1178
  %v1188 = vld [vmem:[%s2] sm:$0xff]
  %v1189 = vld [vmem:[%s2 + $0x8] sm:$0xff]
  %1191 = vset.pattern.permute.xlu0 0
  %1192 = vperm.xlu0 %1191, %v1188
  %v1193 = vpop.permute.xlu0 %1192
  %1196 = vset.pattern.permute.xlu0 0
  %1197 = vperm.xlu0 %1196, %v1189
  %v1198 = vpop.permute.xlu0 %1197
  %v1200 = vadd.f32 %v1180, %v1193
  %v1201 = vadd.f32 %v1181, %v1193
  %v1202 = vadd.f32 %v1182, %v1193
  %v1203 = vadd.f32 %v1183, %v1193
  %v1204 = vadd.f32 %v1184, %v1198
  %v1205 = vadd.f32 %v1185, %v1198
  %v1206 = vadd.f32 %v1186, %v1198
  %v1207 = vadd.f32 %v1187, %v1198
  %v1208 = vmax.f32 %v1200, 0.0
  %v1209 = vmax.f32 %v1201, 0.0
  %v1210 = vmax.f32 %v1202, 0.0
  %v1211 = vmax.f32 %v1203, 0.0
  %v1212 = vmax.f32 %v1204, 0.0
  %v1213 = vmax.f32 %v1205, 0.0
  %v1214 = vmax.f32 %v1206, 0.0
  %v1215 = vmax.f32 %v1207, 0.0
  %1216 = vst [vmem:[%s3] sm:$0xff] %v1208
  %1217 = vst [vmem:[%s3 + $0x8] sm:$0xff] %v1209
  %1218 = vst [vmem:[%s3 + $0x10] sm:$0xff] %v1210
  %vm1219 = vcmask 64512
  %1220 = vst.msk [vmem:[%s3 + $0x18] sm:$0xff] %vm1219, %v1211
  %1221 = vst [vmem:[%s3 + $0x20] sm:$0xff] %v1212
  %1222 = vst [vmem:[%s3 + $0x28] sm:$0xff] %v1213
  %1223 = vst [vmem:[%s3 + $0x30] sm:$0xff] %v1214
  %1224 = vst.msk [vmem:[%s3 + $0x38] sm:$0xff] %vm1219, %v1215
  // Predicated region
  $region14: #{model_forward.4} parent=0 // pred_check
    _
  $region15: #{model_forward.4} parent=0 // pred_check_branch
    %1226 = sbr.rel (0) target = $region17
  $region16: #{model_forward.4} parent=0 // pred_region
    _
  $region17: #{model_forward.4} parent=0 // pred_fallthru
    _
  // Predicated region
  $region18: #{model_forward.4} parent=0 // pred_check
    _
  $region19: #{model_forward.4} parent=0 // pred_check_branch
    %1228 = sbr.rel (0) target = $region21
  $region20: #{model_forward.4} parent=0 // pred_region
    _
  $region21: #{model_forward.4} parent=0 // pred_fallthru
    _

// kernel: model_forward.5
$region0: #{model_forward.5}
  #allocation0 [shape = 'u32[]', space=smem, size = 0x4, offset = 0x4, fixed_abs, tag = 'smem constant byte address 0x4 - core index']
  #allocation1 [shape = 'u32[72,128]{1,0:T(1,128)}', space=vmem, size = 0x9000, scoped, tag = 'internal scratch']
  %s0 = inlined_call_operand.vmem [shape: f32[784,8], index: 0, kind: input, shape index: {}]
  %s1 = inlined_call_operand.vmem [shape: f32[32,784], index: 1, kind: input, shape index: {}]
  %s2 = inlined_call_operand.vmem [shape: f32[32,1], index: 2, kind: input, shape index: {}]
  %s3 = inlined_call_operand.vmem [shape: f32[10,32], index: 3, kind: input, shape index: {}]
  %s4 = inlined_call_operand.vmem [shape: f32[10,1], index: 4, kind: input, shape index: {}]
  %s5 = inlined_call_operand.vmem [shape: f32[10,8], index: 5, kind: output, shape index: {}]
  %s6 = sld [smem:[#allocation0]]
  $region30: #{model_forward.5} parent=0
    _
  %s8 = ssub.s32 1, %s6
  %s9 = scalar_select 0, %s8, %s6
  // Predicated region
  $region2: #{model_forward.5} parent=0 // pred_check
    _
  $region3: #{model_forward.5} parent=0 // pred_check_branch
    %11 = sbr.rel (0) target = $region5
  $region4: #{model_forward.5} parent=0 // pred_region
    _
  $region5: #{model_forward.5} parent=0 // pred_fallthru
    _
  // Predicated region
  $region6: #{model_forward.5} parent=0 // pred_check
    _
  $region7: #{model_forward.5} parent=0 // pred_check_branch
    %13 = sbr.rel (0) target = $region9
  $region8: #{model_forward.5} parent=0 // pred_region
    _
  $region9: #{model_forward.5} parent=0 // pred_fallthru
    _
  // Predicated region
  $region10: #{model_forward.5} parent=0 // pred_check
    _
  $region11: #{model_forward.5} parent=0 // pred_check_branch
    %15 = sbr.rel (0) target = $region13
  $region12: #{model_forward.5} parent=0 // pred_region
    _
  $region13: #{model_forward.5} parent=0 // pred_fallthru
    _
  // Predicated region
  $region14: #{model_forward.5} parent=0 // pred_check
    _
  $region15: #{model_forward.5} parent=0 // pred_check_branch
    %17 = sbr.rel (0) target = $region17
  $region16: #{model_forward.5} parent=0 // pred_region
    _
  $region17: #{model_forward.5} parent=0 // pred_fallthru
    _
  // Predicated region
  $region18: #{model_forward.5} parent=0 // pred_check
    _
  $region19: #{model_forward.5} parent=0 // pred_check_branch
    %19 = sbr.rel (0) target = $region21
  $region20: #{model_forward.5} parent=0 // pred_region
    _
  $region21: #{model_forward.5} parent=0 // pred_fallthru
    _
  %v20 = vld [vmem:[%s1] sm:$0xff]
  %v21 = vld [vmem:[%s1 + $0x8] sm:$0xff]
  %v22 = vld [vmem:[%s1 + $0x10] sm:$0xff]
  %v23 = vld [vmem:[%s1 + $0x18] sm:$0xff]
  %v24 = vld [vmem:[%s1 + $0x20] sm:$0xff]
  %v25 = vld [vmem:[%s1 + $0x28] sm:$0xff]
  %v26 = vld [vmem:[%s1 + $0x30] sm:$0xff]
  %v27 = vld [vmem:[%s1 + $0x38] sm:$0xff]
  %v28 = vld [vmem:[%s1 + $0x40] sm:$0xff]
  %v29 = vld [vmem:[%s1 + $0x48] sm:$0xff]
  %v30 = vld [vmem:[%s1 + $0x50] sm:$0xff]
  %v31 = vld [vmem:[%s1 + $0x58] sm:$0xff]
  %v32 = vld [vmem:[%s1 + $0x60] sm:$0xff]
  %v33 = vld [vmem:[%s1 + $0x68] sm:$0xff]
  %v34 = vld [vmem:[%s1 + $0x70] sm:$0xff]
  %v35 = vld [vmem:[%s1 + $0x78] sm:$0xff]
  %v36 = vld [vmem:[%s1 + $0x80] sm:$0xff]
  %v37 = vld [vmem:[%s1 + $0x88] sm:$0xff]
  %v38 = vld [vmem:[%s1 + $0x90] sm:$0xff]
  %v39 = vld [vmem:[%s1 + $0x98] sm:$0xff]
  %v40 = vld [vmem:[%s1 + $0xa0] sm:$0xff]
  %v41 = vld [vmem:[%s1 + $0xa8] sm:$0xff]
  %v42 = vld [vmem:[%s1 + $0xb0] sm:$0xff]
  %v43 = vld [vmem:[%s1 + $0xb8] sm:$0xff]
  %v44 = vld [vmem:[%s1 + $0xc0] sm:$0xff]
  %v45 = vld [vmem:[%s1 + $0xc8] sm:$0xff]
  %v46 = vld [vmem:[%s1 + $0xd0] sm:$0xff]
  %v47 = vld [vmem:[%s1 + $0xd8] sm:$0xff]
  %v48 = vld [vmem:[%s0] sm:$0xff]
  %v49 = vld [vmem:[%s0 + $0x8] sm:$0xff]
  %v50 = vld [vmem:[%s0 + $0x10] sm:$0xff]
  %v51 = vld [vmem:[%s0 + $0x18] sm:$0xff]
  %v52 = vld [vmem:[%s0 + $0x20] sm:$0xff]
  %v53 = vld [vmem:[%s0 + $0x28] sm:$0xff]
  %v54 = vld [vmem:[%s0 + $0x30] sm:$0xff]
  %v55 = vld [vmem:[%s0 + $0x38] sm:$0xff]
  %v56 = vld [vmem:[%s0 + $0x40] sm:$0xff]
  %v57 = vld [vmem:[%s0 + $0x48] sm:$0xff]
  %v58 = vld [vmem:[%s0 + $0x50] sm:$0xff]
  %v59 = vld [vmem:[%s0 + $0x58] sm:$0xff]
  %v60 = vld [vmem:[%s0 + $0x60] sm:$0xff]
  %v61 = vld [vmem:[%s0 + $0x68] sm:$0xff]
  %v62 = vld [vmem:[%s0 + $0x70] sm:$0xff]
  %v63 = vld [vmem:[%s0 + $0x78] sm:$0xff]
  %v64 = vld [vmem:[%s0 + $0x80] sm:$0xff]
  %v65 = vld [vmem:[%s0 + $0x88] sm:$0xff]
  %v66 = vld [vmem:[%s0 + $0x90] sm:$0xff]
  %v67 = vld [vmem:[%s0 + $0x98] sm:$0xff]
  %v68 = vld [vmem:[%s0 + $0xa0] sm:$0xff]
  %v69 = vld [vmem:[%s0 + $0xa8] sm:$0xff]
  %v70 = vld [vmem:[%s0 + $0xb0] sm:$0xff]
  %v71 = vld [vmem:[%s0 + $0xb8] sm:$0xff]
  %v72 = vld [vmem:[%s0 + $0xc0] sm:$0xff]
  %v73 = vld [vmem:[%s0 + $0xc8] sm:$0xff]
  %v74 = vld [vmem:[%s0 + $0xd0] sm:$0xff]
  %v75 = vld [vmem:[%s0 + $0xd8] sm:$0xff]
  %v76 = vld [vmem:[%s0 + $0xe0] sm:$0xff]
  %v77 = vld [vmem:[%s0 + $0xe8] sm:$0xff]
  %v78 = vld [vmem:[%s0 + $0xf0] sm:$0xff]
  %v79 = vld [vmem:[%s0 + $0xf8] sm:$0xff]
  %v80 = vld [vmem:[%s0 + $0x100] sm:$0xff]
  %v81 = vld [vmem:[%s0 + $0x108] sm:$0xff]
  %v82 = vld [vmem:[%s0 + $0x110] sm:$0xff]
  %v83 = vld [vmem:[%s0 + $0x118] sm:$0xff]
  %v84 = vld [vmem:[%s0 + $0x120] sm:$0xff]
  %v85 = vld [vmem:[%s0 + $0x128] sm:$0xff]
  %v86 = vld [vmem:[%s0 + $0x130] sm:$0xff]
  %v87 = vld [vmem:[%s0 + $0x138] sm:$0xff]
  %v88 = vld [vmem:[%s0 + $0x140] sm:$0xff]
  %v89 = vld [vmem:[%s0 + $0x148] sm:$0xff]
  %v90 = vld [vmem:[%s0 + $0x150] sm:$0xff]
  %v91 = vld [vmem:[%s0 + $0x158] sm:$0xff]
  %v92 = vld [vmem:[%s0 + $0x160] sm:$0xff]
  %v93 = vld [vmem:[%s0 + $0x168] sm:$0xff]
  %v94 = vld [vmem:[%s0 + $0x170] sm:$0xff]
  %v95 = vld [vmem:[%s0 + $0x178] sm:$0xff]
  %v96 = vld [vmem:[%s0 + $0x180] sm:$0xff]
  %v97 = vld [vmem:[%s0 + $0x188] sm:$0xff]
  %v98 = vld [vmem:[%s0 + $0x190] sm:$0xff]
  %v99 = vld [vmem:[%s0 + $0x198] sm:$0xff]
  %v100 = vld [vmem:[%s0 + $0x1a0] sm:$0xff]
  %v101 = vld [vmem:[%s0 + $0x1a8] sm:$0xff]
  %v102 = vld [vmem:[%s0 + $0x1b0] sm:$0xff]
  %v103 = vld [vmem:[%s0 + $0x1b8] sm:$0xff]
  %v104 = vld [vmem:[%s0 + $0x1c0] sm:$0xff]
  %v105 = vld [vmem:[%s0 + $0x1c8] sm:$0xff]
  %v106 = vld [vmem:[%s0 + $0x1d0] sm:$0xff]
  %v107 = vld [vmem:[%s0 + $0x1d8] sm:$0xff]
  %v108 = vld [vmem:[%s0 + $0x1e0] sm:$0xff]
  %v109 = vld [vmem:[%s0 + $0x1e8] sm:$0xff]
  %v110 = vld [vmem:[%s0 + $0x1f0] sm:$0xff]
  %v111 = vld [vmem:[%s0 + $0x1f8] sm:$0xff]
  %v112 = vld [vmem:[%s0 + $0x200] sm:$0xff]
  %v113 = vld [vmem:[%s0 + $0x208] sm:$0xff]
  %v114 = vld [vmem:[%s0 + $0x210] sm:$0xff]
  %v115 = vld [vmem:[%s0 + $0x218] sm:$0xff]
  %v116 = vld [vmem:[%s0 + $0x220] sm:$0xff]
  %v117 = vld [vmem:[%s0 + $0x228] sm:$0xff]
  %v118 = vld [vmem:[%s0 + $0x230] sm:$0xff]
  %v119 = vld [vmem:[%s0 + $0x238] sm:$0xff]
  %v120 = vld [vmem:[%s0 + $0x240] sm:$0xff]
  %v121 = vld [vmem:[%s0 + $0x248] sm:$0xff]
  %v122 = vld [vmem:[%s0 + $0x250] sm:$0xff]
  %v123 = vld [vmem:[%s0 + $0x258] sm:$0xff]
  %v124 = vld [vmem:[%s0 + $0x260] sm:$0xff]
  %v125 = vld [vmem:[%s0 + $0x268] sm:$0xff]
  %v126 = vld [vmem:[%s0 + $0x270] sm:$0xff]
  %v127 = vld [vmem:[%s0 + $0x278] sm:$0xff]
  %v128 = vld [vmem:[%s0 + $0x280] sm:$0xff]
  %v129 = vld [vmem:[%s0 + $0x288] sm:$0xff]
  %v130 = vld [vmem:[%s0 + $0x290] sm:$0xff]
  %v131 = vld [vmem:[%s0 + $0x298] sm:$0xff]
  %v132 = vld [vmem:[%s0 + $0x2a0] sm:$0xff]
  %v133 = vld [vmem:[%s0 + $0x2a8] sm:$0xff]
  %v134 = vld [vmem:[%s0 + $0x2b0] sm:$0xff]
  %v135 = vld [vmem:[%s0 + $0x2b8] sm:$0xff]
  %v136 = vld [vmem:[%s0 + $0x2c0] sm:$0xff]
  %v137 = vld [vmem:[%s0 + $0x2c8] sm:$0xff]
  %v138 = vld [vmem:[%s0 + $0x2d0] sm:$0xff]
  %v139 = vld [vmem:[%s0 + $0x2d8] sm:$0xff]
  %v140 = vld [vmem:[%s0 + $0x2e0] sm:$0xff]
  %v141 = vld [vmem:[%s0 + $0x2e8] sm:$0xff]
  %v142 = vld [vmem:[%s0 + $0x2f0] sm:$0xff]
  %v143 = vld [vmem:[%s0 + $0x2f8] sm:$0xff]
  %v144 = vld [vmem:[%s0 + $0x300] sm:$0xff]
  %v145 = vld [vmem:[%s0 + $0x308] sm:$0xff]
  %v146 = vld [vmem:[%s2] sm:$0xff]
  %v147 = vld [vmem:[%s2 + $0x8] sm:$0xff]
  %v148 = vld [vmem:[%s2 + $0x10] sm:$0xff]
  %v149 = vld [vmem:[%s2 + $0x18] sm:$0xff]
  %151 = vset.pattern.permute.xlu0 0
  %152 = vperm.xlu0 %151, %v146
  %v153 = vpop.permute.xlu0 %152
  %156 = vset.pattern.permute.xlu0 0
  %157 = vperm.xlu0 %156, %v147
  %v158 = vpop.permute.xlu0 %157
  %161 = vset.pattern.permute.xlu0 0
  %162 = vperm.xlu0 %161, %v148
  %v163 = vpop.permute.xlu0 %162
  %166 = vset.pattern.permute.xlu0 0
  %167 = vperm.xlu0 %166, %v149
  %v168 = vpop.permute.xlu0 %167
  %vm170 = vcmask 130048
  %v172 = vsel %vm170, %v26, 0
  %v175 = vsel %vm170, %v33, 0
  %v178 = vsel %vm170, %v40, 0
  %v181 = vsel %vm170, %v47, 0
  %183 = vmatpush.msra.mxu0 %v63
  %184 = vmatpush.msra.mxu0 %v62
  %185 = vmatpush.msra.mxu0 %v61
  %186 = vmatpush.msra.mxu0 %v60
  %187 = vmatpush.msra.mxu0 %v59
  %188 = vmatpush.msra.mxu0 %v58
  %189 = vmatpush.msra.mxu0 %v57
  %190 = vmatpush.msra.mxu0 %v56
  %191 = vmatpush.msra.mxu0 %v55
  %192 = vmatpush.msra.mxu0 %v54
  %193 = vmatpush.msra.mxu0 %v53
  %194 = vmatpush.msra.mxu0 %v52
  %195 = vmatpush.msra.mxu0 %v51
  %196 = vmatpush.msra.mxu0 %v50
  %197 = vmatpush.msra.mxu0 %v49
  %198 = vmatpush.msra.mxu0 %v48
  %199 = vmatmul.f32.gmra.mxu0 %v20
  %v200 = vpop.f32.mrf.mxu0
  %v201 = vadd.f32 %v153, %v200
  %202 = vmatmul.f32.gmra.mxu0 %v27
  %v203 = vpop.f32.mrf.mxu0
  %v204 = vadd.f32 %v158, %v203
  %205 = vmatmul.f32.gmra.mxu0 %v34
  %v206 = vpop.f32.mrf.mxu0
  %v207 = vadd.f32 %v163, %v206
  %208 = vmatmul.f32.gmra.mxu0 %v41
  %v209 = vpop.f32.mrf.mxu0
  %v210 = vadd.f32 %v168, %v209
  %211 = vdwg.mxu0
  %212 = vmatpush.msra.mxu0 %v79
  %213 = vmatpush.msra.mxu0 %v78
  %214 = vmatpush.msra.mxu0 %v77
  %215 = vmatpush.msra.mxu0 %v76
  %216 = vmatpush.msra.mxu0 %v75
  %217 = vmatpush.msra.mxu0 %v74
  %218 = vmatpush.msra.mxu0 %v73
  %219 = vmatpush.msra.mxu0 %v72
  %220 = vmatpush.msra.mxu0 %v71
  %221 = vmatpush.msra.mxu0 %v70
  %222 = vmatpush.msra.mxu0 %v69
  %223 = vmatpush.msra.mxu0 %v68
  %224 = vmatpush.msra.mxu0 %v67
  %225 = vmatpush.msra.mxu0 %v66
  %226 = vmatpush.msra.mxu0 %v65
  %227 = vmatpush.msra.mxu0 %v64
  %228 = vmatmul.f32.gmra.mxu0 %v21
  %v229 = vpop.f32.mrf.mxu0
  %v230 = vadd.f32 %v201, %v229
  %231 = vmatmul.f32.gmra.mxu0 %v28
  %v232 = vpop.f32.mrf.mxu0
  %v233 = vadd.f32 %v204, %v232
  %234 = vmatmul.f32.gmra.mxu0 %v35
  %v235 = vpop.f32.mrf.mxu0
  %v236 = vadd.f32 %v207, %v235
  %237 = vmatmul.f32.gmra.mxu0 %v42
  %v238 = vpop.f32.mrf.mxu0
  %v239 = vadd.f32 %v210, %v238
  %240 = vdwg.mxu0
  %241 = vmatpush.msra.mxu0 %v95
  %242 = vmatpush.msra.mxu0 %v94
  %243 = vmatpush.msra.mxu0 %v93
  %244 = vmatpush.msra.mxu0 %v92
  %245 = vmatpush.msra.mxu0 %v91
  %246 = vmatpush.msra.mxu0 %v90
  %247 = vmatpush.msra.mxu0 %v89
  %248 = vmatpush.msra.mxu0 %v88
  %249 = vmatpush.msra.mxu0 %v87
  %250 = vmatpush.msra.mxu0 %v86
  %251 = vmatpush.msra.mxu0 %v85
  %252 = vmatpush.msra.mxu0 %v84
  %253 = vmatpush.msra.mxu0 %v83
  %254 = vmatpush.msra.mxu0 %v82
  %255 = vmatpush.msra.mxu0 %v81
  %256 = vmatpush.msra.mxu0 %v80
  %257 = vmatmul.f32.gmra.mxu0 %v22
  %v258 = vpop.f32.mrf.mxu0
  %v259 = vadd.f32 %v230, %v258
  %260 = vmatmul.f32.gmra.mxu0 %v29
  %v261 = vpop.f32.mrf.mxu0
  %v262 = vadd.f32 %v233, %v261
  %263 = vmatmul.f32.gmra.mxu0 %v36
  %v264 = vpop.f32.mrf.mxu0
  %v265 = vadd.f32 %v236, %v264
  %266 = vmatmul.f32.gmra.mxu0 %v43
  %v267 = vpop.f32.mrf.mxu0
  %v268 = vadd.f32 %v239, %v267
  %269 = vdwg.mxu0
  %270 = vmatpush.msra.mxu0 %v111
  %271 = vmatpush.msra.mxu0 %v110
  %272 = vmatpush.msra.mxu0 %v109
  %273 = vmatpush.msra.mxu0 %v108
  %274 = vmatpush.msra.mxu0 %v107
  %275 = vmatpush.msra.mxu0 %v106
  %276 = vmatpush.msra.mxu0 %v105
  %277 = vmatpush.msra.mxu0 %v104
  %278 = vmatpush.msra.mxu0 %v103
  %279 = vmatpush.msra.mxu0 %v102
  %280 = vmatpush.msra.mxu0 %v101
  %281 = vmatpush.msra.mxu0 %v100
  %282 = vmatpush.msra.mxu0 %v99
  %283 = vmatpush.msra.mxu0 %v98
  %284 = vmatpush.msra.mxu0 %v97
  %285 = vmatpush.msra.mxu0 %v96
  %286 = vmatmul.f32.gmra.mxu0 %v23
  %v287 = vpop.f32.mrf.mxu0
  %v288 = vadd.f32 %v259, %v287
  %289 = vmatmul.f32.gmra.mxu0 %v30
  %v290 = vpop.f32.mrf.mxu0
  %v291 = vadd.f32 %v262, %v290
  %292 = vmatmul.f32.gmra.mxu0 %v37
  %v293 = vpop.f32.mrf.mxu0
  %v294 = vadd.f32 %v265, %v293
  %295 = vmatmul.f32.gmra.mxu0 %v44
  %v296 = vpop.f32.mrf.mxu0
  %v297 = vadd.f32 %v268, %v296
  %298 = vdwg.mxu0
  %299 = vmatpush.msra.mxu0 %v127
  %300 = vmatpush.msra.mxu0 %v126
  %301 = vmatpush.msra.mxu0 %v125
  %302 = vmatpush.msra.mxu0 %v124
  %303 = vmatpush.msra.mxu0 %v123
  %304 = vmatpush.msra.mxu0 %v122
  %305 = vmatpush.msra.mxu0 %v121
  %306 = vmatpush.msra.mxu0 %v120
  %307 = vmatpush.msra.mxu0 %v119
  %308 = vmatpush.msra.mxu0 %v118
  %309 = vmatpush.msra.mxu0 %v117
  %310 = vmatpush.msra.mxu0 %v116
  %311 = vmatpush.msra.mxu0 %v115
  %312 = vmatpush.msra.mxu0 %v114
  %313 = vmatpush.msra.mxu0 %v113
  %314 = vmatpush.msra.mxu0 %v112
  %315 = vmatmul.f32.gmra.mxu0 %v24
  %v316 = vpop.f32.mrf.mxu0
  %v317 = vadd.f32 %v288, %v316
  %318 = vmatmul.f32.gmra.mxu0 %v31
  %v319 = vpop.f32.mrf.mxu0
  %v320 = vadd.f32 %v291, %v319
  %321 = vmatmul.f32.gmra.mxu0 %v38
  %v322 = vpop.f32.mrf.mxu0
  %v323 = vadd.f32 %v294, %v322
  %324 = vmatmul.f32.gmra.mxu0 %v45
  %v325 = vpop.f32.mrf.mxu0
  %v326 = vadd.f32 %v297, %v325
  %327 = vdwg.mxu0
  %328 = vmatpush.msra.mxu0 %v143
  %329 = vmatpush.msra.mxu0 %v142
  %330 = vmatpush.msra.mxu0 %v141
  %331 = vmatpush.msra.mxu0 %v140
  %332 = vmatpush.msra.mxu0 %v139
  %333 = vmatpush.msra.mxu0 %v138
  %334 = vmatpush.msra.mxu0 %v137
  %335 = vmatpush.msra.mxu0 %v136
  %336 = vmatpush.msra.mxu0 %v135
  %337 = vmatpush.msra.mxu0 %v134
  %338 = vmatpush.msra.mxu0 %v133
  %339 = vmatpush.msra.mxu0 %v132
  %340 = vmatpush.msra.mxu0 %v131
  %341 = vmatpush.msra.mxu0 %v130
  %342 = vmatpush.msra.mxu0 %v129
  %343 = vmatpush.msra.mxu0 %v128
  %344 = vmatmul.f32.gmra.mxu0 %v25
  %v345 = vpop.f32.mrf.mxu0
  %v346 = vadd.f32 %v317, %v345
  %347 = vmatmul.f32.gmra.mxu0 %v32
  %v348 = vpop.f32.mrf.mxu0
  %v349 = vadd.f32 %v320, %v348
  %350 = vmatmul.f32.gmra.mxu0 %v39
  %v351 = vpop.f32.mrf.mxu0
  %v352 = vadd.f32 %v323, %v351
  %353 = vmatmul.f32.gmra.mxu0 %v46
  %v354 = vpop.f32.mrf.mxu0
  %v355 = vadd.f32 %v326, %v354
  %356 = vdwg.mxu0
  %357 = vmatpush.msra.mxu0 0.0
  %358 = vmatpush.msra.mxu0 0.0
  %359 = vmatpush.msra.mxu0 0.0
  %360 = vmatpush.msra.mxu0 0.0
  %361 = vmatpush.msra.mxu0 0.0
  %362 = vmatpush.msra.mxu0 0.0
  %363 = vmatpush.msra.mxu0 0.0
  %364 = vmatpush.msra.mxu0 0.0
  %365 = vmatpush.msra.mxu0 0.0
  %366 = vmatpush.msra.mxu0 0.0
  %367 = vmatpush.msra.mxu0 0.0
  %368 = vmatpush.msra.mxu0 0.0
  %369 = vmatpush.msra.mxu0 0.0
  %370 = vmatpush.msra.mxu0 0.0
  %371 = vmatpush.msra.mxu0 %v145
  %372 = vmatpush.msra.mxu0 %v144
  %373 = vmatmul.f32.gmra.mxu0 %v172
  %v374 = vpop.f32.mrf.mxu0
  %v375 = vadd.f32 %v346, %v374
  %376 = vmatmul.f32.gmra.mxu0 %v175
  %v377 = vpop.f32.mrf.mxu0
  %v378 = vadd.f32 %v349, %v377
  %379 = vmatmul.f32.gmra.mxu0 %v178
  %v380 = vpop.f32.mrf.mxu0
  %v381 = vadd.f32 %v352, %v380
  %382 = vmatmul.f32.gmra.mxu0 %v181
  %v383 = vpop.f32.mrf.mxu0
  %v384 = vadd.f32 %v355, %v383
  %385 = vdwg.mxu0
  %v386 = vmax.f32 %v375, 0.0
  %v387 = vmax.f32 %v378, 0.0
  %v388 = vmax.f32 %v381, 0.0
  %v389 = vmax.f32 %v384, 0.0
  %v390 = vld [vmem:[%s3] sm:$0xff]
  %v391 = vld [vmem:[%s3 + $0x8] sm:$0x3]
  %v392 = vld [vmem:[%s4] sm:$0xff]
  %v393 = vld [vmem:[%s4 + $0x8] sm:$0x3]
  %395 = vset.pattern.permute.xlu0 0
  %396 = vperm.xlu0 %395, %v392
  %v397 = vpop.permute.xlu0 %396
  %400 = vset.pattern.permute.xlu0 0
  %401 = vperm.xlu0 %400, %v393
  %v402 = vpop.permute.xlu0 %401
  %vm404 = vcmask 261120
  %v406 = vsel %vm404, %v390, 0
  %v409 = vsel %vm404, %v391, 0
  %411 = vmatpush.msra.mxu0 0.0
  %412 = vmatpush.msra.mxu0 0.0
  %413 = vmatpush.msra.mxu0 0.0
  %414 = vmatpush.msra.mxu0 0.0
  %415 = vmatpush.msra.mxu0 0.0
  %416 = vmatpush.msra.mxu0 0.0
  %417 = vmatpush.msra.mxu0 0.0
  %418 = vmatpush.msra.mxu0 0.0
  %419 = vmatpush.msra.mxu0 0.0
  %420 = vmatpush.msra.mxu0 0.0
  %421 = vmatpush.msra.mxu0 0.0
  %422 = vmatpush.msra.mxu0 0.0
  %423 = vmatpush.msra.mxu0 %v389
  %424 = vmatpush.msra.mxu0 %v388
  %425 = vmatpush.msra.mxu0 %v387
  %426 = vmatpush.msra.mxu0 %v386
  %427 = vmatmul.f32.gmra.mxu0 %v406
  %v428 = vpop.f32.mrf.mxu0
  %v429 = vadd.f32 %v397, %v428
  %430 = vmatmul.f32.gmra.mxu0 %v409
  %v431 = vpop.f32.mrf.mxu0
  %v432 = vadd.f32 %v402, %v431
  %433 = vdwg.mxu0
  %vm434 = vcmask 64512
  %435 = vst.msk [vmem:[%s5] sm:$0xff] %vm434, %v429
  %vm436 = vcmask 58368
  %437 = vst.msk [vmem:[%s5 + $0x8] sm:$0x3] %vm436, %v432
  // Predicated region
  $region22: #{model_forward.5} parent=0 // pred_check
    _
  $region23: #{model_forward.5} parent=0 // pred_check_branch
    %439 = sbr.rel (0) target = $region25
  $region24: #{model_forward.5} parent=0 // pred_region
    _
  $region25: #{model_forward.5} parent=0 // pred_fallthru
    _
  // Predicated region
  $region26: #{model_forward.5} parent=0 // pred_check
    _
  $region27: #{model_forward.5} parent=0 // pred_check_branch
    %441 = sbr.rel (0) target = $region29
  $region28: #{model_forward.5} parent=0 // pred_region
    _
  $region29: #{model_forward.5} parent=0 // pred_fallthru
    _

</llo_original>
